<compile_context>
chip_gen: v7x
topology: tpu7x:2x2x1
jax: 0.10.0
libtpu: 0.0.40
codegen_flags: <defaults>
</compile_context>

<pallas_src>
import functools

import jax
import jax.numpy as jnp
import numpy as np
from jax.experimental import pallas as pl
from jax.experimental.pallas import tpu as pltpu

EPS = 1e-5
EXPANSION = 4
LANE = 128
DEFAULT_TM = 512
VMEM_LIMIT = 48 * 1024 * 1024  # fits v7x's 64 MiB/TC with headroom


# ---------------------------------------------------------------------------
# small helpers
# ---------------------------------------------------------------------------
def _pad_to(n, m):
    return ((n + m - 1) // m) * m


def _pad_axis(a, axis, target):
    pad = target - a.shape[axis]
    if pad <= 0:
        return a
    widths = [(0, 0)] * a.ndim
    widths[axis] = (0, pad)
    return jnp.pad(a, widths)


def _tiles(m, tm_max):
    tm = min(tm_max, _pad_to(m, 8))
    return _pad_to(m, tm), tm


def _bn_coeffs(stats, gamma, beta, inv_m):
    # stats: (2, C) [sum; sumsq] -> single-FMA scale/bias (f32 epilogue math).
    mean = stats[0:1, :] * inv_m
    var = jnp.maximum(stats[1:2, :] * inv_m - mean * mean, 0.0)
    scale = gamma * jax.lax.rsqrt(var + EPS)
    bias = beta - mean * scale
    return scale, bias


# ---------------------------------------------------------------------------
# Kernel 1: tiled matmul (+ optional fused BN+ReLU of the *input*) + BN stats
# ---------------------------------------------------------------------------
def _matmul_stats_kernel(*refs, pre_bn, inv_in_m, true_m, tm, needs_mask):
    if pre_bn:
        x_ref, w_ref, in_s_ref, g_ref, b_ref, y_ref, stats_ref = refs
    else:
        x_ref, w_ref, y_ref, stats_ref = refs

    @pl.when(pl.program_id(0) == 0)
    def _init():
        stats_ref[...] = jnp.zeros_like(stats_ref)

    x = x_ref[...]
    if pre_bn:
        scale, bias = _bn_coeffs(in_s_ref[...], g_ref[...], b_ref[...], inv_in_m)
        x = jnp.maximum(x * scale + bias, 0.0)
    y = jnp.dot(x.astype(jnp.bfloat16), w_ref[...],
                preferred_element_type=jnp.float32)

    ys = y
    if needs_mask:  # don't let padded rows pollute the batch statistics
        row = pl.program_id(0) * tm + jax.lax.broadcasted_iota(jnp.int32, y.shape, 0)
        ys = jnp.where(row < true_m, y, 0.0)
    stats_ref[...] += jnp.concatenate(
        [jnp.sum(ys, axis=0, keepdims=True),
         jnp.sum(ys * ys, axis=0, keepdims=True)], axis=0)
    y_ref[...] = y


def conv_mm_stats(x2d, w2d, *, true_m, tm, pre_bn=None):
    """x2d: (Mp, K) f32 slab; w2d: (K, C) bf16.  Returns (y (Mp, C) f32, stats (2, C))."""
    Mp, K = x2d.shape
    Kw, C = w2d.shape
    assert K == Kw and Mp % tm == 0

    in_specs = [
        pl.BlockSpec((tm, K), lambda i: (i, 0)),
        pl.BlockSpec((K, C), lambda i: (0, 0)),
    ]
    args = [x2d, w2d]
    inv_in_m = 0.0
    if pre_bn is not None:
        in_stats, g_in, b_in, inv_in_m = pre_bn
        in_specs += [
            pl.BlockSpec((2, K), lambda i: (0, 0)),
            pl.BlockSpec((1, K), lambda i: (0, 0)),
            pl.BlockSpec((1, K), lambda i: (0, 0)),
        ]
        args += [in_stats, g_in.reshape(1, K), b_in.reshape(1, K)]

    kernel = functools.partial(
        _matmul_stats_kernel, pre_bn=pre_bn is not None, inv_in_m=inv_in_m,
        true_m=true_m, tm=tm, needs_mask=(true_m != Mp))

    return pl.pallas_call(
        kernel,
        grid=(Mp // tm,),
        in_specs=in_specs,
        out_specs=(
            pl.BlockSpec((tm, C), lambda i: (i, 0)),
            pl.BlockSpec((2, C), lambda i: (0, 0)),   # revisited accumulator
        ),
        out_shape=(
            jax.ShapeDtypeStruct((Mp, C), jnp.float32),
            jax.ShapeDtypeStruct((2, C), jnp.float32),
        ),
        compiler_params=pltpu.CompilerParams(
            dimension_semantics=("arbitrary",),
            vmem_limit_bytes=VMEM_LIMIT),
    )(*args)


# ---------------------------------------------------------------------------
# Kernel 2: tiled BN apply (+ optional residual with its own BN, or identity) + ReLU
# ---------------------------------------------------------------------------
def _bn_act_kernel(*refs, inv_m, res_mode):
    if res_mode == "bn":
        y_ref, s_ref, g_ref, b_ref, r_ref, rs_ref, rg_ref, rb_ref, o_ref = refs
    elif res_mode == "id":
        y_ref, s_ref, g_ref, b_ref, r_ref, o_ref = refs
    else:
        y_ref, s_ref, g_ref, b_ref, o_ref = refs

    scale, bias = _bn_coeffs(s_ref[...], g_ref[...], b_ref[...], inv_m)
    o = y_ref[...] * scale + bias
    if res_mode == "bn":
        rscale, rbias = _bn_coeffs(rs_ref[...], rg_ref[...], rb_ref[...], inv_m)
        o = o + (r_ref[...] * rscale + rbias)
    elif res_mode == "id":
        o = o + r_ref[...]
    o_ref[...] = jnp.maximum(o, 0.0)


def bn_act(y2d, stats, gamma, beta, *, true_m, tm, residual=None, res_mode="none"):
    Mp, C = y2d.shape
    assert Mp % tm == 0
    inv_m = 1.0 / float(true_m)

    in_specs = [
        pl.BlockSpec((tm, C), lambda i: (i, 0)),
        pl.BlockSpec((2, C), lambda i: (0, 0)),
        pl.BlockSpec((1, C), lambda i: (0, 0)),
        pl.BlockSpec((1, C), lambda i: (0, 0)),
    ]
    args = [y2d, stats, gamma.reshape(1, C), beta.reshape(1, C)]
    if res_mode == "bn":
        r2d, rstats, rg, rb = residual
        in_specs += [
            pl.BlockSpec((tm, C), lambda i: (i, 0)),
            pl.BlockSpec((2, C), lambda i: (0, 0)),
            pl.BlockSpec((1, C), lambda i: (0, 0)),
            pl.BlockSpec((1, C), lambda i: (0, 0)),
        ]
        args += [r2d, rstats, rg.reshape(1, C), rb.reshape(1, C)]
    elif res_mode == "id":
        in_specs += [pl.BlockSpec((tm, C), lambda i: (i, 0))]
        args += [residual]

    kernel = functools.partial(_bn_act_kernel, inv_m=inv_m, res_mode=res_mode)
    return pl.pallas_call(
        kernel,
        grid=(Mp // tm,),
        in_specs=in_specs,
        out_specs=pl.BlockSpec((tm, C), lambda i: (i, 0)),
        out_shape=jax.ShapeDtypeStruct((Mp, C), jnp.float32),
        compiler_params=pltpu.CompilerParams(
            dimension_semantics=("parallel",),       # no accumulator -> megacore OK
            vmem_limit_bytes=VMEM_LIMIT),
    )(*args)


# ---------------------------------------------------------------------------
# Kernel 3: 3x3 conv (pad=1, stride 1/2) as 3 fused-tap MXU matmuls + BN stats
# ---------------------------------------------------------------------------
def _conv3x3_stats_kernel(x_ref, w_ref, y_ref, stats_ref, *, taps, ho, wo, cg, cout):
    @pl.when(pl.program_id(0) == 0)
    def _init():
        stats_ref[...] = jnp.zeros_like(stats_ref)

    acc = jnp.zeros((ho * wo, cout), jnp.float32)
    for ky, (ro, grp) in enumerate(taps):
        patch = x_ref[0, ro:ro + ho, :, grp * cg:(grp + 1) * cg]     # (ho, wo, 3C)
        patch = patch.reshape(ho * wo, cg).astype(jnp.bfloat16)
        acc = acc + jnp.dot(patch, w_ref[ky], preferred_element_type=jnp.float32)

    stats_ref[...] += jnp.concatenate(
        [jnp.sum(acc, axis=0, keepdims=True),
         jnp.sum(acc * acc, axis=0, keepdims=True)], axis=0)
    y_ref[...] = acc.reshape(1, ho, wo, cout)


def conv3x3_stats(ximg, w_taps, taps, *, ho, wo):
    N, Hin, Wn, GC = ximg.shape
    _, cg, cout = w_taps.shape
    assert Wn == wo
    return pl.pallas_call(
        functools.partial(_conv3x3_stats_kernel, taps=taps, ho=ho, wo=wo,
                          cg=cg, cout=cout),
        grid=(N,),
        in_specs=[
            pl.BlockSpec((1, Hin, Wn, GC), lambda n: (n, 0, 0, 0)),
            pl.BlockSpec((3, cg, cout), lambda n: (0, 0, 0)),
        ],
        out_specs=(
            pl.BlockSpec((1, ho, wo, cout), lambda n: (n, 0, 0, 0)),
            pl.BlockSpec((2, cout), lambda n: (0, 0)),
        ),
        out_shape=(
            jax.ShapeDtypeStruct((N, ho, wo, cout), jnp.float32),
            jax.ShapeDtypeStruct((2, cout), jnp.float32),
        ),
        compiler_params=pltpu.CompilerParams(
            dimension_semantics=("arbitrary",),
            vmem_limit_bytes=VMEM_LIMIT),
    )(ximg, w_taps)


# ---------------------------------------------------------------------------
# JAX glue: conv2 input packing (kx shifts / row parity on the channel axis)
# ---------------------------------------------------------------------------
def _prep_conv2_input(y, stride, ho, wo):
    """y: (N, H, W, C) already BN+ReLU'd (so zero spatial padding is exact).
    Returns (ximg, taps) with ximg (N, Hin, wo, G*C) and taps = [(row_off, group)]
    per ky, where group selects a 3C-wide channel block."""
    N, H, W, C = y.shape
    yp = jnp.pad(y, ((0, 0), (1, 1), (1, 1), (0, 0)))
    cols = [yp[:, :, dx:dx + (wo - 1) * stride + 1:stride, :] for dx in range(3)]
    xw = jnp.concatenate(cols, axis=-1)                       # (N, H+2, wo, 3C)
    if stride == 1:
        return xw, [(0, 0), (1, 0), (2, 0)]
    # stride 2: split rows by parity so every tap slice is contiguous.
    even, odd = xw[:, 0::2], xw[:, 1::2]
    nrows = ho + 1
    even = even[:, :nrows]
    if odd.shape[1] < nrows:
        odd = jnp.pad(odd, ((0, 0), (0, nrows - odd.shape[1]), (0, 0), (0, 0)))
    odd = odd[:, :nrows]
    ximg = jnp.concatenate([even, odd], axis=-1)              # (N, ho+1, wo, 6C)
    return ximg, [(0, 0), (0, 1), (1, 0)]                     # ky = 0, 1, 2


# ---------------------------------------------------------------------------
# Weight / parameter prep (lane padding + one-time bf16 cast)
# ---------------------------------------------------------------------------
def _prep_weights(params, Cin, Cmid, Cexp, Cin_p, Cmid_p, Cexp_p, proj):
    w1 = params["w1"].reshape(Cmid, Cin).T
    w1 = _pad_axis(_pad_axis(w1, 0, Cin_p), 1, Cmid_p).astype(jnp.bfloat16)
    w2 = jnp.transpose(params["w2"], (2, 3, 1, 0))            # (ky, kx, Cin, Cout)
    w2 = _pad_axis(_pad_axis(w2, 2, Cmid_p), 3, Cmid_p)
    w2 = w2.reshape(3, 3 * Cmid_p, Cmid_p).astype(jnp.bfloat16)
    w3 = params["w3"].reshape(Cexp, Cmid).T
    w3 = _pad_axis(_pad_axis(w3, 0, Cmid_p), 1, Cexp_p).astype(jnp.bfloat16)
    out = {"w1": w1, "w2": w2, "w3": w3}
    if proj:
        ws = params["ws"].reshape(Cexp, Cin).T
        out["ws"] = _pad_axis(_pad_axis(ws, 0, Cin_p), 1, Cexp_p).astype(jnp.bfloat16)
    return out


# ---------------------------------------------------------------------------
# BottleNeck forward
# ---------------------------------------------------------------------------
def bottleneck_forward(x_nchw, params, *, stride, tm_max=DEFAULT_TM):
    assert stride in (1, 2), "ResNet BottleNeck uses stride 1 or 2"
    N, Cin, H, W = x_nchw.shape
    Cmid = params["w1"].shape[0]
    Cexp = params["w3"].shape[0]
    Cin_p, Cmid_p, Cexp_p = (_pad_to(c, LANE) for c in (Cin, Cmid, Cexp))
    Ho = (H - 1) // stride + 1
    Wo = (W - 1) // stride + 1
    M1, M2 = N * H * W, N * Ho * Wo
    proj = (stride != 1) or (Cin != Cexp)

    w = _prep_weights(params, Cin, Cmid, Cexp, Cin_p, Cmid_p, Cexp_p, proj)
    g1, b1 = _pad_axis(params["g1"], 0, Cmid_p), _pad_axis(params["b1"], 0, Cmid_p)
    g2, b2 = _pad_axis(params["g2"], 0, Cmid_p), _pad_axis(params["b2"], 0, Cmid_p)
    g3, b3 = _pad_axis(params["g3"], 0, Cexp_p), _pad_axis(params["b3"], 0, Cexp_p)

    x = jnp.transpose(x_nchw, (0, 2, 3, 1)).astype(jnp.float32)   # NHWC
    x = _pad_axis(x, 3, Cin_p)

    # ---- conv1 (1x1) + BN1 stats, then BN1+ReLU apply ----
    M1p, tm1 = _tiles(M1, tm_max)
    x2d = _pad_axis(x.reshape(M1, Cin_p), 0, M1p)
    y1raw, s1 = conv_mm_stats(x2d, w["w1"], true_m=M1, tm=tm1)
    y1n = bn_act(y1raw, s1, g1, b1, true_m=M1, tm=tm1)
    y1n = y1n[:M1].reshape(N, H, W, Cmid_p)

    # ---- conv2 (3x3, pad=1, stride) + BN2 stats ----
    ximg, taps = _prep_conv2_input(y1n, stride, Ho, Wo)
    y2img, s2 = conv3x3_stats(ximg, w["w2"], taps, ho=Ho, wo=Wo)
    M2p, tm2 = _tiles(M2, tm_max)
    y2raw = _pad_axis(y2img.reshape(M2, Cmid_p), 0, M2p)

    # ---- conv3 (1x1) with BN2+ReLU fused onto its input, + BN3 stats ----
    y3raw, s3 = conv_mm_stats(y2raw, w["w3"], true_m=M2, tm=tm2,
                              pre_bn=(s2, g2, b2, 1.0 / float(M2)))

    # ---- shortcut + final BN + residual add + ReLU (single fused epilogue) ----
    if proj:
        gs = _pad_axis(params["gs"], 0, Cexp_p)
        bs = _pad_axis(params["bs"], 0, Cexp_p)
        xs = _pad_axis(x[:, ::stride, ::stride, :].reshape(M2, Cin_p), 0, M2p)
        sraw, ss = conv_mm_stats(xs, w["ws"], true_m=M2, tm=tm2)
        out2d = bn_act(y3raw, s3, g3, b3, true_m=M2, tm=tm2,
                       residual=(sraw, ss, gs, bs), res_mode="bn")
    else:
        xid = _pad_axis(_pad_axis(x.reshape(M1, Cin_p), 1, Cexp_p), 0, M2p)
        out2d = bn_act(y3raw, s3, g3, b3, true_m=M2, tm=tm2,
                       residual=xid, res_mode="id")

    out = out2d[:M2, :Cexp].reshape(N, Ho, Wo, Cexp)
    return jnp.transpose(out, (0, 3, 1, 2))                      # back to NCHW


# ---------------------------------------------------------------------------
# Parameter init (matches the torch module's shapes)
# ---------------------------------------------------------------------------
def init_params(key, in_channels, out_channels):
    Cmid = out_channels
    Cexp = out_channels * EXPANSION
    kw = jax.random.split(key, 4)
    kb = jax.random.split(jax.random.fold_in(key, 7), 8)

    def w(k, shape):
        return 0.1 * jax.random.normal(k, shape, dtype=jnp.float32)

    def g(k, c):
        return 1.0 + 0.1 * jax.random.normal(k, (c,), dtype=jnp.float32)

    def b(k, c):
        return 0.1 * jax.random.normal(k, (c,), dtype=jnp.float32)

    return {
        "w1": w(kw[0], (Cmid, in_channels, 1, 1)), "g1": g(kb[0], Cmid), "b1": b(kb[1], Cmid),
        "w2": w(kw[1], (Cmid, Cmid, 3, 3)),        "g2": g(kb[2], Cmid), "b2": b(kb[3], Cmid),
        "w3": w(kw[2], (Cexp, Cmid, 1, 1)),        "g3": g(kb[4], Cexp), "b3": b(kb[5], Cexp),
        "ws": w(kw[3], (Cexp, in_channels, 1, 1)), "gs": g(kb[6], Cexp), "bs": b(kb[7], Cexp),
    }


# ---------------------------------------------------------------------------
# Pure-JAX reference (bf16 conv inputs to match the kernels' MXU precision)
# ---------------------------------------------------------------------------
def _ref_conv(x, w, stride, pad):
    return jax.lax.conv_general_dilated(
        x.astype(jnp.bfloat16), w.astype(jnp.bfloat16), (stride, stride),
        [(pad, pad), (pad, pad)],
        dimension_numbers=("NCHW", "OIHW", "NCHW"),
        preferred_element_type=jnp.float32)


def _ref_bn(y, g, b):
    mean = jnp.mean(y, axis=(0, 2, 3), keepdims=True)
    var = jnp.mean(jnp.square(y - mean), axis=(0, 2, 3), keepdims=True)
    return (y - mean) * jax.lax.rsqrt(var + EPS) * g.reshape(1, -1, 1, 1) + b.reshape(1, -1, 1, 1)


def bottleneck_reference(x, p, stride):
    y = jnp.maximum(_ref_bn(_ref_conv(x, p["w1"], 1, 0), p["g1"], p["b1"]), 0.0)
    y = jnp.maximum(_ref_bn(_ref_conv(y, p["w2"], stride, 1), p["g2"], p["b2"]), 0.0)
    y = _ref_bn(_ref_conv(y, p["w3"], 1, 0), p["g3"], p["b3"])
    Cexp = p["w3"].shape[0]
    if stride != 1 or x.shape[1] != Cexp:
        s = _ref_bn(_ref_conv(x, p["ws"], stride, 0), p["gs"], p["bs"])
    else:
        s = x
    return jnp.maximum(y + s, 0.0)


if __name__ == "__main__":
    key = jax.random.PRNGKey(0)
    N, Cin, H, W = 2, 16, 16, 16
    out_channels, stride = 8, 2

    k_x, k_p = jax.random.split(key)
    x = jax.random.normal(k_x, (N, Cin, H, W), dtype=jnp.float32)
    params = init_params(k_p, Cin, out_channels)

    # tm_max=128 exercises the multi-tile M grid + cross-tile stats accumulation.
    fwd = jax.jit(functools.partial(bottleneck_forward, stride=stride, tm_max=128))
    out = jax.block_until_ready(fwd(x, params))

    assert out.shape == (N, out_channels * EXPANSION, H // stride, W // stride)
    ref = bottleneck_reference(x, params, stride)
    np.testing.assert_allclose(np.asarray(out), np.asarray(ref), rtol=5e-3, atol=5e-3)

    print("KERNEL_OK")
</pallas_src>

<mosaic_0001>
module attributes {stable_mosaic.version = 11 : i64} {
  func.func @_matmul_stats_kernel(%arg0: i32, %arg1: memref<128x128xf32, #tpu.memory_space<vmem>>, %arg2: memref<128x128xbf16, #tpu.memory_space<vmem>>, %arg3: memref<128x128xf32, #tpu.memory_space<vmem>>, %arg4: memref<2x128xf32, #tpu.memory_space<vmem>>) attributes {dimension_semantics = [#tpu.dimension_semantics<arbitrary>], iteration_bounds = array<i64: 4>, scalar_prefetch = 0 : i64, scratch_operands = 0 : i64, tpu.core_type = #tpu.core_type<tc>, window_params = [{transform_indices = @transform_0, window_bounds = array<i64: 128, 128>}, {pipeline_mode = #tpu.pipeline_mode<synchronous>, transform_indices = @transform_1, window_bounds = array<i64: 128, 128>}, {transform_indices = @transform_2, window_bounds = array<i64: 128, 128>}, {pipeline_mode = #tpu.pipeline_mode<synchronous>, transform_indices = @transform_3, window_bounds = array<i64: 2, 128>}]} {
    %c0_i32 = arith.constant 0 : i32
    %0 = arith.cmpi eq, %arg0, %c0_i32 : i32
    %1 = arith.extui %0 : i1 to i32
    %c0_i32_0 = arith.constant 0 : i32
    %2 = arith.cmpi ne, %1, %c0_i32_0 : i32
    scf.if %2 {
      %cst_12 = arith.constant 0.000000e+00 : f32
      %17 = vector.broadcast %cst_12 : f32 to vector<2x128xf32>
      %c0_13 = arith.constant 0 : index
      %c0_14 = arith.constant 0 : index
      %18 = vector.load %arg4[%c0_13, %c0_14] : memref<2x128xf32, #tpu.memory_space<vmem>>, vector<2x128xf32>
      tpu.vector_store %arg4[%c0_13, %c0_14], %17 {strides = array<i32>} : memref<2x128xf32, #tpu.memory_space<vmem>>, vector<2x128xf32>,
    } else {
    }
    %c0 = arith.constant 0 : index
    %c0_1 = arith.constant 0 : index
    %3 = vector.load %arg1[%c0, %c0_1] : memref<128x128xf32, #tpu.memory_space<vmem>>, vector<128x128xf32>
    %4 = arith.truncf %3 : vector<128x128xf32> to vector<128x128xbf16>
    %c0_2 = arith.constant 0 : index
    %c0_3 = arith.constant 0 : index
    %5 = vector.load %arg2[%c0_2, %c0_3] : memref<128x128xbf16, #tpu.memory_space<vmem>>, vector<128x128xbf16>
    %cst = arith.constant dense<0.000000e+00> : vector<128x128xf32>
    %6 = tpu.matmul %4, %5, %cst {dimension_numbers = #tpu.dot_dimension_numbers<[1], [0], [0], [1], [0, 0, 1, 1], [], []>} : vector<128x128xbf16>, vector<128x128xbf16>, vector<128x128xf32> -> vector<128x128xf32>
    %c0_4 = arith.constant 0 : index
    %c0_5 = arith.constant 0 : index
    %7 = vector.load %arg4[%c0_4, %c0_5] : memref<2x128xf32, #tpu.memory_space<vmem>>, vector<2x128xf32>
    %cst_6 = arith.constant dense<0.000000e+00> : vector<128xf32>
    %8 = vector.multi_reduction <add>, %6, %cst_6 [0] : vector<128x128xf32> to vector<128xf32>
    %9 = vector.shape_cast %8 : vector<128xf32> to vector<1x128xf32>
    %10 = arith.mulf %6, %6 : vector<128x128xf32>
    %cst_7 = arith.constant dense<0.000000e+00> : vector<128xf32>
    %11 = vector.multi_reduction <add>, %10, %cst_7 [0] : vector<128x128xf32> to vector<128xf32>
    %12 = vector.shape_cast %11 : vector<128xf32> to vector<1x128xf32>
    %13 = tpu.concatenate %9, %12 in 0 : vector<1x128xf32>, vector<1x128xf32> -> vector<2x128xf32>
    %14 = arith.addf %7, %13 : vector<2x128xf32>
    %c0_8 = arith.constant 0 : index
    %c0_9 = arith.constant 0 : index
    %15 = vector.load %arg4[%c0_8, %c0_9] : memref<2x128xf32, #tpu.memory_space<vmem>>, vector<2x128xf32>
    tpu.vector_store %arg4[%c0_8, %c0_9], %14 {strides = array<i32>} : memref<2x128xf32, #tpu.memory_space<vmem>>, vector<2x128xf32>,
    %c0_10 = arith.constant 0 : index
    %c0_11 = arith.constant 0 : index
    %16 = vector.load %arg3[%c0_10, %c0_11] : memref<128x128xf32, #tpu.memory_space<vmem>>, vector<128x128xf32>
    tpu.vector_store %arg3[%c0_10, %c0_11], %6 {strides = array<i32>} : memref<128x128xf32, #tpu.memory_space<vmem>>, vector<128x128xf32>,
    return
  }
  func.func @transform_0(%arg0: i32) -> (i32, i32) {
    %c0_i32 = arith.constant 0 : i32
    %c0_i32_0 = arith.constant 0 : i32
    return %arg0, %c0_i32 : i32, i32
  }
  func.func @transform_1(%arg0: i32) -> (i32, i32) {
    %c0_i32 = arith.constant 0 : i32
    %c0_i32_0 = arith.constant 0 : i32
    %c0_i32_1 = arith.constant 0 : i32
    return %c0_i32, %c0_i32_0 : i32, i32
  }
  func.func @transform_2(%arg0: i32) -> (i32, i32) {
    %c0_i32 = arith.constant 0 : i32
    %c0_i32_0 = arith.constant 0 : i32
    return %arg0, %c0_i32 : i32, i32
  }
  func.func @transform_3(%arg0: i32) -> (i32, i32) {
    %c0_i32 = arith.constant 0 : i32
    %c0_i32_0 = arith.constant 0 : i32
    %c0_i32_1 = arith.constant 0 : i32
    return %c0_i32, %c0_i32_0 : i32, i32
  }
}

module attributes {stable_mosaic.version = 11 : i64} {
  func.func @_bn_act_kernel(%arg0: i32, %arg1: memref<128x128xf32, #tpu.memory_space<vmem>>, %arg2: memref<2x128xf32, #tpu.memory_space<vmem>>, %arg3: memref<1x128xf32, #tpu.memory_space<vmem>>, %arg4: memref<1x128xf32, #tpu.memory_space<vmem>>, %arg5: memref<128x128xf32, #tpu.memory_space<vmem>>) attributes {dimension_semantics = [#tpu.dimension_semantics<parallel>], iteration_bounds = array<i64: 4>, scalar_prefetch = 0 : i64, scratch_operands = 0 : i64, tpu.core_type = #tpu.core_type<tc>, window_params = [{transform_indices = @transform_0, window_bounds = array<i64: 128, 128>}, {pipeline_mode = #tpu.pipeline_mode<synchronous>, transform_indices = @transform_1, window_bounds = array<i64: 2, 128>}, {pipeline_mode = #tpu.pipeline_mode<synchronous>, transform_indices = @transform_2, window_bounds = array<i64: 1, 128>}, {pipeline_mode = #tpu.pipeline_mode<synchronous>, transform_indices = @transform_3, window_bounds = array<i64: 1, 128>}, {transform_indices = @transform_4, window_bounds = array<i64: 128, 128>}]} {
    %c0 = arith.constant 0 : index
    %c0_0 = arith.constant 0 : index
    %0 = vector.load %arg2[%c0, %c0_0] : memref<2x128xf32, #tpu.memory_space<vmem>>, vector<2x128xf32>
    %c0_1 = arith.constant 0 : index
    %c0_2 = arith.constant 0 : index
    %1 = vector.load %arg3[%c0_1, %c0_2] : memref<1x128xf32, #tpu.memory_space<vmem>>, vector<1x128xf32>
    %c0_3 = arith.constant 0 : index
    %c0_4 = arith.constant 0 : index
    %2 = vector.load %arg4[%c0_3, %c0_4] : memref<1x128xf32, #tpu.memory_space<vmem>>, vector<1x128xf32>
    %3 = vector.extract_strided_slice %0 {offsets = [0, 0], sizes = [1, 128], strides = [1, 1]} : vector<2x128xf32> to vector<1x128xf32>
    %cst = arith.constant 0.001953125 : f32
    %4 = vector.broadcast %cst : f32 to vector<1x128xf32>
    %5 = arith.mulf %3, %4 : vector<1x128xf32>
    %6 = vector.extract_strided_slice %0 {offsets = [1, 0], sizes = [1, 128], strides = [1, 1]} : vector<2x128xf32> to vector<1x128xf32>
    %cst_5 = arith.constant 0.001953125 : f32
    %7 = vector.broadcast %cst_5 : f32 to vector<1x128xf32>
    %8 = arith.mulf %6, %7 : vector<1x128xf32>
    %9 = arith.mulf %5, %5 : vector<1x128xf32>
    %10 = arith.subf %8, %9 : vector<1x128xf32>
    %cst_6 = arith.constant 0.000000e+00 : f32
    %11 = vector.broadcast %cst_6 : f32 to vector<1x128xf32>
    %12 = arith.maximumf %10, %11 : vector<1x128xf32>
    %cst_7 = arith.constant 9.99999974E-6 : f32
    %13 = vector.broadcast %cst_7 : f32 to vector<1x128xf32>
    %14 = arith.addf %12, %13 : vector<1x128xf32>
    %15 = math.rsqrt %14 : vector<1x128xf32>
    %16 = arith.mulf %1, %15 : vector<1x128xf32>
    %17 = arith.mulf %5, %16 : vector<1x128xf32>
    %18 = arith.subf %2, %17 : vector<1x128xf32>
    %c0_8 = arith.constant 0 : index
    %c0_9 = arith.constant 0 : index
    %19 = vector.load %arg1[%c0_8, %c0_9] : memref<128x128xf32, #tpu.memory_space<vmem>>, vector<128x128xf32>
    %20 = vector.broadcast %16 : vector<1x128xf32> to vector<128x128xf32>
    %21 = arith.mulf %19, %20 : vector<128x128xf32>
    %22 = vector.broadcast %18 : vector<1x128xf32> to vector<128x128xf32>
    %23 = arith.addf %21, %22 : vector<128x128xf32>
    %cst_10 = arith.constant 0.000000e+00 : f32
    %24 = vector.broadcast %cst_10 : f32 to vector<128x128xf32>
    %25 = arith.maximumf %23, %24 : vector<128x128xf32>
    %c0_11 = arith.constant 0 : index
    %c0_12 = arith.constant 0 : index
    %26 = vector.load %arg5[%c0_11, %c0_12] : memref<128x128xf32, #tpu.memory_space<vmem>>, vector<128x128xf32>
    tpu.vector_store %arg5[%c0_11, %c0_12], %25 {strides = array<i32>} : memref<128x128xf32, #tpu.memory_space<vmem>>, vector<128x128xf32>,
    return
  }
  func.func @transform_0(%arg0: i32) -> (i32, i32) {
    %c0_i32 = arith.constant 0 : i32
    %c0_i32_0 = arith.constant 0 : i32
    return %arg0, %c0_i32 : i32, i32
  }
  func.func @transform_1(%arg0: i32) -> (i32, i32) {
    %c0_i32 = arith.constant 0 : i32
    %c0_i32_0 = arith.constant 0 : i32
    %c0_i32_1 = arith.constant 0 : i32
    return %c0_i32, %c0_i32_0 : i32, i32
  }
  func.func @transform_2(%arg0: i32) -> (i32, i32) {
    %c0_i32 = arith.constant 0 : i32
    %c0_i32_0 = arith.constant 0 : i32
    %c0_i32_1 = arith.constant 0 : i32
    return %c0_i32, %c0_i32_0 : i32, i32
  }
  func.func @transform_3(%arg0: i32) -> (i32, i32) {
    %c0_i32 = arith.constant 0 : i32
    %c0_i32_0 = arith.constant 0 : i32
    %c0_i32_1 = arith.constant 0 : i32
    return %c0_i32, %c0_i32_0 : i32, i32
  }
  func.func @transform_4(%arg0: i32) -> (i32, i32) {
    %c0_i32 = arith.constant 0 : i32
    %c0_i32_0 = arith.constant 0 : i32
    return %arg0, %c0_i32 : i32, i32
  }
}

module attributes {stable_mosaic.version = 11 : i64} {
  func.func @_conv3x3_stats_kernel(%arg0: i32, %arg1: memref<1x9x8x768xf32, #tpu.memory_space<vmem>>, %arg2: memref<3x384x128xbf16, #tpu.memory_space<vmem>>, %arg3: memref<1x8x8x128xf32, #tpu.memory_space<vmem>>, %arg4: memref<2x128xf32, #tpu.memory_space<vmem>>) attributes {dimension_semantics = [#tpu.dimension_semantics<arbitrary>], iteration_bounds = array<i64: 2>, scalar_prefetch = 0 : i64, scratch_operands = 0 : i64, tpu.core_type = #tpu.core_type<tc>, window_params = [{transform_indices = @transform_0, window_bounds = array<i64: 1, 9, 8, 768>}, {pipeline_mode = #tpu.pipeline_mode<synchronous>, transform_indices = @transform_1, window_bounds = array<i64: 3, 384, 128>}, {transform_indices = @transform_2, window_bounds = array<i64: 1, 8, 8, 128>}, {pipeline_mode = #tpu.pipeline_mode<synchronous>, transform_indices = @transform_3, window_bounds = array<i64: 2, 128>}]} {
    %c0_i32 = arith.constant 0 : i32
    %0 = arith.cmpi eq, %arg0, %c0_i32 : i32
    %1 = arith.extui %0 : i1 to i32
    %c0_i32_0 = arith.constant 0 : i32
    %2 = arith.cmpi ne, %1, %c0_i32_0 : i32
    scf.if %2 {
      %cst_31 = arith.constant 0.000000e+00 : f32
      %39 = vector.broadcast %cst_31 : f32 to vector<2x128xf32>
      %c0_32 = arith.constant 0 : index
      %c0_33 = arith.constant 0 : index
      %40 = vector.load %arg4[%c0_32, %c0_33] : memref<2x128xf32, #tpu.memory_space<vmem>>, vector<2x128xf32>
      tpu.vector_store %arg4[%c0_32, %c0_33], %39 {strides = array<i32>} : memref<2x128xf32, #tpu.memory_space<vmem>>, vector<2x128xf32>,
    } else {
    }
    %cst = arith.constant 0.000000e+00 : f32
    %3 = vector.broadcast %cst : f32 to vector<64x128xf32>
    %c0 = arith.constant 0 : index
    %c0_1 = arith.constant 0 : index
    %c0_2 = arith.constant 0 : index
    %c0_3 = arith.constant 0 : index
    %4 = vector.load %arg1[%c0, %c0_1, %c0_2, %c0_3] : memref<1x9x8x768xf32, #tpu.memory_space<vmem>>, vector<1x8x8x384xf32>
    %5 = vector.shape_cast %4 : vector<1x8x8x384xf32> to vector<8x8x384xf32>
    %6 = vector.shape_cast %5 : vector<8x8x384xf32> to vector<64x384xf32>
    %7 = arith.truncf %6 : vector<64x384xf32> to vector<64x384xbf16>
    %c0_4 = arith.constant 0 : index
    %c0_5 = arith.constant 0 : index
    %c0_6 = arith.constant 0 : index
    %8 = vector.load %arg2[%c0_4, %c0_5, %c0_6] : memref<3x384x128xbf16, #tpu.memory_space<vmem>>, vector<1x384x128xbf16>
    %9 = vector.shape_cast %8 : vector<1x384x128xbf16> to vector<384x128xbf16>
    %cst_7 = arith.constant dense<0.000000e+00> : vector<64x128xf32>
    %10 = tpu.matmul %7, %9, %cst_7 {dimension_numbers = #tpu.dot_dimension_numbers<[1], [0], [0], [1], [0, 0, 1, 1], [], []>} : vector<64x384xbf16>, vector<384x128xbf16>, vector<64x128xf32> -> vector<64x128xf32>
    %11 = arith.addf %3, %10 : vector<64x128xf32>
    %c0_8 = arith.constant 0 : index
    %c0_9 = arith.constant 0 : index
    %c0_10 = arith.constant 0 : index
    %c384 = arith.constant 384 : index
    %12 = vector.load %arg1[%c0_8, %c0_9, %c0_10, %c384] : memref<1x9x8x768xf32, #tpu.memory_space<vmem>>, vector<1x8x8x384xf32>
    %13 = vector.shape_cast %12 : vector<1x8x8x384xf32> to vector<8x8x384xf32>
    %14 = vector.shape_cast %13 : vector<8x8x384xf32> to vector<64x384xf32>
    %15 = arith.truncf %14 : vector<64x384xf32> to vector<64x384xbf16>
    %c1 = arith.constant 1 : index
    %c0_11 = arith.constant 0 : index
    %c0_12 = arith.constant 0 : index
    %16 = vector.load %arg2[%c1, %c0_11, %c0_12] : memref<3x384x128xbf16, #tpu.memory_space<vmem>>, vector<1x384x128xbf16>
    %17 = vector.shape_cast %16 : vector<1x384x128xbf16> to vector<384x128xbf16>
    %cst_13 = arith.constant dense<0.000000e+00> : vector<64x128xf32>
    %18 = tpu.matmul %15, %17, %cst_13 {dimension_numbers = #tpu.dot_dimension_numbers<[1], [0], [0], [1], [0, 0, 1, 1], [], []>} : vector<64x384xbf16>, vector<384x128xbf16>, vector<64x128xf32> -> vector<64x128xf32>
    %19 = arith.addf %11, %18 : vector<64x128xf32>
    %c0_14 = arith.constant 0 : index
    %c1_15 = arith.constant 1 : index
    %c0_16 = arith.constant 0 : index
    %c0_17 = arith.constant 0 : index
    %20 = vector.load %arg1[%c0_14, %c1_15, %c0_16, %c0_17] : memref<1x9x8x768xf32, #tpu.memory_space<vmem>>, vector<1x8x8x384xf32>
    %21 = vector.shape_cast %20 : vector<1x8x8x384xf32> to vector<8x8x384xf32>
    %22 = vector.shape_cast %21 : vector<8x8x384xf32> to vector<64x384xf32>
    %23 = arith.truncf %22 : vector<64x384xf32> to vector<64x384xbf16>
    %c2 = arith.constant 2 : index
    %c0_18 = arith.constant 0 : index
    %c0_19 = arith.constant 0 : index
    %24 = vector.load %arg2[%c2, %c0_18, %c0_19] : memref<3x384x128xbf16, #tpu.memory_space<vmem>>, vector<1x384x128xbf16>
    %25 = vector.shape_cast %24 : vector<1x384x128xbf16> to vector<384x128xbf16>
    %cst_20 = arith.constant dense<0.000000e+00> : vector<64x128xf32>
    %26 = tpu.matmul %23, %25, %cst_20 {dimension_numbers = #tpu.dot_dimension_numbers<[1], [0], [0], [1], [0, 0, 1, 1], [], []>} : vector<64x384xbf16>, vector<384x128xbf16>, vector<64x128xf32> -> vector<64x128xf32>
    %27 = arith.addf %19, %26 : vector<64x128xf32>
    %c0_21 = arith.constant 0 : index
    %c0_22 = arith.constant 0 : index
    %28 = vector.load %arg4[%c0_21, %c0_22] : memref<2x128xf32, #tpu.memory_space<vmem>>, vector<2x128xf32>
    %cst_23 = arith.constant dense<0.000000e+00> : vector<128xf32>
    %29 = vector.multi_reduction <add>, %27, %cst_23 [0] : vector<64x128xf32> to vector<128xf32>
    %30 = vector.shape_cast %29 : vector<128xf32> to vector<1x128xf32>
    %31 = arith.mulf %27, %27 : vector<64x128xf32>
    %cst_24 = arith.constant dense<0.000000e+00> : vector<128xf32>
    %32 = vector.multi_reduction <add>, %31, %cst_24 [0] : vector<64x128xf32> to vector<128xf32>
    %33 = vector.shape_cast %32 : vector<128xf32> to vector<1x128xf32>
    %34 = tpu.concatenate %30, %33 in 0 : vector<1x128xf32>, vector<1x128xf32> -> vector<2x128xf32>
    %35 = arith.addf %28, %34 : vector<2x128xf32>
    %c0_25 = arith.constant 0 : index
    %c0_26 = arith.constant 0 : index
    %36 = vector.load %arg4[%c0_25, %c0_26] : memref<2x128xf32, #tpu.memory_space<vmem>>, vector<2x128xf32>
    tpu.vector_store %arg4[%c0_25, %c0_26], %35 {strides = array<i32>} : memref<2x128xf32, #tpu.memory_space<vmem>>, vector<2x128xf32>,
    %37 = vector.shape_cast %27 : vector<64x128xf32> to vector<1x8x8x128xf32>
    %c0_27 = arith.constant 0 : index
    %c0_28 = arith.constant 0 : index
    %c0_29 = arith.constant 0 : index
    %c0_30 = arith.constant 0 : index
    %38 = vector.load %arg3[%c0_27, %c0_28, %c0_29, %c0_30] : memref<1x8x8x128xf32, #tpu.memory_space<vmem>>, vector<1x8x8x128xf32>
    tpu.vector_store %arg3[%c0_27, %c0_28, %c0_29, %c0_30], %37 {strides = array<i32>} : memref<1x8x8x128xf32, #tpu.memory_space<vmem>>, vector<1x8x8x128xf32>,
    return
  }
  func.func @transform_0(%arg0: i32) -> (i32, i32, i32, i32) {
    %c0_i32 = arith.constant 0 : i32
    %c0_i32_0 = arith.constant 0 : i32
    %c0_i32_1 = arith.constant 0 : i32
    %c0_i32_2 = arith.constant 0 : i32
    return %arg0, %c0_i32, %c0_i32_0, %c0_i32_1 : i32, i32, i32, i32
  }
  func.func @transform_1(%arg0: i32) -> (i32, i32, i32) {
    %c0_i32 = arith.constant 0 : i32
    %c0_i32_0 = arith.constant 0 : i32
    %c0_i32_1 = arith.constant 0 : i32
    %c0_i32_2 = arith.constant 0 : i32
    return %c0_i32, %c0_i32_0, %c0_i32_1 : i32, i32, i32
  }
  func.func @transform_2(%arg0: i32) -> (i32, i32, i32, i32) {
    %c0_i32 = arith.constant 0 : i32
    %c0_i32_0 = arith.constant 0 : i32
    %c0_i32_1 = arith.constant 0 : i32
    %c0_i32_2 = arith.constant 0 : i32
    return %arg0, %c0_i32, %c0_i32_0, %c0_i32_1 : i32, i32, i32, i32
  }
  func.func @transform_3(%arg0: i32) -> (i32, i32) {
    %c0_i32 = arith.constant 0 : i32
    %c0_i32_0 = arith.constant 0 : i32
    %c0_i32_1 = arith.constant 0 : i32
    return %c0_i32, %c0_i32_0 : i32, i32
  }
}

module attributes {stable_mosaic.version = 11 : i64} {
  func.func @_matmul_stats_kernel(%arg0: i32, %arg1: memref<128x128xf32, #tpu.memory_space<vmem>>, %arg2: memref<128x128xbf16, #tpu.memory_space<vmem>>, %arg3: memref<2x128xf32, #tpu.memory_space<vmem>>, %arg4: memref<1x128xf32, #tpu.memory_space<vmem>>, %arg5: memref<1x128xf32, #tpu.memory_space<vmem>>, %arg6: memref<128x128xf32, #tpu.memory_space<vmem>>, %arg7: memref<2x128xf32, #tpu.memory_space<vmem>>) attributes {dimension_semantics = [#tpu.dimension_semantics<arbitrary>], iteration_bounds = array<i64: 1>, scalar_prefetch = 0 : i64, scratch_operands = 0 : i64, tpu.core_type = #tpu.core_type<tc>, window_params = [{transform_indices = @transform_0, window_bounds = array<i64: 128, 128>}, {pipeline_mode = #tpu.pipeline_mode<synchronous>, transform_indices = @transform_1, window_bounds = array<i64: 128, 128>}, {pipeline_mode = #tpu.pipeline_mode<synchronous>, transform_indices = @transform_2, window_bounds = array<i64: 2, 128>}, {pipeline_mode = #tpu.pipeline_mode<synchronous>, transform_indices = @transform_3, window_bounds = array<i64: 1, 128>}, {pipeline_mode = #tpu.pipeline_mode<synchronous>, transform_indices = @transform_4, window_bounds = array<i64: 1, 128>}, {transform_indices = @transform_5, window_bounds = array<i64: 128, 128>}, {pipeline_mode = #tpu.pipeline_mode<synchronous>, transform_indices = @transform_6, window_bounds = array<i64: 2, 128>}]} {
    %c0_i32 = arith.constant 0 : i32
    %0 = arith.cmpi eq, %arg0, %c0_i32 : i32
    %1 = arith.extui %0 : i1 to i32
    %c0_i32_0 = arith.constant 0 : i32
    %2 = arith.cmpi ne, %1, %c0_i32_0 : i32
    scf.if %2 {
      %cst_23 = arith.constant 0.000000e+00 : f32
      %42 = vector.broadcast %cst_23 : f32 to vector<2x128xf32>
      %c0_24 = arith.constant 0 : index
      %c0_25 = arith.constant 0 : index
      %43 = vector.load %arg7[%c0_24, %c0_25] : memref<2x128xf32, #tpu.memory_space<vmem>>, vector<2x128xf32>
      tpu.vector_store %arg7[%c0_24, %c0_25], %42 {strides = array<i32>} : memref<2x128xf32, #tpu.memory_space<vmem>>, vector<2x128xf32>,
    } else {
    }
    %c0 = arith.constant 0 : index
    %c0_1 = arith.constant 0 : index
    %3 = vector.load %arg1[%c0, %c0_1] : memref<128x128xf32, #tpu.memory_space<vmem>>, vector<128x128xf32>
    %c0_2 = arith.constant 0 : index
    %c0_3 = arith.constant 0 : index
    %4 = vector.load %arg3[%c0_2, %c0_3] : memref<2x128xf32, #tpu.memory_space<vmem>>, vector<2x128xf32>
    %c0_4 = arith.constant 0 : index
    %c0_5 = arith.constant 0 : index
    %5 = vector.load %arg4[%c0_4, %c0_5] : memref<1x128xf32, #tpu.memory_space<vmem>>, vector<1x128xf32>
    %c0_6 = arith.constant 0 : index
    %c0_7 = arith.constant 0 : index
    %6 = vector.load %arg5[%c0_6, %c0_7] : memref<1x128xf32, #tpu.memory_space<vmem>>, vector<1x128xf32>
    %7 = vector.extract_strided_slice %4 {offsets = [0, 0], sizes = [1, 128], strides = [1, 1]} : vector<2x128xf32> to vector<1x128xf32>
    %cst = arith.constant 7.812500e-03 : f32
    %8 = vector.broadcast %cst : f32 to vector<1x128xf32>
    %9 = arith.mulf %7, %8 : vector<1x128xf32>
    %10 = vector.extract_strided_slice %4 {offsets = [1, 0], sizes = [1, 128], strides = [1, 1]} : vector<2x128xf32> to vector<1x128xf32>
    %cst_8 = arith.constant 7.812500e-03 : f32
    %11 = vector.broadcast %cst_8 : f32 to vector<1x128xf32>
    %12 = arith.mulf %10, %11 : vector<1x128xf32>
    %13 = arith.mulf %9, %9 : vector<1x128xf32>
    %14 = arith.subf %12, %13 : vector<1x128xf32>
    %cst_9 = arith.constant 0.000000e+00 : f32
    %15 = vector.broadcast %cst_9 : f32 to vector<1x128xf32>
    %16 = arith.maximumf %14, %15 : vector<1x128xf32>
    %cst_10 = arith.constant 9.99999974E-6 : f32
    %17 = vector.broadcast %cst_10 : f32 to vector<1x128xf32>
    %18 = arith.addf %16, %17 : vector<1x128xf32>
    %19 = math.rsqrt %18 : vector<1x128xf32>
    %20 = arith.mulf %5, %19 : vector<1x128xf32>
    %21 = arith.mulf %9, %20 : vector<1x128xf32>
    %22 = arith.subf %6, %21 : vector<1x128xf32>
    %23 = vector.broadcast %20 : vector<1x128xf32> to vector<128x128xf32>
    %24 = arith.mulf %3, %23 : vector<128x128xf32>
    %25 = vector.broadcast %22 : vector<1x128xf32> to vector<128x128xf32>
    %26 = arith.addf %24, %25 : vector<128x128xf32>
    %cst_11 = arith.constant 0.000000e+00 : f32
    %27 = vector.broadcast %cst_11 : f32 to vector<128x128xf32>
    %28 = arith.maximumf %26, %27 : vector<128x128xf32>
    %29 = arith.truncf %28 : vector<128x128xf32> to vector<128x128xbf16>
    %c0_12 = arith.constant 0 : index
    %c0_13 = arith.constant 0 : index
    %30 = vector.load %arg2[%c0_12, %c0_13] : memref<128x128xbf16, #tpu.memory_space<vmem>>, vector<128x128xbf16>
    %cst_14 = arith.constant dense<0.000000e+00> : vector<128x128xf32>
    %31 = tpu.matmul %29, %30, %cst_14 {dimension_numbers = #tpu.dot_dimension_numbers<[1], [0], [0], [1], [0, 0, 1, 1], [], []>} : vector<128x128xbf16>, vector<128x128xbf16>, vector<128x128xf32> -> vector<128x128xf32>
    %c0_15 = arith.constant 0 : index
    %c0_16 = arith.constant 0 : index
    %32 = vector.load %arg7[%c0_15, %c0_16] : memref<2x128xf32, #tpu.memory_space<vmem>>, vector<2x128xf32>
    %cst_17 = arith.constant dense<0.000000e+00> : vector<128xf32>
    %33 = vector.multi_reduction <add>, %31, %cst_17 [0] : vector<128x128xf32> to vector<128xf32>
    %34 = vector.shape_cast %33 : vector<128xf32> to vector<1x128xf32>
    %35 = arith.mulf %31, %31 : vector<128x128xf32>
    %cst_18 = arith.constant dense<0.000000e+00> : vector<128xf32>
    %36 = vector.multi_reduction <add>, %35, %cst_18 [0] : vector<128x128xf32> to vector<128xf32>
    %37 = vector.shape_cast %36 : vector<128xf32> to vector<1x128xf32>
    %38 = tpu.concatenate %34, %37 in 0 : vector<1x128xf32>, vector<1x128xf32> -> vector<2x128xf32>
    %39 = arith.addf %32, %38 : vector<2x128xf32>
    %c0_19 = arith.constant 0 : index
    %c0_20 = arith.constant 0 : index
    %40 = vector.load %arg7[%c0_19, %c0_20] : memref<2x128xf32, #tpu.memory_space<vmem>>, vector<2x128xf32>
    tpu.vector_store %arg7[%c0_19, %c0_20], %39 {strides = array<i32>} : memref<2x128xf32, #tpu.memory_space<vmem>>, vector<2x128xf32>,
    %c0_21 = arith.constant 0 : index
    %c0_22 = arith.constant 0 : index
    %41 = vector.load %arg6[%c0_21, %c0_22] : memref<128x128xf32, #tpu.memory_space<vmem>>, vector<128x128xf32>
    tpu.vector_store %arg6[%c0_21, %c0_22], %31 {strides = array<i32>} : memref<128x128xf32, #tpu.memory_space<vmem>>, vector<128x128xf32>,
    return
  }
  func.func @transform_0(%arg0: i32) -> (i32, i32) {
    %c0_i32 = arith.constant 0 : i32
    %c0_i32_0 = arith.constant 0 : i32
    return %arg0, %c0_i32 : i32, i32
  }
  func.func @transform_1(%arg0: i32) -> (i32, i32) {
    %c0_i32 = arith.constant 0 : i32
    %c0_i32_0 = arith.constant 0 : i32
    %c0_i32_1 = arith.constant 0 : i32
    return %c0_i32, %c0_i32_0 : i32, i32
  }
  func.func @transform_2(%arg0: i32) -> (i32, i32) {
    %c0_i32 = arith.constant 0 : i32
    %c0_i32_0 = arith.constant 0 : i32
    %c0_i32_1 = arith.constant 0 : i32
    return %c0_i32, %c0_i32_0 : i32, i32
  }
  func.func @transform_3(%arg0: i32) -> (i32, i32) {
    %c0_i32 = arith.constant 0 : i32
    %c0_i32_0 = arith.constant 0 : i32
    %c0_i32_1 = arith.constant 0 : i32
    return %c0_i32, %c0_i32_0 : i32, i32
  }
  func.func @transform_4(%arg0: i32) -> (i32, i32) {
    %c0_i32 = arith.constant 0 : i32
    %c0_i32_0 = arith.constant 0 : i32
    %c0_i32_1 = arith.constant 0 : i32
    return %c0_i32, %c0_i32_0 : i32, i32
  }
  func.func @transform_5(%arg0: i32) -> (i32, i32) {
    %c0_i32 = arith.constant 0 : i32
    %c0_i32_0 = arith.constant 0 : i32
    return %arg0, %c0_i32 : i32, i32
  }
  func.func @transform_6(%arg0: i32) -> (i32, i32) {
    %c0_i32 = arith.constant 0 : i32
    %c0_i32_0 = arith.constant 0 : i32
    %c0_i32_1 = arith.constant 0 : i32
    return %c0_i32, %c0_i32_0 : i32, i32
  }
}

module attributes {stable_mosaic.version = 11 : i64} {
  func.func @_matmul_stats_kernel(%arg0: i32, %arg1: memref<128x128xf32, #tpu.memory_space<vmem>>, %arg2: memref<128x128xbf16, #tpu.memory_space<vmem>>, %arg3: memref<128x128xf32, #tpu.memory_space<vmem>>, %arg4: memref<2x128xf32, #tpu.memory_space<vmem>>) attributes {dimension_semantics = [#tpu.dimension_semantics<arbitrary>], iteration_bounds = array<i64: 1>, scalar_prefetch = 0 : i64, scratch_operands = 0 : i64, tpu.core_type = #tpu.core_type<tc>, window_params = [{transform_indices = @transform_0, window_bounds = array<i64: 128, 128>}, {pipeline_mode = #tpu.pipeline_mode<synchronous>, transform_indices = @transform_1, window_bounds = array<i64: 128, 128>}, {transform_indices = @transform_2, window_bounds = array<i64: 128, 128>}, {pipeline_mode = #tpu.pipeline_mode<synchronous>, transform_indices = @transform_3, window_bounds = array<i64: 2, 128>}]} {
    %c0_i32 = arith.constant 0 : i32
    %0 = arith.cmpi eq, %arg0, %c0_i32 : i32
    %1 = arith.extui %0 : i1 to i32
    %c0_i32_0 = arith.constant 0 : i32
    %2 = arith.cmpi ne, %1, %c0_i32_0 : i32
    scf.if %2 {
      %cst_12 = arith.constant 0.000000e+00 : f32
      %17 = vector.broadcast %cst_12 : f32 to vector<2x128xf32>
      %c0_13 = arith.constant 0 : index
      %c0_14 = arith.constant 0 : index
      %18 = vector.load %arg4[%c0_13, %c0_14] : memref<2x128xf32, #tpu.memory_space<vmem>>, vector<2x128xf32>
      tpu.vector_store %arg4[%c0_13, %c0_14], %17 {strides = array<i32>} : memref<2x128xf32, #tpu.memory_space<vmem>>, vector<2x128xf32>,
    } else {
    }
    %c0 = arith.constant 0 : index
    %c0_1 = arith.constant 0 : index
    %3 = vector.load %arg1[%c0, %c0_1] : memref<128x128xf32, #tpu.memory_space<vmem>>, vector<128x128xf32>
    %4 = arith.truncf %3 : vector<128x128xf32> to vector<128x128xbf16>
    %c0_2 = arith.constant 0 : index
    %c0_3 = arith.constant 0 : index
    %5 = vector.load %arg2[%c0_2, %c0_3] : memref<128x128xbf16, #tpu.memory_space<vmem>>, vector<128x128xbf16>
    %cst = arith.constant dense<0.000000e+00> : vector<128x128xf32>
    %6 = tpu.matmul %4, %5, %cst {dimension_numbers = #tpu.dot_dimension_numbers<[1], [0], [0], [1], [0, 0, 1, 1], [], []>} : vector<128x128xbf16>, vector<128x128xbf16>, vector<128x128xf32> -> vector<128x128xf32>
    %c0_4 = arith.constant 0 : index
    %c0_5 = arith.constant 0 : index
    %7 = vector.load %arg4[%c0_4, %c0_5] : memref<2x128xf32, #tpu.memory_space<vmem>>, vector<2x128xf32>
    %cst_6 = arith.constant dense<0.000000e+00> : vector<128xf32>
    %8 = vector.multi_reduction <add>, %6, %cst_6 [0] : vector<128x128xf32> to vector<128xf32>
    %9 = vector.shape_cast %8 : vector<128xf32> to vector<1x128xf32>
    %10 = arith.mulf %6, %6 : vector<128x128xf32>
    %cst_7 = arith.constant dense<0.000000e+00> : vector<128xf32>
    %11 = vector.multi_reduction <add>, %10, %cst_7 [0] : vector<128x128xf32> to vector<128xf32>
    %12 = vector.shape_cast %11 : vector<128xf32> to vector<1x128xf32>
    %13 = tpu.concatenate %9, %12 in 0 : vector<1x128xf32>, vector<1x128xf32> -> vector<2x128xf32>
    %14 = arith.addf %7, %13 : vector<2x128xf32>
    %c0_8 = arith.constant 0 : index
    %c0_9 = arith.constant 0 : index
    %15 = vector.load %arg4[%c0_8, %c0_9] : memref<2x128xf32, #tpu.memory_space<vmem>>, vector<2x128xf32>
    tpu.vector_store %arg4[%c0_8, %c0_9], %14 {strides = array<i32>} : memref<2x128xf32, #tpu.memory_space<vmem>>, vector<2x128xf32>,
    %c0_10 = arith.constant 0 : index
    %c0_11 = arith.constant 0 : index
    %16 = vector.load %arg3[%c0_10, %c0_11] : memref<128x128xf32, #tpu.memory_space<vmem>>, vector<128x128xf32>
    tpu.vector_store %arg3[%c0_10, %c0_11], %6 {strides = array<i32>} : memref<128x128xf32, #tpu.memory_space<vmem>>, vector<128x128xf32>,
    return
  }
  func.func @transform_0(%arg0: i32) -> (i32, i32) {
    %c0_i32 = arith.constant 0 : i32
    %c0_i32_0 = arith.constant 0 : i32
    return %arg0, %c0_i32 : i32, i32
  }
  func.func @transform_1(%arg0: i32) -> (i32, i32) {
    %c0_i32 = arith.constant 0 : i32
    %c0_i32_0 = arith.constant 0 : i32
    %c0_i32_1 = arith.constant 0 : i32
    return %c0_i32, %c0_i32_0 : i32, i32
  }
  func.func @transform_2(%arg0: i32) -> (i32, i32) {
    %c0_i32 = arith.constant 0 : i32
    %c0_i32_0 = arith.constant 0 : i32
    return %arg0, %c0_i32 : i32, i32
  }
  func.func @transform_3(%arg0: i32) -> (i32, i32) {
    %c0_i32 = arith.constant 0 : i32
    %c0_i32_0 = arith.constant 0 : i32
    %c0_i32_1 = arith.constant 0 : i32
    return %c0_i32, %c0_i32_0 : i32, i32
  }
}

module attributes {stable_mosaic.version = 11 : i64} {
  func.func @_bn_act_kernel(%arg0: i32, %arg1: memref<128x128xf32, #tpu.memory_space<vmem>>, %arg2: memref<2x128xf32, #tpu.memory_space<vmem>>, %arg3: memref<1x128xf32, #tpu.memory_space<vmem>>, %arg4: memref<1x128xf32, #tpu.memory_space<vmem>>, %arg5: memref<128x128xf32, #tpu.memory_space<vmem>>, %arg6: memref<2x128xf32, #tpu.memory_space<vmem>>, %arg7: memref<1x128xf32, #tpu.memory_space<vmem>>, %arg8: memref<1x128xf32, #tpu.memory_space<vmem>>, %arg9: memref<128x128xf32, #tpu.memory_space<vmem>>) attributes {dimension_semantics = [#tpu.dimension_semantics<parallel>], iteration_bounds = array<i64: 1>, scalar_prefetch = 0 : i64, scratch_operands = 0 : i64, tpu.core_type = #tpu.core_type<tc>, window_params = [{transform_indices = @transform_0, window_bounds = array<i64: 128, 128>}, {pipeline_mode = #tpu.pipeline_mode<synchronous>, transform_indices = @transform_1, window_bounds = array<i64: 2, 128>}, {pipeline_mode = #tpu.pipeline_mode<synchronous>, transform_indices = @transform_2, window_bounds = array<i64: 1, 128>}, {pipeline_mode = #tpu.pipeline_mode<synchronous>, transform_indices = @transform_3, window_bounds = array<i64: 1, 128>}, {transform_indices = @transform_4, window_bounds = array<i64: 128, 128>}, {pipeline_mode = #tpu.pipeline_mode<synchronous>, transform_indices = @transform_5, window_bounds = array<i64: 2, 128>}, {pipeline_mode = #tpu.pipeline_mode<synchronous>, transform_indices = @transform_6, window_bounds = array<i64: 1, 128>}, {pipeline_mode = #tpu.pipeline_mode<synchronous>, transform_indices = @transform_7, window_bounds = array<i64: 1, 128>}, {transform_indices = @transform_8, window_bounds = array<i64: 128, 128>}]} {
    %c0 = arith.constant 0 : index
    %c0_0 = arith.constant 0 : index
    %0 = vector.load %arg2[%c0, %c0_0] : memref<2x128xf32, #tpu.memory_space<vmem>>, vector<2x128xf32>
    %c0_1 = arith.constant 0 : index
    %c0_2 = arith.constant 0 : index
    %1 = vector.load %arg3[%c0_1, %c0_2] : memref<1x128xf32, #tpu.memory_space<vmem>>, vector<1x128xf32>
    %c0_3 = arith.constant 0 : index
    %c0_4 = arith.constant 0 : index
    %2 = vector.load %arg4[%c0_3, %c0_4] : memref<1x128xf32, #tpu.memory_space<vmem>>, vector<1x128xf32>
    %3 = vector.extract_strided_slice %0 {offsets = [0, 0], sizes = [1, 128], strides = [1, 1]} : vector<2x128xf32> to vector<1x128xf32>
    %cst = arith.constant 7.812500e-03 : f32
    %4 = vector.broadcast %cst : f32 to vector<1x128xf32>
    %5 = arith.mulf %3, %4 : vector<1x128xf32>
    %6 = vector.extract_strided_slice %0 {offsets = [1, 0], sizes = [1, 128], strides = [1, 1]} : vector<2x128xf32> to vector<1x128xf32>
    %cst_5 = arith.constant 7.812500e-03 : f32
    %7 = vector.broadcast %cst_5 : f32 to vector<1x128xf32>
    %8 = arith.mulf %6, %7 : vector<1x128xf32>
    %9 = arith.mulf %5, %5 : vector<1x128xf32>
    %10 = arith.subf %8, %9 : vector<1x128xf32>
    %cst_6 = arith.constant 0.000000e+00 : f32
    %11 = vector.broadcast %cst_6 : f32 to vector<1x128xf32>
    %12 = arith.maximumf %10, %11 : vector<1x128xf32>
    %cst_7 = arith.constant 9.99999974E-6 : f32
    %13 = vector.broadcast %cst_7 : f32 to vector<1x128xf32>
    %14 = arith.addf %12, %13 : vector<1x128xf32>
    %15 = math.rsqrt %14 : vector<1x128xf32>
    %16 = arith.mulf %1, %15 : vector<1x128xf32>
    %17 = arith.mulf %5, %16 : vector<1x128xf32>
    %18 = arith.subf %2, %17 : vector<1x128xf32>
    %c0_8 = arith.constant 0 : index
    %c0_9 = arith.constant 0 : index
    %19 = vector.load %arg1[%c0_8, %c0_9] : memref<128x128xf32, #tpu.memory_space<vmem>>, vector<128x128xf32>
    %20 = vector.broadcast %16 : vector<1x128xf32> to vector<128x128xf32>
    %21 = arith.mulf %19, %20 : vector<128x128xf32>
    %22 = vector.broadcast %18 : vector<1x128xf32> to vector<128x128xf32>
    %23 = arith.addf %21, %22 : vector<128x128xf32>
    %c0_10 = arith.constant 0 : index
    %c0_11 = arith.constant 0 : index
    %24 = vector.load %arg6[%c0_10, %c0_11] : memref<2x128xf32, #tpu.memory_space<vmem>>, vector<2x128xf32>
    %c0_12 = arith.constant 0 : index
    %c0_13 = arith.constant 0 : index
    %25 = vector.load %arg7[%c0_12, %c0_13] : memref<1x128xf32, #tpu.memory_space<vmem>>, vector<1x128xf32>
    %c0_14 = arith.constant 0 : index
    %c0_15 = arith.constant 0 : index
    %26 = vector.load %arg8[%c0_14, %c0_15] : memref<1x128xf32, #tpu.memory_space<vmem>>, vector<1x128xf32>
    %27 = vector.extract_strided_slice %24 {offsets = [0, 0], sizes = [1, 128], strides = [1, 1]} : vector<2x128xf32> to vector<1x128xf32>
    %cst_16 = arith.constant 7.812500e-03 : f32
    %28 = vector.broadcast %cst_16 : f32 to vector<1x128xf32>
    %29 = arith.mulf %27, %28 : vector<1x128xf32>
    %30 = vector.extract_strided_slice %24 {offsets = [1, 0], sizes = [1, 128], strides = [1, 1]} : vector<2x128xf32> to vector<1x128xf32>
    %cst_17 = arith.constant 7.812500e-03 : f32
    %31 = vector.broadcast %cst_17 : f32 to vector<1x128xf32>
    %32 = arith.mulf %30, %31 : vector<1x128xf32>
    %33 = arith.mulf %29, %29 : vector<1x128xf32>
    %34 = arith.subf %32, %33 : vector<1x128xf32>
    %cst_18 = arith.constant 0.000000e+00 : f32
    %35 = vector.broadcast %cst_18 : f32 to vector<1x128xf32>
    %36 = arith.maximumf %34, %35 : vector<1x128xf32>
    %cst_19 = arith.constant 9.99999974E-6 : f32
    %37 = vector.broadcast %cst_19 : f32 to vector<1x128xf32>
    %38 = arith.addf %36, %37 : vector<1x128xf32>
    %39 = math.rsqrt %38 : vector<1x128xf32>
    %40 = arith.mulf %25, %39 : vector<1x128xf32>
    %41 = arith.mulf %29, %40 : vector<1x128xf32>
    %42 = arith.subf %26, %41 : vector<1x128xf32>
    %c0_20 = arith.constant 0 : index
    %c0_21 = arith.constant 0 : index
    %43 = vector.load %arg5[%c0_20, %c0_21] : memref<128x128xf32, #tpu.memory_space<vmem>>, vector<128x128xf32>
    %44 = vector.broadcast %40 : vector<1x128xf32> to vector<128x128xf32>
    %45 = arith.mulf %43, %44 : vector<128x128xf32>
    %46 = vector.broadcast %42 : vector<1x128xf32> to vector<128x128xf32>
    %47 = arith.addf %45, %46 : vector<128x128xf32>
    %48 = arith.addf %23, %47 : vector<128x128xf32>
    %cst_22 = arith.constant 0.000000e+00 : f32
    %49 = vector.broadcast %cst_22 : f32 to vector<128x128xf32>
    %50 = arith.maximumf %48, %49 : vector<128x128xf32>
    %c0_23 = arith.constant 0 : index
    %c0_24 = arith.constant 0 : index
    %51 = vector.load %arg9[%c0_23, %c0_24] : memref<128x128xf32, #tpu.memory_space<vmem>>, vector<128x128xf32>
    tpu.vector_store %arg9[%c0_23, %c0_24], %50 {strides = array<i32>} : memref<128x128xf32, #tpu.memory_space<vmem>>, vector<128x128xf32>,
    return
  }
  func.func @transform_0(%arg0: i32) -> (i32, i32) {
    %c0_i32 = arith.constant 0 : i32
    %c0_i32_0 = arith.constant 0 : i32
    return %arg0, %c0_i32 : i32, i32
  }
  func.func @transform_1(%arg0: i32) -> (i32, i32) {
    %c0_i32 = arith.constant 0 : i32
    %c0_i32_0 = arith.constant 0 : i32
    %c0_i32_1 = arith.constant 0 : i32
    return %c0_i32, %c0_i32_0 : i32, i32
  }
  func.func @transform_2(%arg0: i32) -> (i32, i32) {
    %c0_i32 = arith.constant 0 : i32
    %c0_i32_0 = arith.constant 0 : i32
    %c0_i32_1 = arith.constant 0 : i32
    return %c0_i32, %c0_i32_0 : i32, i32
  }
  func.func @transform_3(%arg0: i32) -> (i32, i32) {
    %c0_i32 = arith.constant 0 : i32
    %c0_i32_0 = arith.constant 0 : i32
    %c0_i32_1 = arith.constant 0 : i32
    return %c0_i32, %c0_i32_0 : i32, i32
  }
  func.func @transform_4(%arg0: i32) -> (i32, i32) {
    %c0_i32 = arith.constant 0 : i32
    %c0_i32_0 = arith.constant 0 : i32
    return %arg0, %c0_i32 : i32, i32
  }
  func.func @transform_5(%arg0: i32) -> (i32, i32) {
    %c0_i32 = arith.constant 0 : i32
    %c0_i32_0 = arith.constant 0 : i32
    %c0_i32_1 = arith.constant 0 : i32
    return %c0_i32, %c0_i32_0 : i32, i32
  }
  func.func @transform_6(%arg0: i32) -> (i32, i32) {
    %c0_i32 = arith.constant 0 : i32
    %c0_i32_0 = arith.constant 0 : i32
    %c0_i32_1 = arith.constant 0 : i32
    return %c0_i32, %c0_i32_0 : i32, i32
  }
  func.func @transform_7(%arg0: i32) -> (i32, i32) {
    %c0_i32 = arith.constant 0 : i32
    %c0_i32_0 = arith.constant 0 : i32
    %c0_i32_1 = arith.constant 0 : i32
    return %c0_i32, %c0_i32_0 : i32, i32
  }
  func.func @transform_8(%arg0: i32) -> (i32, i32) {
    %c0_i32 = arith.constant 0 : i32
    %c0_i32_0 = arith.constant 0 : i32
    return %arg0, %c0_i32 : i32, i32
  }
}

</mosaic_0001>

<llo_original>
// kernel: bottleneck_forward.7
$region0: #{bottleneck_forward.7}
  #allocation0 [shape = 'u32[]', space=smem, size = 0x4, offset = 0x4, fixed_abs, tag = 'smem constant byte address 0x4 - core index']
  #allocation1 [shape = 'u32[144,128]{1,0:T(1,128)}', space=vmem, size = 0x12000, scoped, tag = 'internal scratch']
  %s0 = inlined_call_operand.vmem [shape: f32[512,128], index: 0, kind: input, shape index: {}]
  %s1 = inlined_call_operand.vmem [shape: f32[2,128], index: 1, kind: input, shape index: {}]
  %s2 = inlined_call_operand.vmem [shape: f32[1,128], index: 2, kind: input, shape index: {}]
  %s3 = inlined_call_operand.vmem [shape: f32[1,128], index: 3, kind: input, shape index: {}]
  %s4 = inlined_call_operand.vmem [shape: f32[512,128], index: 4, kind: output, shape index: {}]
  %s5 = sld [smem:[#allocation0]]
  $region49: #{bottleneck_forward.7} parent=0
    _
  %s7 = ssub.s32 1, %s5
  %s8 = scalar_select 0, %s7, %s5
  loop: start=0, step=1, limit=6
  $region2: #{bottleneck_forward.7} parent=0 // loop_pre_header
    _
  $region3: #{bottleneck_forward.7} parent=0 // loop_header
    %s10 = sphi 0, %s14
    %p11 = scmp.ge.s32.totalorder %s10, 6
    %s20 = sphi 0, %s22
    %s23 = sphi 0, %s20
    %s24 = sphi 0, %s23
    %s40 = sphi 0, %s24
    %s44 = sphi 0, %s44
    %s46 = sphi 0, %s44
    %s47 = sphi 0, %s46
    %s61 = sphi 0, %s47
    %s65 = sphi 0, %s65
    %s67 = sphi 0, %s65
    %s68 = sphi 0, %s67
    %s82 = sphi 0, %s68
    %s86 = sphi 0, %s86
    %s88 = sphi 0, %s86
    %s89 = sphi 0, %s88
    %s103 = sphi 0, %s89
    %s109 = sphi 0, %s111
    %s112 = sphi 0, %s109
    %s113 = sphi 0, %s112
    %s129 = sphi 0, %s113
  $region4: #{bottleneck_forward.7} parent=0 // loop_header_branch
    %13 = sbr.rel (%p11) target = $region8
  $region5: #{bottleneck_forward.7} parent=0 // loop_body
    %s15 = ssub.s32 %s10, 1
    %s16 = ssub.s32 %s10, 2
    %s17 = sadd.s32 %s10, 1
    %s18 = ssub.s32 %s10, %s17
    %p19 = scmp.eq.s32.totalorder %s18, 0
    %s21 = sadd.s32 %s20, 1
    %s22 = scalar_select %p19, %s20, %s21
    %p25 = pneg %p19
    %p26 = scmp.eq.s32.totalorder %s10, 3
    %p27 = por %p25, %p26
    %p28 = scmp.ne.s32.totalorder %s20, %s23
    %p29 = scmp.eq.s32.totalorder %s10, 0
    %p30 = por %p28, %p29
    %p31 = scmp.ne.s32.totalorder %s20, %s23
    %p32 = scmp.eq.s32.totalorder %s15, 3
    %p33 = por %p31, %p32
    %p34 = scmp.ne.s32.totalorder %s23, %s24
    %p35 = scmp.eq.s32.totalorder %s15, 0
    %p36 = por %p34, %p35
    %p37 = scmp.ne.s32.totalorder %s23, %s24
    %p38 = scmp.eq.s32.totalorder %s16, 3
    %p39 = por %p37, %p38
    %p41 = scmp.ne.s32.totalorder %s24, %s40
    %p42 = scmp.eq.s32.totalorder %s16, 0
    %p43 = por %p41, %p42
    %s45 = sadd.s32 %s44, 1
    %p48 = scmp.eq.s32.totalorder %s10, 3
    %p49 = scmp.ne.s32.totalorder %s44, %s46
    %p50 = scmp.eq.s32.totalorder %s10, 0
    %p51 = por %p49, %p50
    %p52 = scmp.ne.s32.totalorder %s44, %s46
    %p53 = scmp.eq.s32.totalorder %s15, 3
    %p54 = por %p52, %p53
    %p55 = scmp.ne.s32.totalorder %s46, %s47
    %p56 = scmp.eq.s32.totalorder %s15, 0
    %p57 = por %p55, %p56
    %p58 = scmp.ne.s32.totalorder %s46, %s47
    %p59 = scmp.eq.s32.totalorder %s16, 3
    %p60 = por %p58, %p59
    %p62 = scmp.ne.s32.totalorder %s47, %s61
    %p63 = scmp.eq.s32.totalorder %s16, 0
    %p64 = por %p62, %p63
    %s66 = sadd.s32 %s65, 1
    %p69 = scmp.eq.s32.totalorder %s10, 3
    %p70 = scmp.ne.s32.totalorder %s65, %s67
    %p71 = scmp.eq.s32.totalorder %s10, 0
    %p72 = por %p70, %p71
    %p73 = scmp.ne.s32.totalorder %s65, %s67
    %p74 = scmp.eq.s32.totalorder %s15, 3
    %p75 = por %p73, %p74
    %p76 = scmp.ne.s32.totalorder %s67, %s68
    %p77 = scmp.eq.s32.totalorder %s15, 0
    %p78 = por %p76, %p77
    %p79 = scmp.ne.s32.totalorder %s67, %s68
    %p80 = scmp.eq.s32.totalorder %s16, 3
    %p81 = por %p79, %p80
    %p83 = scmp.ne.s32.totalorder %s68, %s82
    %p84 = scmp.eq.s32.totalorder %s16, 0
    %p85 = por %p83, %p84
    %s87 = sadd.s32 %s86, 1
    %p90 = scmp.eq.s32.totalorder %s10, 3
    %p91 = scmp.ne.s32.totalorder %s86, %s88
    %p92 = scmp.eq.s32.totalorder %s10, 0
    %p93 = por %p91, %p92
    %p94 = scmp.ne.s32.totalorder %s86, %s88
    %p95 = scmp.eq.s32.totalorder %s15, 3
    %p96 = por %p94, %p95
    %p97 = scmp.ne.s32.totalorder %s88, %s89
    %p98 = scmp.eq.s32.totalorder %s15, 0
    %p99 = por %p97, %p98
    %p100 = scmp.ne.s32.totalorder %s88, %s89
    %p101 = scmp.eq.s32.totalorder %s16, 3
    %p102 = por %p100, %p101
    %p104 = scmp.ne.s32.totalorder %s89, %s103
    %p105 = scmp.eq.s32.totalorder %s16, 0
    %p106 = por %p104, %p105
    %s107 = ssub.s32 %s10, %s17
    %p108 = scmp.eq.s32.totalorder %s107, 0
    %s110 = sadd.s32 %s109, 1
    %s111 = scalar_select %p108, %s109, %s110
    %p114 = pneg %p108
    %p115 = scmp.eq.s32.totalorder %s10, 3
    %p116 = por %p114, %p115
    %p117 = scmp.ne.s32.totalorder %s109, %s112
    %p118 = scmp.eq.s32.totalorder %s10, 0
    %p119 = por %p117, %p118
    %p120 = scmp.ne.s32.totalorder %s109, %s112
    %p121 = scmp.eq.s32.totalorder %s15, 3
    %p122 = por %p120, %p121
    %p123 = scmp.ne.s32.totalorder %s112, %s113
    %p124 = scmp.eq.s32.totalorder %s15, 0
    %p125 = por %p123, %p124
    %p126 = scmp.ne.s32.totalorder %s112, %s113
    %p127 = scmp.eq.s32.totalorder %s16, 3
    %p128 = por %p126, %p127
    %p130 = scmp.ne.s32.totalorder %s113, %s129
    %p131 = scmp.eq.s32.totalorder %s16, 0
    %p132 = por %p130, %p131
    %p133 = scmp.le.s32.totalorder 1, %s10
    %p134 = scmp.lt.s32.totalorder %s10, 5
    %p135 = pnand %p133, %p134
    %p136 = pneg %p135
    // Predicated region
    $region9: #{bottleneck_forward.7} parent=5 // pred_check
      _
    $region10: #{bottleneck_forward.7} parent=5 // pred_check_branch
      %138 = sbr.rel (%p135) target = $region12
    $region11: #{bottleneck_forward.7} parent=5 // pred_region
      %s139 = ssub.s32 %s10, 1
      // Predicated region
      $region13: #{bottleneck_forward.7} parent=11 // pred_check
        %p140 = pneg %p57
      $region14: #{bottleneck_forward.7} parent=11 // pred_check_branch
        %142 = sbr.rel (%p140) target = $region16
      $region15: #{bottleneck_forward.7} parent=11 // pred_region
        _
      $region16: #{bottleneck_forward.7} parent=11 // pred_fallthru
        _
      // Predicated region
      $region17: #{bottleneck_forward.7} parent=11 // pred_check
        %p143 = pneg %p78
      $region18: #{bottleneck_forward.7} parent=11 // pred_check_branch
        %145 = sbr.rel (%p143) target = $region20
      $region19: #{bottleneck_forward.7} parent=11 // pred_region
        _
      $region20: #{bottleneck_forward.7} parent=11 // pred_fallthru
        _
      // Predicated region
      $region21: #{bottleneck_forward.7} parent=11 // pred_check
        %p146 = pneg %p99
      $region22: #{bottleneck_forward.7} parent=11 // pred_check_branch
        %148 = sbr.rel (%p146) target = $region24
      $region23: #{bottleneck_forward.7} parent=11 // pred_region
        _
      $region24: #{bottleneck_forward.7} parent=11 // pred_fallthru
        _
    $region12: #{bottleneck_forward.7} parent=5 // pred_fallthru
      _
    %p149 = scmp.lt.s32.totalorder %s10, 4
    // Predicated region
    $region25: #{bottleneck_forward.7} parent=5 // pred_check
      %p150 = pneg %p149
    $region26: #{bottleneck_forward.7} parent=5 // pred_check_branch
      %152 = sbr.rel (%p150) target = $region28
    $region27: #{bottleneck_forward.7} parent=5 // pred_region
      // Predicated region
      $region29: #{bottleneck_forward.7} parent=27 // pred_check
        %p153 = pneg %p30
      $region30: #{bottleneck_forward.7} parent=27 // pred_check_branch
        %155 = sbr.rel (%p153) target = $region32
      $region31: #{bottleneck_forward.7} parent=27 // pred_region
        %s156 = smul.u32 16, %s10
        %p157 = scmp.lt.s32.totalorder %s156, 63
        %s158 = scalar_select %p157, %s156, 63
        %s159 = smul.addr %s158, 8
        %s160 = scalar_lea.vmem %s0, %s159
        %s161 = smul.u32 16, %s10
      $region32: #{bottleneck_forward.7} parent=27 // pred_fallthru
        _
    $region28: #{bottleneck_forward.7} parent=5 // pred_fallthru
      _
    %p162 = scmp.le.s32.totalorder 1, %s10
    %p163 = scmp.lt.s32.totalorder %s10, 5
    %p164 = pnand %p162, %p163
    %p165 = pneg %p164
    // Predicated region
    $region33: #{bottleneck_forward.7} parent=5 // pred_check
      _
    $region34: #{bottleneck_forward.7} parent=5 // pred_check_branch
      %167 = sbr.rel (%p164) target = $region36
    $region35: #{bottleneck_forward.7} parent=5 // pred_region
      %s168 = ssub.s32 %s10, 1
      %s169 = smul.u32 16, %s15
      %p170 = scmp.lt.s32.totalorder %s169, 63
      %s171 = scalar_select %p170, %s169, 63
      %s172 = smul.addr %s171, 8
      %s173 = scalar_lea.vmem %s0, %s172
      %p174 = pneg %p36
      %p175 = pneg %p33
      %p176 = pneg %p57
      %p177 = pneg %p54
      %p178 = pneg %p78
      %p179 = pneg %p75
      %p180 = pneg %p99
      %p181 = pneg %p96
      %p182 = pneg %p125
      %p183 = pneg %p122
      %s184 = smul.u32 16, %s15
      %p185 = scmp.lt.s32.totalorder %s184, 63
      %s186 = scalar_select %p185, %s184, 63
      %s187 = smul.addr %s186, 8
      %s188 = scalar_lea.vmem %s4, %s187
      %s189 = smul.u32 16, %s15
      %p190 = scmp.lt.s32.totalorder %s189, 63
      %s191 = scalar_select %p190, %s189, 63
      %s192 = smul.addr %s191, 8
      %s193 = scalar_lea.vmem %s0, %s192
      %s194 = smul.u32 16, %s15
      %s195 = smul.u32 16, %s15
      %p196 = scmp.lt.s32.totalorder %s195, 63
      %s197 = scalar_select %p196, %s195, 63
      %s198 = smul.addr %s197, 8
      %s199 = scalar_lea.vmem %s4, %s198
      %s200 = smul.u32 16, %s15
      %v201 = vld [vmem:[%s1] sm:$0x3]
      %v202 = vld [vmem:[%s2] sm:$0x1]
      %v203 = vld [vmem:[%s3] sm:$0x1]
      %v204 = vmul.f32 %v201, 0.001953125
      %v205 = vmul.f32 %v204, %v204
      %v207 = vrot.slane %v205, 7
      %v209 = vsub.f32 %v204, %v207
      %v210 = vmax.f32 %v209, 0.0
      %v211 = vadd.f32 %v210, 1e-05
      %v212 = vrsqrt.pop %v211
      %v215 = vunpack.c.l.s4 1966171168
      %v216 = vunpack.c.0.s8 %v215
      %v217 = vlaneseq
      %v218 = vshrl.u32 %v217, 7
      %v219 = vsub.s32 %v216, %v218
      %v220 = vrot.slane %v212, %v219
      %v221 = vcombine.high %v220, %v220
      %v223 = vunpack.c.l.s4 1966171168
      %v224 = vunpack.c.0.s8 %v223
      %v225 = vlaneseq
      %v226 = vshrl.u32 %v225, 7
      %v227 = vsub.s32 %v224, %v226
      %v228 = vrot.slane %v221, %v227
      %v230 = vmul.f32 %v202, %v228
      %v231 = vmul.f32 %v204, %v230
      %v232 = vsub.f32 %v203, %v231
      %v233 = vld [vmem:[%s193] sm:$0xff]
      %v234 = vld [vmem:[%s193 + $0x8] sm:$0xff]
      %v235 = vld [vmem:[%s193 + $0x10] sm:$0xff]
      %v236 = vld [vmem:[%s193 + $0x18] sm:$0xff]
      %v237 = vld [vmem:[%s193 + $0x20] sm:$0xff]
      %v238 = vld [vmem:[%s193 + $0x28] sm:$0xff]
      %v239 = vld [vmem:[%s193 + $0x30] sm:$0xff]
      %v240 = vld [vmem:[%s193 + $0x38] sm:$0xff]
      %v241 = vld [vmem:[%s193 + $0x40] sm:$0xff]
      %v242 = vld [vmem:[%s193 + $0x48] sm:$0xff]
      %v243 = vld [vmem:[%s193 + $0x50] sm:$0xff]
      %v244 = vld [vmem:[%s193 + $0x58] sm:$0xff]
      %v245 = vld [vmem:[%s193 + $0x60] sm:$0xff]
      %v246 = vld [vmem:[%s193 + $0x68] sm:$0xff]
      %v247 = vld [vmem:[%s193 + $0x70] sm:$0xff]
      %v248 = vld [vmem:[%s193 + $0x78] sm:$0xff]
      %v250 = vlaneseq
      %v251 = vshrl.u32 %v250, 7
      %v252 = vsub.s32 0, %v251
      %v253 = vrot.slane %v230, %v252
      %v255 = vmul.f32 %v233, %v253
      %v256 = vmul.f32 %v234, %v253
      %v257 = vmul.f32 %v235, %v253
      %v258 = vmul.f32 %v236, %v253
      %v259 = vmul.f32 %v237, %v253
      %v260 = vmul.f32 %v238, %v253
      %v261 = vmul.f32 %v239, %v253
      %v262 = vmul.f32 %v240, %v253
      %v263 = vmul.f32 %v241, %v253
      %v264 = vmul.f32 %v242, %v253
      %v265 = vmul.f32 %v243, %v253
      %v266 = vmul.f32 %v244, %v253
      %v267 = vmul.f32 %v245, %v253
      %v268 = vmul.f32 %v246, %v253
      %v269 = vmul.f32 %v247, %v253
      %v270 = vmul.f32 %v248, %v253
      %v272 = vlaneseq
      %v273 = vshrl.u32 %v272, 7
      %v274 = vsub.s32 0, %v273
      %v275 = vrot.slane %v232, %v274
      %v277 = vadd.f32 %v255, %v275
      %v278 = vadd.f32 %v256, %v275
      %v279 = vadd.f32 %v257, %v275
      %v280 = vadd.f32 %v258, %v275
      %v281 = vadd.f32 %v259, %v275
      %v282 = vadd.f32 %v260, %v275
      %v283 = vadd.f32 %v261, %v275
      %v284 = vadd.f32 %v262, %v275
      %v285 = vadd.f32 %v263, %v275
      %v286 = vadd.f32 %v264, %v275
      %v287 = vadd.f32 %v265, %v275
      %v288 = vadd.f32 %v266, %v275
      %v289 = vadd.f32 %v267, %v275
      %v290 = vadd.f32 %v268, %v275
      %v291 = vadd.f32 %v269, %v275
      %v292 = vadd.f32 %v270, %v275
      %v293 = vmax.f32 %v277, 0.0
      %v294 = vmax.f32 %v278, 0.0
      %v295 = vmax.f32 %v279, 0.0
      %v296 = vmax.f32 %v280, 0.0
      %v297 = vmax.f32 %v281, 0.0
      %v298 = vmax.f32 %v282, 0.0
      %v299 = vmax.f32 %v283, 0.0
      %v300 = vmax.f32 %v284, 0.0
      %v301 = vmax.f32 %v285, 0.0
      %v302 = vmax.f32 %v286, 0.0
      %v303 = vmax.f32 %v287, 0.0
      %v304 = vmax.f32 %v288, 0.0
      %v305 = vmax.f32 %v289, 0.0
      %v306 = vmax.f32 %v290, 0.0
      %v307 = vmax.f32 %v291, 0.0
      %v308 = vmax.f32 %v292, 0.0
      %309 = vst [vmem:[%s199] sm:$0xff] %v293
      %310 = vst [vmem:[%s199 + $0x8] sm:$0xff] %v294
      %311 = vst [vmem:[%s199 + $0x10] sm:$0xff] %v295
      %312 = vst [vmem:[%s199 + $0x18] sm:$0xff] %v296
      %313 = vst [vmem:[%s199 + $0x20] sm:$0xff] %v297
      %314 = vst [vmem:[%s199 + $0x28] sm:$0xff] %v298
      %315 = vst [vmem:[%s199 + $0x30] sm:$0xff] %v299
      %316 = vst [vmem:[%s199 + $0x38] sm:$0xff] %v300
      %317 = vst [vmem:[%s199 + $0x40] sm:$0xff] %v301
      %318 = vst [vmem:[%s199 + $0x48] sm:$0xff] %v302
      %319 = vst [vmem:[%s199 + $0x50] sm:$0xff] %v303
      %320 = vst [vmem:[%s199 + $0x58] sm:$0xff] %v304
      %321 = vst [vmem:[%s199 + $0x60] sm:$0xff] %v305
      %322 = vst [vmem:[%s199 + $0x68] sm:$0xff] %v306
      %323 = vst [vmem:[%s199 + $0x70] sm:$0xff] %v307
      %324 = vst [vmem:[%s199 + $0x78] sm:$0xff] %v308
      %s325 = smul.u32 16, %s15
      %p326 = scmp.lt.s32.totalorder %s325, 63
      %s327 = scalar_select %p326, %s325, 63
      %s328 = smul.addr %s327, 8
      %s329 = scalar_lea.vmem %s4, %s328
      // Predicated region
      $region37: #{bottleneck_forward.7} parent=35 // pred_check
        %p330 = pneg %p122
      $region38: #{bottleneck_forward.7} parent=35 // pred_check_branch
        %332 = sbr.rel (%p330) target = $region40
      $region39: #{bottleneck_forward.7} parent=35 // pred_region
        %s333 = smul.u32 16, %s15
      $region40: #{bottleneck_forward.7} parent=35 // pred_fallthru
        _
    $region36: #{bottleneck_forward.7} parent=5 // pred_fallthru
      _
    %p334 = scmp.le.s32.totalorder 2, %s10
    // Predicated region
    $region41: #{bottleneck_forward.7} parent=5 // pred_check
      %p335 = pneg %p334
    $region42: #{bottleneck_forward.7} parent=5 // pred_check_branch
      %337 = sbr.rel (%p335) target = $region44
    $region43: #{bottleneck_forward.7} parent=5 // pred_region
      %s338 = ssub.s32 %s10, 2
      // Predicated region
      $region45: #{bottleneck_forward.7} parent=43 // pred_check
        %p339 = pneg %p128
      $region46: #{bottleneck_forward.7} parent=43 // pred_check_branch
        %341 = sbr.rel (%p339) target = $region48
      $region47: #{bottleneck_forward.7} parent=43 // pred_region
        %s342 = smul.u32 16, %s16
        %p343 = scmp.lt.s32.totalorder %s342, 63
        %s344 = scalar_select %p343, %s342, 63
        %s345 = smul.addr %s344, 8
        %s346 = scalar_lea.vmem %s4, %s345
      $region48: #{bottleneck_forward.7} parent=43 // pred_fallthru
        _
    $region44: #{bottleneck_forward.7} parent=5 // pred_fallthru
      _
  $region6: #{bottleneck_forward.7} parent=0 // loop_footer
    %s14 = sadd.s32 1, %s10
  $region7: #{bottleneck_forward.7} parent=0 // loop_footer_branch
    %9 = sbr.rel target = $region3
  $region8: #{bottleneck_forward.7} parent=0 // loop_exit
    _

// kernel: bottleneck_forward.6
$region0: #{bottleneck_forward.6}
  #allocation0 [shape = 'u32[]', space=smem, size = 0x4, offset = 0x4, fixed_abs, tag = 'smem constant byte address 0x4 - core index']
  #allocation1 [shape = 'u32[144,128]{1,0:T(1,128)}', space=vmem, size = 0x12000, scoped, tag = 'internal scratch']
  %s0 = inlined_call_operand.vmem [shape: f32[512,128], index: 0, kind: input, shape index: {}]
  %s1 = inlined_call_operand.vmem [shape: bf16[128,128], index: 1, kind: input, shape index: {}]
  %s2 = inlined_call_operand.vmem [shape: f32[512,128], index: 2, kind: output, shape index: {0}]
  %s3 = inlined_call_operand.vmem [shape: f32[2,128], index: 3, kind: output, shape index: {1}]
  %4 = xla_tuple %s2, %s3
  %s5 = sld [smem:[#allocation0]]
  $region53: #{bottleneck_forward.6} parent=0
    _
  %s7 = ssub.s32 1, %s5
  %s8 = scalar_select 0, %s7, %s5
  loop: start=0, step=1, limit=6
  $region2: #{bottleneck_forward.6} parent=0 // loop_pre_header
    _
  $region3: #{bottleneck_forward.6} parent=0 // loop_header
    %s10 = sphi 0, %s14
    %p11 = scmp.ge.s32.totalorder %s10, 6
    %s20 = sphi 0, %s22
    %s23 = sphi 0, %s20
    %s24 = sphi 0, %s23
    %s40 = sphi 0, %s24
    %s44 = sphi 0, %s44
    %s46 = sphi 0, %s44
    %s47 = sphi 0, %s46
    %s61 = sphi 0, %s47
    %s67 = sphi 0, %s69
    %s70 = sphi 0, %s67
    %s71 = sphi 0, %s70
    %s87 = sphi 0, %s71
    %s91 = sphi 0, %s91
    %s93 = sphi 0, %s91
    %s94 = sphi 0, %s93
    %s108 = sphi 0, %s94
  $region4: #{bottleneck_forward.6} parent=0 // loop_header_branch
    %13 = sbr.rel (%p11) target = $region8
  $region5: #{bottleneck_forward.6} parent=0 // loop_body
    %s15 = ssub.s32 %s10, 1
    %s16 = ssub.s32 %s10, 2
    %s17 = sadd.s32 %s10, 1
    %s18 = ssub.s32 %s10, %s17
    %p19 = scmp.eq.s32.totalorder %s18, 0
    %s21 = sadd.s32 %s20, 1
    %s22 = scalar_select %p19, %s20, %s21
    %p25 = pneg %p19
    %p26 = scmp.eq.s32.totalorder %s10, 3
    %p27 = por %p25, %p26
    %p28 = scmp.ne.s32.totalorder %s20, %s23
    %p29 = scmp.eq.s32.totalorder %s10, 0
    %p30 = por %p28, %p29
    %p31 = scmp.ne.s32.totalorder %s20, %s23
    %p32 = scmp.eq.s32.totalorder %s15, 3
    %p33 = por %p31, %p32
    %p34 = scmp.ne.s32.totalorder %s23, %s24
    %p35 = scmp.eq.s32.totalorder %s15, 0
    %p36 = por %p34, %p35
    %p37 = scmp.ne.s32.totalorder %s23, %s24
    %p38 = scmp.eq.s32.totalorder %s16, 3
    %p39 = por %p37, %p38
    %p41 = scmp.ne.s32.totalorder %s24, %s40
    %p42 = scmp.eq.s32.totalorder %s16, 0
    %p43 = por %p41, %p42
    %s45 = sadd.s32 %s44, 1
    %p48 = scmp.eq.s32.totalorder %s10, 3
    %p49 = scmp.ne.s32.totalorder %s44, %s46
    %p50 = scmp.eq.s32.totalorder %s10, 0
    %p51 = por %p49, %p50
    %p52 = scmp.ne.s32.totalorder %s44, %s46
    %p53 = scmp.eq.s32.totalorder %s15, 3
    %p54 = por %p52, %p53
    %p55 = scmp.ne.s32.totalorder %s46, %s47
    %p56 = scmp.eq.s32.totalorder %s15, 0
    %p57 = por %p55, %p56
    %p58 = scmp.ne.s32.totalorder %s46, %s47
    %p59 = scmp.eq.s32.totalorder %s16, 3
    %p60 = por %p58, %p59
    %p62 = scmp.ne.s32.totalorder %s47, %s61
    %p63 = scmp.eq.s32.totalorder %s16, 0
    %p64 = por %p62, %p63
    %s65 = ssub.s32 %s10, %s17
    %p66 = scmp.eq.s32.totalorder %s65, 0
    %s68 = sadd.s32 %s67, 1
    %s69 = scalar_select %p66, %s67, %s68
    %p72 = pneg %p66
    %p73 = scmp.eq.s32.totalorder %s10, 3
    %p74 = por %p72, %p73
    %p75 = scmp.ne.s32.totalorder %s67, %s70
    %p76 = scmp.eq.s32.totalorder %s10, 0
    %p77 = por %p75, %p76
    %p78 = scmp.ne.s32.totalorder %s67, %s70
    %p79 = scmp.eq.s32.totalorder %s15, 3
    %p80 = por %p78, %p79
    %p81 = scmp.ne.s32.totalorder %s70, %s71
    %p82 = scmp.eq.s32.totalorder %s15, 0
    %p83 = por %p81, %p82
    %p84 = scmp.ne.s32.totalorder %s70, %s71
    %p85 = scmp.eq.s32.totalorder %s16, 3
    %p86 = por %p84, %p85
    %p88 = scmp.ne.s32.totalorder %s71, %s87
    %p89 = scmp.eq.s32.totalorder %s16, 0
    %p90 = por %p88, %p89
    %s92 = sadd.s32 %s91, 1
    %p95 = scmp.eq.s32.totalorder %s10, 3
    %p96 = scmp.ne.s32.totalorder %s91, %s93
    %p97 = scmp.eq.s32.totalorder %s10, 0
    %p98 = por %p96, %p97
    %p99 = scmp.ne.s32.totalorder %s91, %s93
    %p100 = scmp.eq.s32.totalorder %s15, 3
    %p101 = por %p99, %p100
    %p102 = scmp.ne.s32.totalorder %s93, %s94
    %p103 = scmp.eq.s32.totalorder %s15, 0
    %p104 = por %p102, %p103
    %p105 = scmp.ne.s32.totalorder %s93, %s94
    %p106 = scmp.eq.s32.totalorder %s16, 3
    %p107 = por %p105, %p106
    %p109 = scmp.ne.s32.totalorder %s94, %s108
    %p110 = scmp.eq.s32.totalorder %s16, 0
    %p111 = por %p109, %p110
    %p112 = scmp.le.s32.totalorder 1, %s10
    %p113 = scmp.lt.s32.totalorder %s10, 5
    %p114 = pnand %p112, %p113
    %p115 = pneg %p114
    // Predicated region
    $region9: #{bottleneck_forward.6} parent=5 // pred_check
      _
    $region10: #{bottleneck_forward.6} parent=5 // pred_check_branch
      %117 = sbr.rel (%p114) target = $region12
    $region11: #{bottleneck_forward.6} parent=5 // pred_region
      %s118 = ssub.s32 %s10, 1
      // Predicated region
      $region13: #{bottleneck_forward.6} parent=11 // pred_check
        %p119 = pneg %p57
      $region14: #{bottleneck_forward.6} parent=11 // pred_check_branch
        %121 = sbr.rel (%p119) target = $region16
      $region15: #{bottleneck_forward.6} parent=11 // pred_region
        _
      $region16: #{bottleneck_forward.6} parent=11 // pred_fallthru
        _
    $region12: #{bottleneck_forward.6} parent=5 // pred_fallthru
      _
    %p122 = scmp.lt.s32.totalorder %s10, 4
    // Predicated region
    $region17: #{bottleneck_forward.6} parent=5 // pred_check
      %p123 = pneg %p122
    $region18: #{bottleneck_forward.6} parent=5 // pred_check_branch
      %125 = sbr.rel (%p123) target = $region20
    $region19: #{bottleneck_forward.6} parent=5 // pred_region
      // Predicated region
      $region21: #{bottleneck_forward.6} parent=19 // pred_check
        %p126 = pneg %p30
      $region22: #{bottleneck_forward.6} parent=19 // pred_check_branch
        %128 = sbr.rel (%p126) target = $region24
      $region23: #{bottleneck_forward.6} parent=19 // pred_region
        %s129 = smul.u32 16, %s10
        %p130 = scmp.lt.s32.totalorder %s129, 63
        %s131 = scalar_select %p130, %s129, 63
        %s132 = smul.addr %s131, 8
        %s133 = scalar_lea.vmem %s0, %s132
        %s134 = smul.u32 16, %s10
      $region24: #{bottleneck_forward.6} parent=19 // pred_fallthru
        _
    $region20: #{bottleneck_forward.6} parent=5 // pred_fallthru
      _
    %p135 = scmp.le.s32.totalorder 1, %s10
    %p136 = scmp.lt.s32.totalorder %s10, 5
    %p137 = pnand %p135, %p136
    %p138 = pneg %p137
    // Predicated region
    $region25: #{bottleneck_forward.6} parent=5 // pred_check
      _
    $region26: #{bottleneck_forward.6} parent=5 // pred_check_branch
      %140 = sbr.rel (%p137) target = $region28
    $region27: #{bottleneck_forward.6} parent=5 // pred_region
      %s141 = ssub.s32 %s10, 1
      %s142 = smul.u32 16, %s15
      %p143 = scmp.lt.s32.totalorder %s142, 63
      %s144 = scalar_select %p143, %s142, 63
      %s145 = smul.addr %s144, 8
      %s146 = scalar_lea.vmem %s0, %s145
      %p147 = pneg %p36
      %p148 = pneg %p33
      %p149 = pneg %p57
      %p150 = pneg %p54
      %p151 = pneg %p83
      %p152 = pneg %p80
      %s153 = smul.u32 16, %s15
      %p154 = scmp.lt.s32.totalorder %s153, 63
      %s155 = scalar_select %p154, %s153, 63
      %s156 = smul.addr %s155, 8
      %s157 = scalar_lea.vmem %s2, %s156
      %p158 = pneg %p104
      %p159 = pneg %p101
      %s160 = smul.u32 16, %s15
      %p161 = scmp.lt.s32.totalorder %s160, 63
      %s162 = scalar_select %p161, %s160, 63
      %s163 = smul.addr %s162, 8
      %s164 = scalar_lea.vmem %s0, %s163
      %s165 = smul.u32 16, %s15
      %s166 = smul.u32 16, %s15
      %p167 = scmp.lt.s32.totalorder %s166, 63
      %s168 = scalar_select %p167, %s166, 63
      %s169 = smul.addr %s168, 8
      %s170 = scalar_lea.vmem %s2, %s169
      %s171 = smul.u32 16, %s15
      %p173 = scmp.eq.s32.totalorder %s15, 0
      // Predicated region
      $region29: #{bottleneck_forward.6} parent=27 // pred_check
        %p174 = pneg %p173
      $region30: #{bottleneck_forward.6} parent=27 // pred_check_branch
        %176 = sbr.rel (%p174) target = $region32
      $region31: #{bottleneck_forward.6} parent=27 // pred_region
        %177 = vst [vmem:[%s3] sm:$0x3] 0.0
      $region32: #{bottleneck_forward.6} parent=27 // pred_fallthru
        _
      %v178 = vld [vmem:[%s164] sm:$0xff]
      %v179 = vld [vmem:[%s164 + $0x8] sm:$0xff]
      %v180 = vld [vmem:[%s164 + $0x10] sm:$0xff]
      %v181 = vld [vmem:[%s164 + $0x18] sm:$0xff]
      %v182 = vld [vmem:[%s164 + $0x20] sm:$0xff]
      %v183 = vld [vmem:[%s164 + $0x28] sm:$0xff]
      %v184 = vld [vmem:[%s164 + $0x30] sm:$0xff]
      %v185 = vld [vmem:[%s164 + $0x38] sm:$0xff]
      %v186 = vld [vmem:[%s164 + $0x40] sm:$0xff]
      %v187 = vld [vmem:[%s164 + $0x48] sm:$0xff]
      %v188 = vld [vmem:[%s164 + $0x50] sm:$0xff]
      %v189 = vld [vmem:[%s164 + $0x58] sm:$0xff]
      %v190 = vld [vmem:[%s164 + $0x60] sm:$0xff]
      %v191 = vld [vmem:[%s164 + $0x68] sm:$0xff]
      %v192 = vld [vmem:[%s164 + $0x70] sm:$0xff]
      %v193 = vld [vmem:[%s164 + $0x78] sm:$0xff]
      %v194 = vpack.c.bf16 %v179, %v178
      %v195 = vpack.c.bf16 %v181, %v180
      %v196 = vpack.c.bf16 %v183, %v182
      %v197 = vpack.c.bf16 %v185, %v184
      %v198 = vpack.c.bf16 %v187, %v186
      %v199 = vpack.c.bf16 %v189, %v188
      %v200 = vpack.c.bf16 %v191, %v190
      %v201 = vpack.c.bf16 %v193, %v192
      %v202 = vld [vmem:[%s1] sm:$0xf]
      %v203 = vld [vmem:[%s1 + $0x4] sm:$0xf]
      %v204 = vld [vmem:[%s1 + $0x8] sm:$0xf]
      %v205 = vld [vmem:[%s1 + $0xc] sm:$0xf]
      %v206 = vld [vmem:[%s1 + $0x10] sm:$0xf]
      %v207 = vld [vmem:[%s1 + $0x14] sm:$0xf]
      %v208 = vld [vmem:[%s1 + $0x18] sm:$0xf]
      %v209 = vld [vmem:[%s1 + $0x1c] sm:$0xf]
      %v210 = vld [vmem:[%s1 + $0x20] sm:$0xf]
      %v211 = vld [vmem:[%s1 + $0x24] sm:$0xf]
      %v212 = vld [vmem:[%s1 + $0x28] sm:$0xf]
      %v213 = vld [vmem:[%s1 + $0x2c] sm:$0xf]
      %v214 = vld [vmem:[%s1 + $0x30] sm:$0xf]
      %v215 = vld [vmem:[%s1 + $0x34] sm:$0xf]
      %v216 = vld [vmem:[%s1 + $0x38] sm:$0xf]
      %v217 = vld [vmem:[%s1 + $0x3c] sm:$0xf]
      %v234 = vunpack.c.l.b16 %v202
      %v235 = vunpack.c.l.b16 %v203
      %v236 = vunpack.c.l.b16 %v204
      %v237 = vunpack.c.l.b16 %v205
      %v238 = vunpack.c.l.b16 %v206
      %v239 = vunpack.c.l.b16 %v207
      %v240 = vunpack.c.l.b16 %v208
      %v241 = vunpack.c.l.b16 %v209
      %v242 = vunpack.c.l.b16 %v210
      %v243 = vunpack.c.l.b16 %v211
      %v244 = vunpack.c.l.b16 %v212
      %v245 = vunpack.c.l.b16 %v213
      %v246 = vunpack.c.l.b16 %v214
      %v247 = vunpack.c.l.b16 %v215
      %v248 = vunpack.c.l.b16 %v216
      %v249 = vunpack.c.l.b16 %v217
      %v250 = vpack.c.b16 %v235, %v234
      %v251 = vpack.c.b16 %v237, %v236
      %v252 = vpack.c.b16 %v239, %v238
      %v253 = vpack.c.b16 %v241, %v240
      %v254 = vpack.c.b16 %v243, %v242
      %v255 = vpack.c.b16 %v245, %v244
      %v256 = vpack.c.b16 %v247, %v246
      %v257 = vpack.c.b16 %v249, %v248
      %266 = vmatprep.subr.bf16.mxu0 0
      %267 = vmatpush1.bf16.msra.mxu0 %v250
      %268 = vmatprep.subr.bf16.mxu0 0
      %269 = vmatpush1.bf16.msra.mxu0 %v251
      %270 = vmatprep.subr.bf16.mxu0 0
      %271 = vmatpush1.bf16.msra.mxu0 %v252
      %272 = vmatprep.subr.bf16.mxu0 0
      %273 = vmatpush1.bf16.msra.mxu0 %v253
      %274 = vmatprep.subr.bf16.mxu0 0
      %275 = vmatpush1.bf16.msra.mxu0 %v254
      %276 = vmatprep.subr.bf16.mxu0 0
      %277 = vmatpush1.bf16.msra.mxu0 %v255
      %278 = vmatprep.subr.bf16.mxu0 0
      %279 = vmatpush1.bf16.msra.mxu0 %v256
      %280 = vmatprep.subr.bf16.mxu0 0
      %281 = vmatpush1.bf16.msra.mxu0 %v257
      %282 = vmatprep.subr.bf16.mxu0 0
      %283 = vmatpush1.bf16.msra.mxu0 0
      %284 = vmatprep.subr.bf16.mxu0 0
      %285 = vmatpush1.bf16.msra.mxu0 0
      %286 = vmatprep.subr.bf16.mxu0 0
      %287 = vmatpush1.bf16.msra.mxu0 0
      %288 = vmatprep.subr.bf16.mxu0 0
      %289 = vmatpush1.bf16.msra.mxu0 0
      %290 = vmatprep.subr.bf16.mxu0 0
      %291 = vmatpush1.bf16.msra.mxu0 0
      %292 = vmatprep.subr.bf16.mxu0 0
      %293 = vmatpush1.bf16.msra.mxu0 0
      %294 = vmatprep.subr.bf16.mxu0 0
      %295 = vmatpush1.bf16.msra.mxu0 0
      %296 = vmatprep.subr.bf16.mxu0 0
      %297 = vmatpush1.bf16.msra.mxu0 0
      %298 = vmatprep.mubr.bf16.mxu0 0
      %299 = vmatmul.mubr.bf16.gmra.mrb[0].mxu0 %v194
      %v300 = vpop.f32.mrb[0].mxu0
      %v301 = vadd.f32 0.0, %v300
      %v302 = vpop.f32.mrb[0].mxu0
      %v303 = vpop.f32.mrb[0].mxu0
      %v304 = vadd.f32 0.0, %v303
      %v305 = vpop.f32.mrb[0].mxu0
      %306 = vmatprep.mubr.bf16.mxu0 0
      %307 = vmatmul.mubr.bf16.gmra.mrb[0].mxu0 %v195
      %v308 = vpop.f32.mrb[0].mxu0
      %v309 = vadd.f32 0.0, %v308
      %v310 = vpop.f32.mrb[0].mxu0
      %v311 = vpop.f32.mrb[0].mxu0
      %v312 = vadd.f32 0.0, %v311
      %v313 = vpop.f32.mrb[0].mxu0
      %314 = vmatprep.mubr.bf16.mxu0 0
      %315 = vmatmul.mubr.bf16.gmra.mrb[0].mxu0 %v196
      %v316 = vpop.f32.mrb[0].mxu0
      %v317 = vadd.f32 0.0, %v316
      %v318 = vpop.f32.mrb[0].mxu0
      %v319 = vpop.f32.mrb[0].mxu0
      %v320 = vadd.f32 0.0, %v319
      %v321 = vpop.f32.mrb[0].mxu0
      %322 = vmatprep.mubr.bf16.mxu0 0
      %323 = vmatmul.mubr.bf16.gmra.mrb[0].mxu0 %v197
      %v324 = vpop.f32.mrb[0].mxu0
      %v325 = vadd.f32 0.0, %v324
      %v326 = vpop.f32.mrb[0].mxu0
      %v327 = vpop.f32.mrb[0].mxu0
      %v328 = vadd.f32 0.0, %v327
      %v329 = vpop.f32.mrb[0].mxu0
      %330 = vmatprep.mubr.bf16.mxu0 0
      %331 = vmatmul.mubr.bf16.gmra.mrb[0].mxu0 %v198
      %v332 = vpop.f32.mrb[0].mxu0
      %v333 = vadd.f32 0.0, %v332
      %v334 = vpop.f32.mrb[0].mxu0
      %v335 = vpop.f32.mrb[0].mxu0
      %v336 = vadd.f32 0.0, %v335
      %v337 = vpop.f32.mrb[0].mxu0
      %338 = vmatprep.mubr.bf16.mxu0 0
      %339 = vmatmul.mubr.bf16.gmra.mrb[0].mxu0 %v199
      %v340 = vpop.f32.mrb[0].mxu0
      %v341 = vadd.f32 0.0, %v340
      %v342 = vpop.f32.mrb[0].mxu0
      %v343 = vpop.f32.mrb[0].mxu0
      %v344 = vadd.f32 0.0, %v343
      %v345 = vpop.f32.mrb[0].mxu0
      %346 = vmatprep.mubr.bf16.mxu0 0
      %347 = vmatmul.mubr.bf16.gmra.mrb[0].mxu0 %v200
      %v348 = vpop.f32.mrb[0].mxu0
      %v349 = vadd.f32 0.0, %v348
      %v350 = vpop.f32.mrb[0].mxu0
      %v351 = vpop.f32.mrb[0].mxu0
      %v352 = vadd.f32 0.0, %v351
      %v353 = vpop.f32.mrb[0].mxu0
      %354 = vmatprep.mubr.bf16.mxu0 0
      %355 = vmatmul.mubr.bf16.gmra.mrb[0].mxu0 %v201
      %v356 = vpop.f32.mrb[0].mxu0
      %v357 = vadd.f32 0.0, %v356
      %v358 = vpop.f32.mrb[0].mxu0
      %v359 = vpop.f32.mrb[0].mxu0
      %v360 = vadd.f32 0.0, %v359
      %v361 = vpop.f32.mrb[0].mxu0
      %362 = vdwg.mxu0
      %v363 = vld [vmem:[%s3] sm:$0x3]
      %v364 = vadd.f32 %v301, %v304
      %v365 = vadd.f32 %v364, %v309
      %v366 = vadd.f32 %v365, %v312
      %v367 = vadd.f32 %v366, %v317
      %v368 = vadd.f32 %v367, %v320
      %v369 = vadd.f32 %v368, %v325
      %v370 = vadd.f32 %v369, %v328
      %v371 = vadd.f32 %v370, %v333
      %v372 = vadd.f32 %v371, %v336
      %v373 = vadd.f32 %v372, %v341
      %v374 = vadd.f32 %v373, %v344
      %v375 = vadd.f32 %v374, %v349
      %v376 = vadd.f32 %v375, %v352
      %v377 = vadd.f32 %v376, %v357
      %v378 = vadd.f32 %v377, %v360
      %v379 = vrot.slane %v378, 4
      %v380 = vadd.f32 %v378, %v379
      %v381 = vrot.slane %v380, 2
      %v382 = vadd.f32 %v380, %v381
      %v383 = vrot.slane %v382, 1
      %v384 = vadd.f32 %v382, %v383
      %v385 = vmul.f32 %v301, %v301
      %v386 = vmul.f32 %v304, %v304
      %v387 = vmul.f32 %v309, %v309
      %v388 = vmul.f32 %v312, %v312
      %v389 = vmul.f32 %v317, %v317
      %v390 = vmul.f32 %v320, %v320
      %v391 = vmul.f32 %v325, %v325
      %v392 = vmul.f32 %v328, %v328
      %v393 = vmul.f32 %v333, %v333
      %v394 = vmul.f32 %v336, %v336
      %v395 = vmul.f32 %v341, %v341
      %v396 = vmul.f32 %v344, %v344
      %v397 = vmul.f32 %v349, %v349
      %v398 = vmul.f32 %v352, %v352
      %v399 = vmul.f32 %v357, %v357
      %v400 = vmul.f32 %v360, %v360
      %v401 = vadd.f32 %v385, %v386
      %v402 = vadd.f32 %v401, %v387
      %v403 = vadd.f32 %v402, %v388
      %v404 = vadd.f32 %v403, %v389
      %v405 = vadd.f32 %v404, %v390
      %v406 = vadd.f32 %v405, %v391
      %v407 = vadd.f32 %v406, %v392
      %v408 = vadd.f32 %v407, %v393
      %v409 = vadd.f32 %v408, %v394
      %v410 = vadd.f32 %v409, %v395
      %v411 = vadd.f32 %v410, %v396
      %v412 = vadd.f32 %v411, %v397
      %v413 = vadd.f32 %v412, %v398
      %v414 = vadd.f32 %v413, %v399
      %v415 = vadd.f32 %v414, %v400
      %v416 = vrot.slane %v415, 4
      %v417 = vadd.f32 %v415, %v416
      %v418 = vrot.slane %v417, 2
      %v419 = vadd.f32 %v417, %v418
      %v420 = vrot.slane %v419, 1
      %v421 = vadd.f32 %v419, %v420
      %vm422 = vcmask 1040384
      %v423 = vsel %vm422, %v384, %v421
      %v424 = vadd.f32 %v363, %v423
      %425 = vst [vmem:[%s3] sm:$0x3] %v424
      %426 = vst [vmem:[%s170] sm:$0xff] %v301
      %427 = vst [vmem:[%s170 + $0x8] sm:$0xff] %v304
      %428 = vst [vmem:[%s170 + $0x10] sm:$0xff] %v309
      %429 = vst [vmem:[%s170 + $0x18] sm:$0xff] %v312
      %430 = vst [vmem:[%s170 + $0x20] sm:$0xff] %v317
      %431 = vst [vmem:[%s170 + $0x28] sm:$0xff] %v320
      %432 = vst [vmem:[%s170 + $0x30] sm:$0xff] %v325
      %433 = vst [vmem:[%s170 + $0x38] sm:$0xff] %v328
      %434 = vst [vmem:[%s170 + $0x40] sm:$0xff] %v333
      %435 = vst [vmem:[%s170 + $0x48] sm:$0xff] %v336
      %436 = vst [vmem:[%s170 + $0x50] sm:$0xff] %v341
      %437 = vst [vmem:[%s170 + $0x58] sm:$0xff] %v344
      %438 = vst [vmem:[%s170 + $0x60] sm:$0xff] %v349
      %439 = vst [vmem:[%s170 + $0x68] sm:$0xff] %v352
      %440 = vst [vmem:[%s170 + $0x70] sm:$0xff] %v357
      %441 = vst [vmem:[%s170 + $0x78] sm:$0xff] %v360
      %s442 = smul.u32 16, %s15
      %p443 = scmp.lt.s32.totalorder %s442, 63
      %s444 = scalar_select %p443, %s442, 63
      %s445 = smul.addr %s444, 8
      %s446 = scalar_lea.vmem %s2, %s445
      // Predicated region
      $region33: #{bottleneck_forward.6} parent=27 // pred_check
        %p447 = pneg %p80
      $region34: #{bottleneck_forward.6} parent=27 // pred_check_branch
        %449 = sbr.rel (%p447) target = $region36
      $region35: #{bottleneck_forward.6} parent=27 // pred_region
        %s450 = smul.u32 16, %s15
      $region36: #{bottleneck_forward.6} parent=27 // pred_fallthru
        _
      // Predicated region
      $region37: #{bottleneck_forward.6} parent=27 // pred_check
        %p451 = pneg %p101
      $region38: #{bottleneck_forward.6} parent=27 // pred_check_branch
        %453 = sbr.rel (%p451) target = $region40
      $region39: #{bottleneck_forward.6} parent=27 // pred_region
        _
      $region40: #{bottleneck_forward.6} parent=27 // pred_fallthru
        _
      // Predicated region
      $region41: #{bottleneck_forward.6} parent=27 // pred_check
        %p454 = pneg %p101
      $region42: #{bottleneck_forward.6} parent=27 // pred_check_branch
        %456 = sbr.rel (%p454) target = $region44
      $region43: #{bottleneck_forward.6} parent=27 // pred_region
        _
      $region44: #{bottleneck_forward.6} parent=27 // pred_fallthru
        _
    $region28: #{bottleneck_forward.6} parent=5 // pred_fallthru
      _
    %p457 = scmp.le.s32.totalorder 2, %s10
    // Predicated region
    $region45: #{bottleneck_forward.6} parent=5 // pred_check
      %p458 = pneg %p457
    $region46: #{bottleneck_forward.6} parent=5 // pred_check_branch
      %460 = sbr.rel (%p458) target = $region48
    $region47: #{bottleneck_forward.6} parent=5 // pred_region
      %s461 = ssub.s32 %s10, 2
      // Predicated region
      $region49: #{bottleneck_forward.6} parent=47 // pred_check
        %p462 = pneg %p86
      $region50: #{bottleneck_forward.6} parent=47 // pred_check_branch
        %464 = sbr.rel (%p462) target = $region52
      $region51: #{bottleneck_forward.6} parent=47 // pred_region
        %s465 = smul.u32 16, %s16
        %p466 = scmp.lt.s32.totalorder %s465, 63
        %s467 = scalar_select %p466, %s465, 63
        %s468 = smul.addr %s467, 8
        %s469 = scalar_lea.vmem %s2, %s468
      $region52: #{bottleneck_forward.6} parent=47 // pred_fallthru
        _
    $region48: #{bottleneck_forward.6} parent=5 // pred_fallthru
      _
  $region6: #{bottleneck_forward.6} parent=0 // loop_footer
    %s14 = sadd.s32 1, %s10
  $region7: #{bottleneck_forward.6} parent=0 // loop_footer_branch
    %9 = sbr.rel target = $region3
  $region8: #{bottleneck_forward.6} parent=0 // loop_exit
    _

// kernel: bottleneck_forward.9
$region0: #{bottleneck_forward.9}
  #allocation0 [shape = 'u32[]', space=smem, size = 0x4, offset = 0x4, fixed_abs, tag = 'smem constant byte address 0x4 - core index']
  #allocation1 [shape = 'u32[144,128]{1,0:T(1,128)}', space=vmem, size = 0x12000, scoped, tag = 'internal scratch']
  %s0 = inlined_call_operand.vmem [shape: f32[128,128], index: 0, kind: input, shape index: {}]
  %s1 = inlined_call_operand.vmem [shape: bf16[128,128], index: 1, kind: input, shape index: {}]
  %s2 = inlined_call_operand.vmem [shape: f32[2,128], index: 2, kind: input, shape index: {}]
  %s3 = inlined_call_operand.vmem [shape: f32[1,128], index: 3, kind: input, shape index: {}]
  %s4 = inlined_call_operand.vmem [shape: f32[1,128], index: 4, kind: input, shape index: {}]
  %s5 = inlined_call_operand.vmem [shape: f32[128,128], index: 5, kind: output, shape index: {0}]
  %s6 = inlined_call_operand.vmem [shape: f32[2,128], index: 6, kind: output, shape index: {1}]
  %7 = xla_tuple %s5, %s6
  %s8 = sld [smem:[#allocation0]]
  $region42: #{bottleneck_forward.9} parent=0
    _
  %s10 = ssub.s32 1, %s8
  %s11 = scalar_select 0, %s10, %s8
  // Predicated region
  $region2: #{bottleneck_forward.9} parent=0 // pred_check
    _
  $region3: #{bottleneck_forward.9} parent=0 // pred_check_branch
    %13 = sbr.rel (0) target = $region5
  $region4: #{bottleneck_forward.9} parent=0 // pred_region
    _
  $region5: #{bottleneck_forward.9} parent=0 // pred_fallthru
    _
  // Predicated region
  $region6: #{bottleneck_forward.9} parent=0 // pred_check
    _
  $region7: #{bottleneck_forward.9} parent=0 // pred_check_branch
    %15 = sbr.rel (0) target = $region9
  $region8: #{bottleneck_forward.9} parent=0 // pred_region
    _
  $region9: #{bottleneck_forward.9} parent=0 // pred_fallthru
    _
  // Predicated region
  $region10: #{bottleneck_forward.9} parent=0 // pred_check
    _
  $region11: #{bottleneck_forward.9} parent=0 // pred_check_branch
    %17 = sbr.rel (0) target = $region13
  $region12: #{bottleneck_forward.9} parent=0 // pred_region
    _
  $region13: #{bottleneck_forward.9} parent=0 // pred_fallthru
    _
  // Predicated region
  $region14: #{bottleneck_forward.9} parent=0 // pred_check
    _
  $region15: #{bottleneck_forward.9} parent=0 // pred_check_branch
    %19 = sbr.rel (0) target = $region17
  $region16: #{bottleneck_forward.9} parent=0 // pred_region
    _
  $region17: #{bottleneck_forward.9} parent=0 // pred_fallthru
    _
  // Predicated region
  $region18: #{bottleneck_forward.9} parent=0 // pred_check
    _
  $region19: #{bottleneck_forward.9} parent=0 // pred_check_branch
    %21 = sbr.rel (0) target = $region21
  $region20: #{bottleneck_forward.9} parent=0 // pred_region
    _
  $region21: #{bottleneck_forward.9} parent=0 // pred_fallthru
    _
  %p23 = scmp.eq.s32.totalorder 0, 0
  // Predicated region
  $region22: #{bottleneck_forward.9} parent=0 // pred_check
    %p24 = pneg %p23
  $region23: #{bottleneck_forward.9} parent=0 // pred_check_branch
    %26 = sbr.rel (%p24) target = $region25
  $region24: #{bottleneck_forward.9} parent=0 // pred_region
    %27 = vst [vmem:[%s6] sm:$0x3] 0.0
  $region25: #{bottleneck_forward.9} parent=0 // pred_fallthru
    _
  %v28 = vld [vmem:[%s0] sm:$0xff]
  %v29 = vld [vmem:[%s0 + $0x8] sm:$0xff]
  %v30 = vld [vmem:[%s0 + $0x10] sm:$0xff]
  %v31 = vld [vmem:[%s0 + $0x18] sm:$0xff]
  %v32 = vld [vmem:[%s0 + $0x20] sm:$0xff]
  %v33 = vld [vmem:[%s0 + $0x28] sm:$0xff]
  %v34 = vld [vmem:[%s0 + $0x30] sm:$0xff]
  %v35 = vld [vmem:[%s0 + $0x38] sm:$0xff]
  %v36 = vld [vmem:[%s0 + $0x40] sm:$0xff]
  %v37 = vld [vmem:[%s0 + $0x48] sm:$0xff]
  %v38 = vld [vmem:[%s0 + $0x50] sm:$0xff]
  %v39 = vld [vmem:[%s0 + $0x58] sm:$0xff]
  %v40 = vld [vmem:[%s0 + $0x60] sm:$0xff]
  %v41 = vld [vmem:[%s0 + $0x68] sm:$0xff]
  %v42 = vld [vmem:[%s0 + $0x70] sm:$0xff]
  %v43 = vld [vmem:[%s0 + $0x78] sm:$0xff]
  %v44 = vld [vmem:[%s2] sm:$0x3]
  %v45 = vld [vmem:[%s3] sm:$0x1]
  %v46 = vld [vmem:[%s4] sm:$0x1]
  %v47 = vmul.f32 %v44, 0.0078125
  %v48 = vmul.f32 %v47, %v47
  %v50 = vrot.slane %v48, 7
  %v52 = vsub.f32 %v47, %v50
  %v53 = vmax.f32 %v52, 0.0
  %v54 = vadd.f32 %v53, 1e-05
  %v55 = vrsqrt.pop %v54
  %v58 = vunpack.c.l.s4 1966171168
  %v59 = vunpack.c.0.s8 %v58
  %v60 = vlaneseq
  %v61 = vshrl.u32 %v60, 7
  %v62 = vsub.s32 %v59, %v61
  %v63 = vrot.slane %v55, %v62
  %v64 = vcombine.high %v63, %v63
  %v66 = vunpack.c.l.s4 1966171168
  %v67 = vunpack.c.0.s8 %v66
  %v68 = vlaneseq
  %v69 = vshrl.u32 %v68, 7
  %v70 = vsub.s32 %v67, %v69
  %v71 = vrot.slane %v64, %v70
  %v73 = vmul.f32 %v45, %v71
  %v74 = vmul.f32 %v47, %v73
  %v75 = vsub.f32 %v46, %v74
  %v77 = vlaneseq
  %v78 = vshrl.u32 %v77, 7
  %v79 = vsub.s32 0, %v78
  %v80 = vrot.slane %v73, %v79
  %v82 = vmul.f32 %v28, %v80
  %v83 = vmul.f32 %v29, %v80
  %v84 = vmul.f32 %v30, %v80
  %v85 = vmul.f32 %v31, %v80
  %v86 = vmul.f32 %v32, %v80
  %v87 = vmul.f32 %v33, %v80
  %v88 = vmul.f32 %v34, %v80
  %v89 = vmul.f32 %v35, %v80
  %v90 = vmul.f32 %v36, %v80
  %v91 = vmul.f32 %v37, %v80
  %v92 = vmul.f32 %v38, %v80
  %v93 = vmul.f32 %v39, %v80
  %v94 = vmul.f32 %v40, %v80
  %v95 = vmul.f32 %v41, %v80
  %v96 = vmul.f32 %v42, %v80
  %v97 = vmul.f32 %v43, %v80
  %v99 = vlaneseq
  %v100 = vshrl.u32 %v99, 7
  %v101 = vsub.s32 0, %v100
  %v102 = vrot.slane %v75, %v101
  %v104 = vadd.f32 %v82, %v102
  %v105 = vadd.f32 %v83, %v102
  %v106 = vadd.f32 %v84, %v102
  %v107 = vadd.f32 %v85, %v102
  %v108 = vadd.f32 %v86, %v102
  %v109 = vadd.f32 %v87, %v102
  %v110 = vadd.f32 %v88, %v102
  %v111 = vadd.f32 %v89, %v102
  %v112 = vadd.f32 %v90, %v102
  %v113 = vadd.f32 %v91, %v102
  %v114 = vadd.f32 %v92, %v102
  %v115 = vadd.f32 %v93, %v102
  %v116 = vadd.f32 %v94, %v102
  %v117 = vadd.f32 %v95, %v102
  %v118 = vadd.f32 %v96, %v102
  %v119 = vadd.f32 %v97, %v102
  %v120 = vmax.f32 %v104, 0.0
  %v121 = vmax.f32 %v105, 0.0
  %v122 = vmax.f32 %v106, 0.0
  %v123 = vmax.f32 %v107, 0.0
  %v124 = vmax.f32 %v108, 0.0
  %v125 = vmax.f32 %v109, 0.0
  %v126 = vmax.f32 %v110, 0.0
  %v127 = vmax.f32 %v111, 0.0
  %v128 = vmax.f32 %v112, 0.0
  %v129 = vmax.f32 %v113, 0.0
  %v130 = vmax.f32 %v114, 0.0
  %v131 = vmax.f32 %v115, 0.0
  %v132 = vmax.f32 %v116, 0.0
  %v133 = vmax.f32 %v117, 0.0
  %v134 = vmax.f32 %v118, 0.0
  %v135 = vmax.f32 %v119, 0.0
  %v136 = vpack.c.bf16 %v121, %v120
  %v137 = vpack.c.bf16 %v123, %v122
  %v138 = vpack.c.bf16 %v125, %v124
  %v139 = vpack.c.bf16 %v127, %v126
  %v140 = vpack.c.bf16 %v129, %v128
  %v141 = vpack.c.bf16 %v131, %v130
  %v142 = vpack.c.bf16 %v133, %v132
  %v143 = vpack.c.bf16 %v135, %v134
  %v144 = vld [vmem:[%s1] sm:$0xf]
  %v145 = vld [vmem:[%s1 + $0x4] sm:$0xf]
  %v146 = vld [vmem:[%s1 + $0x8] sm:$0xf]
  %v147 = vld [vmem:[%s1 + $0xc] sm:$0xf]
  %v148 = vld [vmem:[%s1 + $0x10] sm:$0xf]
  %v149 = vld [vmem:[%s1 + $0x14] sm:$0xf]
  %v150 = vld [vmem:[%s1 + $0x18] sm:$0xf]
  %v151 = vld [vmem:[%s1 + $0x1c] sm:$0xf]
  %v152 = vld [vmem:[%s1 + $0x20] sm:$0xf]
  %v153 = vld [vmem:[%s1 + $0x24] sm:$0xf]
  %v154 = vld [vmem:[%s1 + $0x28] sm:$0xf]
  %v155 = vld [vmem:[%s1 + $0x2c] sm:$0xf]
  %v156 = vld [vmem:[%s1 + $0x30] sm:$0xf]
  %v157 = vld [vmem:[%s1 + $0x34] sm:$0xf]
  %v158 = vld [vmem:[%s1 + $0x38] sm:$0xf]
  %v159 = vld [vmem:[%s1 + $0x3c] sm:$0xf]
  %v176 = vunpack.c.l.b16 %v144
  %v177 = vunpack.c.l.b16 %v145
  %v178 = vunpack.c.l.b16 %v146
  %v179 = vunpack.c.l.b16 %v147
  %v180 = vunpack.c.l.b16 %v148
  %v181 = vunpack.c.l.b16 %v149
  %v182 = vunpack.c.l.b16 %v150
  %v183 = vunpack.c.l.b16 %v151
  %v184 = vunpack.c.l.b16 %v152
  %v185 = vunpack.c.l.b16 %v153
  %v186 = vunpack.c.l.b16 %v154
  %v187 = vunpack.c.l.b16 %v155
  %v188 = vunpack.c.l.b16 %v156
  %v189 = vunpack.c.l.b16 %v157
  %v190 = vunpack.c.l.b16 %v158
  %v191 = vunpack.c.l.b16 %v159
  %v192 = vpack.c.b16 %v177, %v176
  %v193 = vpack.c.b16 %v179, %v178
  %v194 = vpack.c.b16 %v181, %v180
  %v195 = vpack.c.b16 %v183, %v182
  %v196 = vpack.c.b16 %v185, %v184
  %v197 = vpack.c.b16 %v187, %v186
  %v198 = vpack.c.b16 %v189, %v188
  %v199 = vpack.c.b16 %v191, %v190
  %208 = vmatprep.subr.bf16.mxu0 0
  %209 = vmatpush1.bf16.msra.mxu0 %v192
  %210 = vmatprep.subr.bf16.mxu0 0
  %211 = vmatpush1.bf16.msra.mxu0 %v193
  %212 = vmatprep.subr.bf16.mxu0 0
  %213 = vmatpush1.bf16.msra.mxu0 %v194
  %214 = vmatprep.subr.bf16.mxu0 0
  %215 = vmatpush1.bf16.msra.mxu0 %v195
  %216 = vmatprep.subr.bf16.mxu0 0
  %217 = vmatpush1.bf16.msra.mxu0 %v196
  %218 = vmatprep.subr.bf16.mxu0 0
  %219 = vmatpush1.bf16.msra.mxu0 %v197
  %220 = vmatprep.subr.bf16.mxu0 0
  %221 = vmatpush1.bf16.msra.mxu0 %v198
  %222 = vmatprep.subr.bf16.mxu0 0
  %223 = vmatpush1.bf16.msra.mxu0 %v199
  %224 = vmatprep.subr.bf16.mxu0 0
  %225 = vmatpush1.bf16.msra.mxu0 0
  %226 = vmatprep.subr.bf16.mxu0 0
  %227 = vmatpush1.bf16.msra.mxu0 0
  %228 = vmatprep.subr.bf16.mxu0 0
  %229 = vmatpush1.bf16.msra.mxu0 0
  %230 = vmatprep.subr.bf16.mxu0 0
  %231 = vmatpush1.bf16.msra.mxu0 0
  %232 = vmatprep.subr.bf16.mxu0 0
  %233 = vmatpush1.bf16.msra.mxu0 0
  %234 = vmatprep.subr.bf16.mxu0 0
  %235 = vmatpush1.bf16.msra.mxu0 0
  %236 = vmatprep.subr.bf16.mxu0 0
  %237 = vmatpush1.bf16.msra.mxu0 0
  %238 = vmatprep.subr.bf16.mxu0 0
  %239 = vmatpush1.bf16.msra.mxu0 0
  %240 = vmatprep.mubr.bf16.mxu0 0
  %241 = vmatmul.mubr.bf16.gmra.mrb[0].mxu0 %v136
  %v242 = vpop.f32.mrb[0].mxu0
  %v243 = vadd.f32 0.0, %v242
  %v244 = vpop.f32.mrb[0].mxu0
  %v245 = vpop.f32.mrb[0].mxu0
  %v246 = vadd.f32 0.0, %v245
  %v247 = vpop.f32.mrb[0].mxu0
  %248 = vmatprep.mubr.bf16.mxu0 0
  %249 = vmatmul.mubr.bf16.gmra.mrb[0].mxu0 %v137
  %v250 = vpop.f32.mrb[0].mxu0
  %v251 = vadd.f32 0.0, %v250
  %v252 = vpop.f32.mrb[0].mxu0
  %v253 = vpop.f32.mrb[0].mxu0
  %v254 = vadd.f32 0.0, %v253
  %v255 = vpop.f32.mrb[0].mxu0
  %256 = vmatprep.mubr.bf16.mxu0 0
  %257 = vmatmul.mubr.bf16.gmra.mrb[0].mxu0 %v138
  %v258 = vpop.f32.mrb[0].mxu0
  %v259 = vadd.f32 0.0, %v258
  %v260 = vpop.f32.mrb[0].mxu0
  %v261 = vpop.f32.mrb[0].mxu0
  %v262 = vadd.f32 0.0, %v261
  %v263 = vpop.f32.mrb[0].mxu0
  %264 = vmatprep.mubr.bf16.mxu0 0
  %265 = vmatmul.mubr.bf16.gmra.mrb[0].mxu0 %v139
  %v266 = vpop.f32.mrb[0].mxu0
  %v267 = vadd.f32 0.0, %v266
  %v268 = vpop.f32.mrb[0].mxu0
  %v269 = vpop.f32.mrb[0].mxu0
  %v270 = vadd.f32 0.0, %v269
  %v271 = vpop.f32.mrb[0].mxu0
  %272 = vmatprep.mubr.bf16.mxu0 0
  %273 = vmatmul.mubr.bf16.gmra.mrb[0].mxu0 %v140
  %v274 = vpop.f32.mrb[0].mxu0
  %v275 = vadd.f32 0.0, %v274
  %v276 = vpop.f32.mrb[0].mxu0
  %v277 = vpop.f32.mrb[0].mxu0
  %v278 = vadd.f32 0.0, %v277
  %v279 = vpop.f32.mrb[0].mxu0
  %280 = vmatprep.mubr.bf16.mxu0 0
  %281 = vmatmul.mubr.bf16.gmra.mrb[0].mxu0 %v141
  %v282 = vpop.f32.mrb[0].mxu0
  %v283 = vadd.f32 0.0, %v282
  %v284 = vpop.f32.mrb[0].mxu0
  %v285 = vpop.f32.mrb[0].mxu0
  %v286 = vadd.f32 0.0, %v285
  %v287 = vpop.f32.mrb[0].mxu0
  %288 = vmatprep.mubr.bf16.mxu0 0
  %289 = vmatmul.mubr.bf16.gmra.mrb[0].mxu0 %v142
  %v290 = vpop.f32.mrb[0].mxu0
  %v291 = vadd.f32 0.0, %v290
  %v292 = vpop.f32.mrb[0].mxu0
  %v293 = vpop.f32.mrb[0].mxu0
  %v294 = vadd.f32 0.0, %v293
  %v295 = vpop.f32.mrb[0].mxu0
  %296 = vmatprep.mubr.bf16.mxu0 0
  %297 = vmatmul.mubr.bf16.gmra.mrb[0].mxu0 %v143
  %v298 = vpop.f32.mrb[0].mxu0
  %v299 = vadd.f32 0.0, %v298
  %v300 = vpop.f32.mrb[0].mxu0
  %v301 = vpop.f32.mrb[0].mxu0
  %v302 = vadd.f32 0.0, %v301
  %v303 = vpop.f32.mrb[0].mxu0
  %304 = vdwg.mxu0
  %v305 = vld [vmem:[%s6] sm:$0x3]
  %v306 = vadd.f32 %v243, %v246
  %v307 = vadd.f32 %v306, %v251
  %v308 = vadd.f32 %v307, %v254
  %v309 = vadd.f32 %v308, %v259
  %v310 = vadd.f32 %v309, %v262
  %v311 = vadd.f32 %v310, %v267
  %v312 = vadd.f32 %v311, %v270
  %v313 = vadd.f32 %v312, %v275
  %v314 = vadd.f32 %v313, %v278
  %v315 = vadd.f32 %v314, %v283
  %v316 = vadd.f32 %v315, %v286
  %v317 = vadd.f32 %v316, %v291
  %v318 = vadd.f32 %v317, %v294
  %v319 = vadd.f32 %v318, %v299
  %v320 = vadd.f32 %v319, %v302
  %v321 = vrot.slane %v320, 4
  %v322 = vadd.f32 %v320, %v321
  %v323 = vrot.slane %v322, 2
  %v324 = vadd.f32 %v322, %v323
  %v325 = vrot.slane %v324, 1
  %v326 = vadd.f32 %v324, %v325
  %v327 = vmul.f32 %v243, %v243
  %v328 = vmul.f32 %v246, %v246
  %v329 = vmul.f32 %v251, %v251
  %v330 = vmul.f32 %v254, %v254
  %v331 = vmul.f32 %v259, %v259
  %v332 = vmul.f32 %v262, %v262
  %v333 = vmul.f32 %v267, %v267
  %v334 = vmul.f32 %v270, %v270
  %v335 = vmul.f32 %v275, %v275
  %v336 = vmul.f32 %v278, %v278
  %v337 = vmul.f32 %v283, %v283
  %v338 = vmul.f32 %v286, %v286
  %v339 = vmul.f32 %v291, %v291
  %v340 = vmul.f32 %v294, %v294
  %v341 = vmul.f32 %v299, %v299
  %v342 = vmul.f32 %v302, %v302
  %v343 = vadd.f32 %v327, %v328
  %v344 = vadd.f32 %v343, %v329
  %v345 = vadd.f32 %v344, %v330
  %v346 = vadd.f32 %v345, %v331
  %v347 = vadd.f32 %v346, %v332
  %v348 = vadd.f32 %v347, %v333
  %v349 = vadd.f32 %v348, %v334
  %v350 = vadd.f32 %v349, %v335
  %v351 = vadd.f32 %v350, %v336
  %v352 = vadd.f32 %v351, %v337
  %v353 = vadd.f32 %v352, %v338
  %v354 = vadd.f32 %v353, %v339
  %v355 = vadd.f32 %v354, %v340
  %v356 = vadd.f32 %v355, %v341
  %v357 = vadd.f32 %v356, %v342
  %v358 = vrot.slane %v357, 4
  %v359 = vadd.f32 %v357, %v358
  %v360 = vrot.slane %v359, 2
  %v361 = vadd.f32 %v359, %v360
  %v362 = vrot.slane %v361, 1
  %v363 = vadd.f32 %v361, %v362
  %vm364 = vcmask 1040384
  %v365 = vsel %vm364, %v326, %v363
  %v366 = vadd.f32 %v305, %v365
  %367 = vst [vmem:[%s6] sm:$0x3] %v366
  %368 = vst [vmem:[%s5] sm:$0xff] %v243
  %369 = vst [vmem:[%s5 + $0x8] sm:$0xff] %v246
  %370 = vst [vmem:[%s5 + $0x10] sm:$0xff] %v251
  %371 = vst [vmem:[%s5 + $0x18] sm:$0xff] %v254
  %372 = vst [vmem:[%s5 + $0x20] sm:$0xff] %v259
  %373 = vst [vmem:[%s5 + $0x28] sm:$0xff] %v262
  %374 = vst [vmem:[%s5 + $0x30] sm:$0xff] %v267
  %375 = vst [vmem:[%s5 + $0x38] sm:$0xff] %v270
  %376 = vst [vmem:[%s5 + $0x40] sm:$0xff] %v275
  %377 = vst [vmem:[%s5 + $0x48] sm:$0xff] %v278
  %378 = vst [vmem:[%s5 + $0x50] sm:$0xff] %v283
  %379 = vst [vmem:[%s5 + $0x58] sm:$0xff] %v286
  %380 = vst [vmem:[%s5 + $0x60] sm:$0xff] %v291
  %381 = vst [vmem:[%s5 + $0x68] sm:$0xff] %v294
  %382 = vst [vmem:[%s5 + $0x70] sm:$0xff] %v299
  %383 = vst [vmem:[%s5 + $0x78] sm:$0xff] %v302
  // Predicated region
  $region26: #{bottleneck_forward.9} parent=0 // pred_check
    _
  $region27: #{bottleneck_forward.9} parent=0 // pred_check_branch
    %385 = sbr.rel (0) target = $region29
  $region28: #{bottleneck_forward.9} parent=0 // pred_region
    _
  $region29: #{bottleneck_forward.9} parent=0 // pred_fallthru
    _
  // Predicated region
  $region30: #{bottleneck_forward.9} parent=0 // pred_check
    _
  $region31: #{bottleneck_forward.9} parent=0 // pred_check_branch
    %387 = sbr.rel (0) target = $region33
  $region32: #{bottleneck_forward.9} parent=0 // pred_region
    _
  $region33: #{bottleneck_forward.9} parent=0 // pred_fallthru
    _
  // Predicated region
  $region34: #{bottleneck_forward.9} parent=0 // pred_check
    _
  $region35: #{bottleneck_forward.9} parent=0 // pred_check_branch
    %389 = sbr.rel (0) target = $region37
  $region36: #{bottleneck_forward.9} parent=0 // pred_region
    _
  $region37: #{bottleneck_forward.9} parent=0 // pred_fallthru
    _
  // Predicated region
  $region38: #{bottleneck_forward.9} parent=0 // pred_check
    _
  $region39: #{bottleneck_forward.9} parent=0 // pred_check_branch
    %391 = sbr.rel (0) target = $region41
  $region40: #{bottleneck_forward.9} parent=0 // pred_region
    _
  $region41: #{bottleneck_forward.9} parent=0 // pred_fallthru
    _

// kernel: bottleneck_forward.8
$region0: #{bottleneck_forward.8}
  #allocation0 [shape = 'u32[]', space=smem, size = 0x4, offset = 0x4, fixed_abs, tag = 'smem constant byte address 0x4 - core index']
  #allocation1 [shape = 'u32[144,128]{1,0:T(1,128)}', space=vmem, size = 0x12000, scoped, tag = 'internal scratch']
  %s0 = inlined_call_operand.vmem [shape: f32[2,9,8,768], index: 0, kind: input, shape index: {}]
  %s1 = inlined_call_operand.vmem [shape: bf16[3,384,128], index: 1, kind: input, shape index: {}]
  %s2 = inlined_call_operand.vmem [shape: f32[2,8,8,128], index: 2, kind: output, shape index: {0}]
  %s3 = inlined_call_operand.vmem [shape: f32[2,128], index: 3, kind: output, shape index: {1}]
  %4 = xla_tuple %s2, %s3
  %s5 = sld [smem:[#allocation0]]
  $region53: #{bottleneck_forward.8} parent=0
    _
  %s7 = ssub.s32 1, %s5
  %s8 = scalar_select 0, %s7, %s5
  loop: start=0, step=1, limit=4
  $region2: #{bottleneck_forward.8} parent=0 // loop_pre_header
    _
  $region3: #{bottleneck_forward.8} parent=0 // loop_header
    %s10 = sphi 0, %s14
    %p11 = scmp.ge.s32.totalorder %s10, 4
    %s20 = sphi 0, %s22
    %s23 = sphi 0, %s20
    %s24 = sphi 0, %s23
    %s40 = sphi 0, %s24
    %s44 = sphi 0, %s44
    %s46 = sphi 0, %s44
    %s47 = sphi 0, %s46
    %s61 = sphi 0, %s47
    %s67 = sphi 0, %s69
    %s70 = sphi 0, %s67
    %s71 = sphi 0, %s70
    %s87 = sphi 0, %s71
    %s91 = sphi 0, %s91
    %s93 = sphi 0, %s91
    %s94 = sphi 0, %s93
    %s108 = sphi 0, %s94
  $region4: #{bottleneck_forward.8} parent=0 // loop_header_branch
    %13 = sbr.rel (%p11) target = $region8
  $region5: #{bottleneck_forward.8} parent=0 // loop_body
    %s15 = ssub.s32 %s10, 1
    %s16 = ssub.s32 %s10, 2
    %s17 = sadd.s32 %s10, 1
    %s18 = ssub.s32 %s10, %s17
    %p19 = scmp.eq.s32.totalorder %s18, 0
    %s21 = sadd.s32 %s20, 1
    %s22 = scalar_select %p19, %s20, %s21
    %p25 = pneg %p19
    %p26 = scmp.eq.s32.totalorder %s10, 1
    %p27 = por %p25, %p26
    %p28 = scmp.ne.s32.totalorder %s20, %s23
    %p29 = scmp.eq.s32.totalorder %s10, 0
    %p30 = por %p28, %p29
    %p31 = scmp.ne.s32.totalorder %s20, %s23
    %p32 = scmp.eq.s32.totalorder %s15, 1
    %p33 = por %p31, %p32
    %p34 = scmp.ne.s32.totalorder %s23, %s24
    %p35 = scmp.eq.s32.totalorder %s15, 0
    %p36 = por %p34, %p35
    %p37 = scmp.ne.s32.totalorder %s23, %s24
    %p38 = scmp.eq.s32.totalorder %s16, 1
    %p39 = por %p37, %p38
    %p41 = scmp.ne.s32.totalorder %s24, %s40
    %p42 = scmp.eq.s32.totalorder %s16, 0
    %p43 = por %p41, %p42
    %s45 = sadd.s32 %s44, 1
    %p48 = scmp.eq.s32.totalorder %s10, 1
    %p49 = scmp.ne.s32.totalorder %s44, %s46
    %p50 = scmp.eq.s32.totalorder %s10, 0
    %p51 = por %p49, %p50
    %p52 = scmp.ne.s32.totalorder %s44, %s46
    %p53 = scmp.eq.s32.totalorder %s15, 1
    %p54 = por %p52, %p53
    %p55 = scmp.ne.s32.totalorder %s46, %s47
    %p56 = scmp.eq.s32.totalorder %s15, 0
    %p57 = por %p55, %p56
    %p58 = scmp.ne.s32.totalorder %s46, %s47
    %p59 = scmp.eq.s32.totalorder %s16, 1
    %p60 = por %p58, %p59
    %p62 = scmp.ne.s32.totalorder %s47, %s61
    %p63 = scmp.eq.s32.totalorder %s16, 0
    %p64 = por %p62, %p63
    %s65 = ssub.s32 %s10, %s17
    %p66 = scmp.eq.s32.totalorder %s65, 0
    %s68 = sadd.s32 %s67, 1
    %s69 = scalar_select %p66, %s67, %s68
    %p72 = pneg %p66
    %p73 = scmp.eq.s32.totalorder %s10, 1
    %p74 = por %p72, %p73
    %p75 = scmp.ne.s32.totalorder %s67, %s70
    %p76 = scmp.eq.s32.totalorder %s10, 0
    %p77 = por %p75, %p76
    %p78 = scmp.ne.s32.totalorder %s67, %s70
    %p79 = scmp.eq.s32.totalorder %s15, 1
    %p80 = por %p78, %p79
    %p81 = scmp.ne.s32.totalorder %s70, %s71
    %p82 = scmp.eq.s32.totalorder %s15, 0
    %p83 = por %p81, %p82
    %p84 = scmp.ne.s32.totalorder %s70, %s71
    %p85 = scmp.eq.s32.totalorder %s16, 1
    %p86 = por %p84, %p85
    %p88 = scmp.ne.s32.totalorder %s71, %s87
    %p89 = scmp.eq.s32.totalorder %s16, 0
    %p90 = por %p88, %p89
    %s92 = sadd.s32 %s91, 1
    %p95 = scmp.eq.s32.totalorder %s10, 1
    %p96 = scmp.ne.s32.totalorder %s91, %s93
    %p97 = scmp.eq.s32.totalorder %s10, 0
    %p98 = por %p96, %p97
    %p99 = scmp.ne.s32.totalorder %s91, %s93
    %p100 = scmp.eq.s32.totalorder %s15, 1
    %p101 = por %p99, %p100
    %p102 = scmp.ne.s32.totalorder %s93, %s94
    %p103 = scmp.eq.s32.totalorder %s15, 0
    %p104 = por %p102, %p103
    %p105 = scmp.ne.s32.totalorder %s93, %s94
    %p106 = scmp.eq.s32.totalorder %s16, 1
    %p107 = por %p105, %p106
    %p109 = scmp.ne.s32.totalorder %s94, %s108
    %p110 = scmp.eq.s32.totalorder %s16, 0
    %p111 = por %p109, %p110
    %p112 = scmp.le.s32.totalorder 1, %s10
    %p113 = scmp.lt.s32.totalorder %s10, 3
    %p114 = pnand %p112, %p113
    %p115 = pneg %p114
    // Predicated region
    $region9: #{bottleneck_forward.8} parent=5 // pred_check
      _
    $region10: #{bottleneck_forward.8} parent=5 // pred_check_branch
      %117 = sbr.rel (%p114) target = $region12
    $region11: #{bottleneck_forward.8} parent=5 // pred_region
      %s118 = ssub.s32 %s10, 1
      // Predicated region
      $region13: #{bottleneck_forward.8} parent=11 // pred_check
        %p119 = pneg %p57
      $region14: #{bottleneck_forward.8} parent=11 // pred_check_branch
        %121 = sbr.rel (%p119) target = $region16
      $region15: #{bottleneck_forward.8} parent=11 // pred_region
        _
      $region16: #{bottleneck_forward.8} parent=11 // pred_fallthru
        _
    $region12: #{bottleneck_forward.8} parent=5 // pred_fallthru
      _
    %p122 = scmp.lt.s32.totalorder %s10, 2
    // Predicated region
    $region17: #{bottleneck_forward.8} parent=5 // pred_check
      %p123 = pneg %p122
    $region18: #{bottleneck_forward.8} parent=5 // pred_check_branch
      %125 = sbr.rel (%p123) target = $region20
    $region19: #{bottleneck_forward.8} parent=5 // pred_region
      // Predicated region
      $region21: #{bottleneck_forward.8} parent=19 // pred_check
        %p126 = pneg %p30
      $region22: #{bottleneck_forward.8} parent=19 // pred_check_branch
        %128 = sbr.rel (%p126) target = $region24
      $region23: #{bottleneck_forward.8} parent=19 // pred_region
        %p129 = scmp.lt.s32.totalorder %s10, 1
        %s130 = scalar_select %p129, %s10, 1
        %s131 = smul.addr %s130, 54
        %s132 = smul.addr %s131, 8
        %s133 = scalar_lea.vmem %s0, %s132
      $region24: #{bottleneck_forward.8} parent=19 // pred_fallthru
        _
    $region20: #{bottleneck_forward.8} parent=5 // pred_fallthru
      _
    %p134 = scmp.le.s32.totalorder 1, %s10
    %p135 = scmp.lt.s32.totalorder %s10, 3
    %p136 = pnand %p134, %p135
    %p137 = pneg %p136
    // Predicated region
    $region25: #{bottleneck_forward.8} parent=5 // pred_check
      _
    $region26: #{bottleneck_forward.8} parent=5 // pred_check_branch
      %139 = sbr.rel (%p136) target = $region28
    $region27: #{bottleneck_forward.8} parent=5 // pred_region
      %s140 = ssub.s32 %s10, 1
      %p141 = scmp.lt.s32.totalorder %s15, 1
      %s142 = scalar_select %p141, %s15, 1
      %s143 = smul.addr %s142, 54
      %s144 = smul.addr %s143, 8
      %s145 = scalar_lea.vmem %s0, %s144
      %p146 = pneg %p36
      %p147 = pneg %p33
      %p148 = pneg %p57
      %p149 = pneg %p54
      %p150 = pneg %p83
      %p151 = pneg %p80
      %p152 = scmp.lt.s32.totalorder %s15, 1
      %s153 = scalar_select %p152, %s15, 1
      %s154 = smul.addr %s153, 8
      %s155 = smul.addr %s154, 8
      %s156 = scalar_lea.vmem %s2, %s155
      %p157 = pneg %p104
      %p158 = pneg %p101
      %p159 = scmp.lt.s32.totalorder %s15, 1
      %s160 = scalar_select %p159, %s15, 1
      %s161 = smul.addr %s160, 54
      %s162 = smul.addr %s161, 8
      %s163 = scalar_lea.vmem %s0, %s162
      %p164 = scmp.lt.s32.totalorder %s15, 1
      %s165 = scalar_select %p164, %s15, 1
      %s166 = smul.addr %s165, 8
      %s167 = smul.addr %s166, 8
      %s168 = scalar_lea.vmem %s2, %s167
      %p170 = scmp.eq.s32.totalorder %s15, 0
      // Predicated region
      $region29: #{bottleneck_forward.8} parent=27 // pred_check
        %p171 = pneg %p170
      $region30: #{bottleneck_forward.8} parent=27 // pred_check_branch
        %173 = sbr.rel (%p171) target = $region32
      $region31: #{bottleneck_forward.8} parent=27 // pred_region
        %174 = vst [vmem:[%s3] sm:$0x3] 0.0
      $region32: #{bottleneck_forward.8} parent=27 // pred_fallthru
        _
      %v175 = vld [vmem:[%s163] sm:$0xff]
      %v176 = vld [vmem:[%s163 + $0x8] sm:$0xff]
      %v177 = vld [vmem:[%s163 + $0x10] sm:$0xff]
      %v178 = vld [vmem:[%s163 + $0x30] sm:$0xff]
      %v179 = vld [vmem:[%s163 + $0x38] sm:$0xff]
      %v180 = vld [vmem:[%s163 + $0x40] sm:$0xff]
      %v181 = vld [vmem:[%s163 + $0x60] sm:$0xff]
      %v182 = vld [vmem:[%s163 + $0x68] sm:$0xff]
      %v183 = vld [vmem:[%s163 + $0x70] sm:$0xff]
      %v184 = vld [vmem:[%s163 + $0x90] sm:$0xff]
      %v185 = vld [vmem:[%s163 + $0x98] sm:$0xff]
      %v186 = vld [vmem:[%s163 + $0xa0] sm:$0xff]
      %v187 = vld [vmem:[%s163 + $0xc0] sm:$0xff]
      %v188 = vld [vmem:[%s163 + $0xc8] sm:$0xff]
      %v189 = vld [vmem:[%s163 + $0xd0] sm:$0xff]
      %v190 = vld [vmem:[%s163 + $0xf0] sm:$0xff]
      %v191 = vld [vmem:[%s163 + $0xf8] sm:$0xff]
      %v192 = vld [vmem:[%s163 + $0x100] sm:$0xff]
      %v193 = vld [vmem:[%s163 + $0x120] sm:$0xff]
      %v194 = vld [vmem:[%s163 + $0x128] sm:$0xff]
      %v195 = vld [vmem:[%s163 + $0x130] sm:$0xff]
      %v196 = vld [vmem:[%s163 + $0x150] sm:$0xff]
      %v197 = vld [vmem:[%s163 + $0x158] sm:$0xff]
      %v198 = vld [vmem:[%s163 + $0x160] sm:$0xff]
      %v199 = vpack.c.bf16 %v178, %v175
      %v200 = vpack.c.bf16 %v179, %v176
      %v201 = vpack.c.bf16 %v180, %v177
      %v202 = vpack.c.bf16 %v184, %v181
      %v203 = vpack.c.bf16 %v185, %v182
      %v204 = vpack.c.bf16 %v186, %v183
      %v205 = vpack.c.bf16 %v190, %v187
      %v206 = vpack.c.bf16 %v191, %v188
      %v207 = vpack.c.bf16 %v192, %v189
      %v208 = vpack.c.bf16 %v196, %v193
      %v209 = vpack.c.bf16 %v197, %v194
      %v210 = vpack.c.bf16 %v198, %v195
      %v211 = vld [vmem:[%s1] sm:$0xf]
      %v212 = vld [vmem:[%s1 + $0x4] sm:$0xf]
      %v213 = vld [vmem:[%s1 + $0x8] sm:$0xf]
      %v214 = vld [vmem:[%s1 + $0xc] sm:$0xf]
      %v215 = vld [vmem:[%s1 + $0x10] sm:$0xf]
      %v216 = vld [vmem:[%s1 + $0x14] sm:$0xf]
      %v217 = vld [vmem:[%s1 + $0x18] sm:$0xf]
      %v218 = vld [vmem:[%s1 + $0x1c] sm:$0xf]
      %v219 = vld [vmem:[%s1 + $0x20] sm:$0xf]
      %v220 = vld [vmem:[%s1 + $0x24] sm:$0xf]
      %v221 = vld [vmem:[%s1 + $0x28] sm:$0xf]
      %v222 = vld [vmem:[%s1 + $0x2c] sm:$0xf]
      %v223 = vld [vmem:[%s1 + $0x30] sm:$0xf]
      %v224 = vld [vmem:[%s1 + $0x34] sm:$0xf]
      %v225 = vld [vmem:[%s1 + $0x38] sm:$0xf]
      %v226 = vld [vmem:[%s1 + $0x3c] sm:$0xf]
      %v227 = vld [vmem:[%s1 + $0x40] sm:$0xf]
      %v228 = vld [vmem:[%s1 + $0x44] sm:$0xf]
      %v229 = vld [vmem:[%s1 + $0x48] sm:$0xf]
      %v230 = vld [vmem:[%s1 + $0x4c] sm:$0xf]
      %v231 = vld [vmem:[%s1 + $0x50] sm:$0xf]
      %v232 = vld [vmem:[%s1 + $0x54] sm:$0xf]
      %v233 = vld [vmem:[%s1 + $0x58] sm:$0xf]
      %v234 = vld [vmem:[%s1 + $0x5c] sm:$0xf]
      %v235 = vld [vmem:[%s1 + $0x60] sm:$0xf]
      %v236 = vld [vmem:[%s1 + $0x64] sm:$0xf]
      %v237 = vld [vmem:[%s1 + $0x68] sm:$0xf]
      %v238 = vld [vmem:[%s1 + $0x6c] sm:$0xf]
      %v239 = vld [vmem:[%s1 + $0x70] sm:$0xf]
      %v240 = vld [vmem:[%s1 + $0x74] sm:$0xf]
      %v241 = vld [vmem:[%s1 + $0x78] sm:$0xf]
      %v242 = vld [vmem:[%s1 + $0x7c] sm:$0xf]
      %v243 = vld [vmem:[%s1 + $0x80] sm:$0xf]
      %v244 = vld [vmem:[%s1 + $0x84] sm:$0xf]
      %v245 = vld [vmem:[%s1 + $0x88] sm:$0xf]
      %v246 = vld [vmem:[%s1 + $0x8c] sm:$0xf]
      %v247 = vld [vmem:[%s1 + $0x90] sm:$0xf]
      %v248 = vld [vmem:[%s1 + $0x94] sm:$0xf]
      %v249 = vld [vmem:[%s1 + $0x98] sm:$0xf]
      %v250 = vld [vmem:[%s1 + $0x9c] sm:$0xf]
      %v251 = vld [vmem:[%s1 + $0xa0] sm:$0xf]
      %v252 = vld [vmem:[%s1 + $0xa4] sm:$0xf]
      %v253 = vld [vmem:[%s1 + $0xa8] sm:$0xf]
      %v254 = vld [vmem:[%s1 + $0xac] sm:$0xf]
      %v255 = vld [vmem:[%s1 + $0xb0] sm:$0xf]
      %v256 = vld [vmem:[%s1 + $0xb4] sm:$0xf]
      %v257 = vld [vmem:[%s1 + $0xb8] sm:$0xf]
      %v258 = vld [vmem:[%s1 + $0xbc] sm:$0xf]
      %v259 = vld [vmem:[%s163 + $0x18] sm:$0xff]
      %v260 = vld [vmem:[%s163 + $0x20] sm:$0xff]
      %v261 = vld [vmem:[%s163 + $0x28] sm:$0xff]
      %v262 = vld [vmem:[%s163 + $0x48] sm:$0xff]
      %v263 = vld [vmem:[%s163 + $0x50] sm:$0xff]
      %v264 = vld [vmem:[%s163 + $0x58] sm:$0xff]
      %v265 = vld [vmem:[%s163 + $0x78] sm:$0xff]
      %v266 = vld [vmem:[%s163 + $0x80] sm:$0xff]
      %v267 = vld [vmem:[%s163 + $0x88] sm:$0xff]
      %v268 = vld [vmem:[%s163 + $0xa8] sm:$0xff]
      %v269 = vld [vmem:[%s163 + $0xb0] sm:$0xff]
      %v270 = vld [vmem:[%s163 + $0xb8] sm:$0xff]
      %v271 = vld [vmem:[%s163 + $0xd8] sm:$0xff]
      %v272 = vld [vmem:[%s163 + $0xe0] sm:$0xff]
      %v273 = vld [vmem:[%s163 + $0xe8] sm:$0xff]
      %v274 = vld [vmem:[%s163 + $0x108] sm:$0xff]
      %v275 = vld [vmem:[%s163 + $0x110] sm:$0xff]
      %v276 = vld [vmem:[%s163 + $0x118] sm:$0xff]
      %v277 = vld [vmem:[%s163 + $0x138] sm:$0xff]
      %v278 = vld [vmem:[%s163 + $0x140] sm:$0xff]
      %v279 = vld [vmem:[%s163 + $0x148] sm:$0xff]
      %v280 = vld [vmem:[%s163 + $0x168] sm:$0xff]
      %v281 = vld [vmem:[%s163 + $0x170] sm:$0xff]
      %v282 = vld [vmem:[%s163 + $0x178] sm:$0xff]
      %v283 = vpack.c.bf16 %v262, %v259
      %v284 = vpack.c.bf16 %v263, %v260
      %v285 = vpack.c.bf16 %v264, %v261
      %v286 = vpack.c.bf16 %v268, %v265
      %v287 = vpack.c.bf16 %v269, %v266
      %v288 = vpack.c.bf16 %v270, %v267
      %v289 = vpack.c.bf16 %v274, %v271
      %v290 = vpack.c.bf16 %v275, %v272
      %v291 = vpack.c.bf16 %v276, %v273
      %v292 = vpack.c.bf16 %v280, %v277
      %v293 = vpack.c.bf16 %v281, %v278
      %v294 = vpack.c.bf16 %v282, %v279
      %s295 = scalar_lea.vmem %s1, 192
      %v296 = vld [vmem:[%s295] sm:$0xf]
      %v297 = vld [vmem:[%s295 + $0x4] sm:$0xf]
      %v298 = vld [vmem:[%s295 + $0x8] sm:$0xf]
      %v299 = vld [vmem:[%s295 + $0xc] sm:$0xf]
      %v300 = vld [vmem:[%s295 + $0x10] sm:$0xf]
      %v301 = vld [vmem:[%s295 + $0x14] sm:$0xf]
      %v302 = vld [vmem:[%s295 + $0x18] sm:$0xf]
      %v303 = vld [vmem:[%s295 + $0x1c] sm:$0xf]
      %v304 = vld [vmem:[%s295 + $0x20] sm:$0xf]
      %v305 = vld [vmem:[%s295 + $0x24] sm:$0xf]
      %v306 = vld [vmem:[%s295 + $0x28] sm:$0xf]
      %v307 = vld [vmem:[%s295 + $0x2c] sm:$0xf]
      %v308 = vld [vmem:[%s295 + $0x30] sm:$0xf]
      %v309 = vld [vmem:[%s295 + $0x34] sm:$0xf]
      %v310 = vld [vmem:[%s295 + $0x38] sm:$0xf]
      %v311 = vld [vmem:[%s295 + $0x3c] sm:$0xf]
      %v312 = vld [vmem:[%s295 + $0x40] sm:$0xf]
      %v313 = vld [vmem:[%s295 + $0x44] sm:$0xf]
      %v314 = vld [vmem:[%s295 + $0x48] sm:$0xf]
      %v315 = vld [vmem:[%s295 + $0x4c] sm:$0xf]
      %v316 = vld [vmem:[%s295 + $0x50] sm:$0xf]
      %v317 = vld [vmem:[%s295 + $0x54] sm:$0xf]
      %v318 = vld [vmem:[%s295 + $0x58] sm:$0xf]
      %v319 = vld [vmem:[%s295 + $0x5c] sm:$0xf]
      %v320 = vld [vmem:[%s295 + $0x60] sm:$0xf]
      %v321 = vld [vmem:[%s295 + $0x64] sm:$0xf]
      %v322 = vld [vmem:[%s295 + $0x68] sm:$0xf]
      %v323 = vld [vmem:[%s295 + $0x6c] sm:$0xf]
      %v324 = vld [vmem:[%s295 + $0x70] sm:$0xf]
      %v325 = vld [vmem:[%s295 + $0x74] sm:$0xf]
      %v326 = vld [vmem:[%s295 + $0x78] sm:$0xf]
      %v327 = vld [vmem:[%s295 + $0x7c] sm:$0xf]
      %v328 = vld [vmem:[%s295 + $0x80] sm:$0xf]
      %v329 = vld [vmem:[%s295 + $0x84] sm:$0xf]
      %v330 = vld [vmem:[%s295 + $0x88] sm:$0xf]
      %v331 = vld [vmem:[%s295 + $0x8c] sm:$0xf]
      %v332 = vld [vmem:[%s295 + $0x90] sm:$0xf]
      %v333 = vld [vmem:[%s295 + $0x94] sm:$0xf]
      %v334 = vld [vmem:[%s295 + $0x98] sm:$0xf]
      %v335 = vld [vmem:[%s295 + $0x9c] sm:$0xf]
      %v336 = vld [vmem:[%s295 + $0xa0] sm:$0xf]
      %v337 = vld [vmem:[%s295 + $0xa4] sm:$0xf]
      %v338 = vld [vmem:[%s295 + $0xa8] sm:$0xf]
      %v339 = vld [vmem:[%s295 + $0xac] sm:$0xf]
      %v340 = vld [vmem:[%s295 + $0xb0] sm:$0xf]
      %v341 = vld [vmem:[%s295 + $0xb4] sm:$0xf]
      %v342 = vld [vmem:[%s295 + $0xb8] sm:$0xf]
      %v343 = vld [vmem:[%s295 + $0xbc] sm:$0xf]
      %v392 = vunpack.c.l.b16 %v296
      %v393 = vunpack.c.l.b16 %v297
      %v394 = vunpack.c.l.b16 %v298
      %v395 = vunpack.c.l.b16 %v299
      %v396 = vunpack.c.l.b16 %v300
      %v397 = vunpack.c.l.b16 %v301
      %v398 = vunpack.c.l.b16 %v302
      %v399 = vunpack.c.l.b16 %v303
      %v400 = vunpack.c.l.b16 %v304
      %v401 = vunpack.c.l.b16 %v305
      %v402 = vunpack.c.l.b16 %v306
      %v403 = vunpack.c.l.b16 %v307
      %v404 = vunpack.c.l.b16 %v308
      %v405 = vunpack.c.l.b16 %v309
      %v406 = vunpack.c.l.b16 %v310
      %v407 = vunpack.c.l.b16 %v311
      %v408 = vunpack.c.l.b16 %v312
      %v409 = vunpack.c.l.b16 %v313
      %v410 = vunpack.c.l.b16 %v314
      %v411 = vunpack.c.l.b16 %v315
      %v412 = vunpack.c.l.b16 %v316
      %v413 = vunpack.c.l.b16 %v317
      %v414 = vunpack.c.l.b16 %v318
      %v415 = vunpack.c.l.b16 %v319
      %v416 = vunpack.c.l.b16 %v320
      %v417 = vunpack.c.l.b16 %v321
      %v418 = vunpack.c.l.b16 %v322
      %v419 = vunpack.c.l.b16 %v323
      %v420 = vunpack.c.l.b16 %v324
      %v421 = vunpack.c.l.b16 %v325
      %v422 = vunpack.c.l.b16 %v326
      %v423 = vunpack.c.l.b16 %v327
      %v424 = vunpack.c.l.b16 %v328
      %v425 = vunpack.c.l.b16 %v329
      %v426 = vunpack.c.l.b16 %v330
      %v427 = vunpack.c.l.b16 %v331
      %v428 = vunpack.c.l.b16 %v332
      %v429 = vunpack.c.l.b16 %v333
      %v430 = vunpack.c.l.b16 %v334
      %v431 = vunpack.c.l.b16 %v335
      %v432 = vunpack.c.l.b16 %v336
      %v433 = vunpack.c.l.b16 %v337
      %v434 = vunpack.c.l.b16 %v338
      %v435 = vunpack.c.l.b16 %v339
      %v436 = vunpack.c.l.b16 %v340
      %v437 = vunpack.c.l.b16 %v341
      %v438 = vunpack.c.l.b16 %v342
      %v439 = vunpack.c.l.b16 %v343
      %v440 = vpack.c.b16 %v393, %v392
      %v441 = vpack.c.b16 %v395, %v394
      %v442 = vpack.c.b16 %v397, %v396
      %v443 = vpack.c.b16 %v399, %v398
      %v444 = vpack.c.b16 %v401, %v400
      %v445 = vpack.c.b16 %v403, %v402
      %v446 = vpack.c.b16 %v405, %v404
      %v447 = vpack.c.b16 %v407, %v406
      %v448 = vpack.c.b16 %v409, %v408
      %v449 = vpack.c.b16 %v411, %v410
      %v450 = vpack.c.b16 %v413, %v412
      %v451 = vpack.c.b16 %v415, %v414
      %v452 = vpack.c.b16 %v417, %v416
      %v453 = vpack.c.b16 %v419, %v418
      %v454 = vpack.c.b16 %v421, %v420
      %v455 = vpack.c.b16 %v423, %v422
      %v456 = vpack.c.b16 %v425, %v424
      %v457 = vpack.c.b16 %v427, %v426
      %v458 = vpack.c.b16 %v429, %v428
      %v459 = vpack.c.b16 %v431, %v430
      %v460 = vpack.c.b16 %v433, %v432
      %v461 = vpack.c.b16 %v435, %v434
      %v462 = vpack.c.b16 %v437, %v436
      %v463 = vpack.c.b16 %v439, %v438
      %488 = vmatprep.subr.bf16.mxu0 0
      %489 = vmatpush1.bf16.msra.mxu0 %v440
      %490 = vmatprep.subr.bf16.mxu0 0
      %491 = vmatpush1.bf16.msra.mxu0 %v441
      %492 = vmatprep.subr.bf16.mxu0 0
      %493 = vmatpush1.bf16.msra.mxu0 %v442
      %494 = vmatprep.subr.bf16.mxu0 0
      %495 = vmatpush1.bf16.msra.mxu0 %v443
      %496 = vmatprep.subr.bf16.mxu0 0
      %497 = vmatpush1.bf16.msra.mxu0 %v444
      %498 = vmatprep.subr.bf16.mxu0 0
      %499 = vmatpush1.bf16.msra.mxu0 %v445
      %500 = vmatprep.subr.bf16.mxu0 0
      %501 = vmatpush1.bf16.msra.mxu0 %v446
      %502 = vmatprep.subr.bf16.mxu0 0
      %503 = vmatpush1.bf16.msra.mxu0 %v447
      %504 = vmatprep.subr.bf16.mxu0 0
      %505 = vmatpush1.bf16.msra.mxu0 %v448
      %506 = vmatprep.subr.bf16.mxu0 0
      %507 = vmatpush1.bf16.msra.mxu0 %v449
      %508 = vmatprep.subr.bf16.mxu0 0
      %509 = vmatpush1.bf16.msra.mxu0 %v450
      %510 = vmatprep.subr.bf16.mxu0 0
      %511 = vmatpush1.bf16.msra.mxu0 %v451
      %512 = vmatprep.subr.bf16.mxu0 0
      %513 = vmatpush1.bf16.msra.mxu0 %v452
      %514 = vmatprep.subr.bf16.mxu0 0
      %515 = vmatpush1.bf16.msra.mxu0 %v453
      %516 = vmatprep.subr.bf16.mxu0 0
      %517 = vmatpush1.bf16.msra.mxu0 %v454
      %518 = vmatprep.subr.bf16.mxu0 0
      %519 = vmatpush1.bf16.msra.mxu0 %v455
      %520 = vmatprep.mubr.bf16.mxu0 %v284
      %521 = vmatmul.mubr.bf16.gmra.mrb[0].mxu0 %v283
      %v522 = vpop.f32.mrb[0].mxu0
      %v523 = vadd.f32 0.0, %v522
      %v524 = vpop.f32.mrb[0].mxu0
      %v525 = vpop.f32.mrb[0].mxu0
      %v526 = vadd.f32 0.0, %v525
      %v527 = vpop.f32.mrb[0].mxu0
      %528 = vmatprep.mubr.bf16.mxu0 %v287
      %529 = vmatmul.mubr.bf16.gmra.mrb[0].mxu0 %v286
      %v530 = vpop.f32.mrb[0].mxu0
      %v531 = vadd.f32 0.0, %v530
      %v532 = vpop.f32.mrb[0].mxu0
      %v533 = vpop.f32.mrb[0].mxu0
      %v534 = vadd.f32 0.0, %v533
      %v535 = vpop.f32.mrb[0].mxu0
      %536 = vmatprep.mubr.bf16.mxu0 %v290
      %537 = vmatmul.mubr.bf16.gmra.mrb[0].mxu0 %v289
      %v538 = vpop.f32.mrb[0].mxu0
      %v539 = vadd.f32 0.0, %v538
      %v540 = vpop.f32.mrb[0].mxu0
      %v541 = vpop.f32.mrb[0].mxu0
      %v542 = vadd.f32 0.0, %v541
      %v543 = vpop.f32.mrb[0].mxu0
      %544 = vmatprep.mubr.bf16.mxu0 %v293
      %545 = vmatmul.mubr.bf16.gmra.mrb[0].mxu0 %v292
      %v546 = vpop.f32.mrb[0].mxu0
      %v547 = vadd.f32 0.0, %v546
      %v548 = vpop.f32.mrb[0].mxu0
      %v549 = vpop.f32.mrb[0].mxu0
      %v550 = vadd.f32 0.0, %v549
      %v551 = vpop.f32.mrb[0].mxu0
      %552 = vdwg.mxu0
      %553 = vmatprep.subr.bf16.mxu0 0
      %554 = vmatpush1.bf16.msra.mxu0 %v456
      %555 = vmatprep.subr.bf16.mxu0 0
      %556 = vmatpush1.bf16.msra.mxu0 %v457
      %557 = vmatprep.subr.bf16.mxu0 0
      %558 = vmatpush1.bf16.msra.mxu0 %v458
      %559 = vmatprep.subr.bf16.mxu0 0
      %560 = vmatpush1.bf16.msra.mxu0 %v459
      %561 = vmatprep.subr.bf16.mxu0 0
      %562 = vmatpush1.bf16.msra.mxu0 %v460
      %563 = vmatprep.subr.bf16.mxu0 0
      %564 = vmatpush1.bf16.msra.mxu0 %v461
      %565 = vmatprep.subr.bf16.mxu0 0
      %566 = vmatpush1.bf16.msra.mxu0 %v462
      %567 = vmatprep.subr.bf16.mxu0 0
      %568 = vmatpush1.bf16.msra.mxu0 %v463
      %569 = vmatprep.subr.bf16.mxu0 0
      %570 = vmatpush1.bf16.msra.mxu0 0
      %571 = vmatprep.subr.bf16.mxu0 0
      %572 = vmatpush1.bf16.msra.mxu0 0
      %573 = vmatprep.subr.bf16.mxu0 0
      %574 = vmatpush1.bf16.msra.mxu0 0
      %575 = vmatprep.subr.bf16.mxu0 0
      %576 = vmatpush1.bf16.msra.mxu0 0
      %577 = vmatprep.subr.bf16.mxu0 0
      %578 = vmatpush1.bf16.msra.mxu0 0
      %579 = vmatprep.subr.bf16.mxu0 0
      %580 = vmatpush1.bf16.msra.mxu0 0
      %581 = vmatprep.subr.bf16.mxu0 0
      %582 = vmatpush1.bf16.msra.mxu0 0
      %583 = vmatprep.subr.bf16.mxu0 0
      %584 = vmatpush1.bf16.msra.mxu0 0
      %585 = vmatprep.mubr.bf16.mxu0 0
      %586 = vmatmul.mubr.bf16.gmra.mrb[0].mxu0 %v285
      %v587 = vpop.f32.mrb[0].mxu0
      %v588 = vadd.f32 %v523, %v587
      %v589 = vpop.f32.mrb[0].mxu0
      %v590 = vpop.f32.mrb[0].mxu0
      %v591 = vadd.f32 %v526, %v590
      %v592 = vpop.f32.mrb[0].mxu0
      %593 = vmatprep.mubr.bf16.mxu0 0
      %594 = vmatmul.mubr.bf16.gmra.mrb[0].mxu0 %v288
      %v595 = vpop.f32.mrb[0].mxu0
      %v596 = vadd.f32 %v531, %v595
      %v597 = vpop.f32.mrb[0].mxu0
      %v598 = vpop.f32.mrb[0].mxu0
      %v599 = vadd.f32 %v534, %v598
      %v600 = vpop.f32.mrb[0].mxu0
      %601 = vmatprep.mubr.bf16.mxu0 0
      %602 = vmatmul.mubr.bf16.gmra.mrb[0].mxu0 %v291
      %v603 = vpop.f32.mrb[0].mxu0
      %v604 = vadd.f32 %v539, %v603
      %v605 = vpop.f32.mrb[0].mxu0
      %v606 = vpop.f32.mrb[0].mxu0
      %v607 = vadd.f32 %v542, %v606
      %v608 = vpop.f32.mrb[0].mxu0
      %609 = vmatprep.mubr.bf16.mxu0 0
      %610 = vmatmul.mubr.bf16.gmra.mrb[0].mxu0 %v294
      %v611 = vpop.f32.mrb[0].mxu0
      %v612 = vadd.f32 %v547, %v611
      %v613 = vpop.f32.mrb[0].mxu0
      %v614 = vpop.f32.mrb[0].mxu0
      %v615 = vadd.f32 %v550, %v614
      %v616 = vpop.f32.mrb[0].mxu0
      %617 = vdwg.mxu0
      %v666 = vunpack.c.l.b16 %v211
      %v667 = vunpack.c.l.b16 %v212
      %v668 = vunpack.c.l.b16 %v213
      %v669 = vunpack.c.l.b16 %v214
      %v670 = vunpack.c.l.b16 %v215
      %v671 = vunpack.c.l.b16 %v216
      %v672 = vunpack.c.l.b16 %v217
      %v673 = vunpack.c.l.b16 %v218
      %v674 = vunpack.c.l.b16 %v219
      %v675 = vunpack.c.l.b16 %v220
      %v676 = vunpack.c.l.b16 %v221
      %v677 = vunpack.c.l.b16 %v222
      %v678 = vunpack.c.l.b16 %v223
      %v679 = vunpack.c.l.b16 %v224
      %v680 = vunpack.c.l.b16 %v225
      %v681 = vunpack.c.l.b16 %v226
      %v682 = vunpack.c.l.b16 %v227
      %v683 = vunpack.c.l.b16 %v228
      %v684 = vunpack.c.l.b16 %v229
      %v685 = vunpack.c.l.b16 %v230
      %v686 = vunpack.c.l.b16 %v231
      %v687 = vunpack.c.l.b16 %v232
      %v688 = vunpack.c.l.b16 %v233
      %v689 = vunpack.c.l.b16 %v234
      %v690 = vunpack.c.l.b16 %v235
      %v691 = vunpack.c.l.b16 %v236
      %v692 = vunpack.c.l.b16 %v237
      %v693 = vunpack.c.l.b16 %v238
      %v694 = vunpack.c.l.b16 %v239
      %v695 = vunpack.c.l.b16 %v240
      %v696 = vunpack.c.l.b16 %v241
      %v697 = vunpack.c.l.b16 %v242
      %v698 = vunpack.c.l.b16 %v243
      %v699 = vunpack.c.l.b16 %v244
      %v700 = vunpack.c.l.b16 %v245
      %v701 = vunpack.c.l.b16 %v246
      %v702 = vunpack.c.l.b16 %v247
      %v703 = vunpack.c.l.b16 %v248
      %v704 = vunpack.c.l.b16 %v249
      %v705 = vunpack.c.l.b16 %v250
      %v706 = vunpack.c.l.b16 %v251
      %v707 = vunpack.c.l.b16 %v252
      %v708 = vunpack.c.l.b16 %v253
      %v709 = vunpack.c.l.b16 %v254
      %v710 = vunpack.c.l.b16 %v255
      %v711 = vunpack.c.l.b16 %v256
      %v712 = vunpack.c.l.b16 %v257
      %v713 = vunpack.c.l.b16 %v258
      %v714 = vpack.c.b16 %v667, %v666
      %v715 = vpack.c.b16 %v669, %v668
      %v716 = vpack.c.b16 %v671, %v670
      %v717 = vpack.c.b16 %v673, %v672
      %v718 = vpack.c.b16 %v675, %v674
      %v719 = vpack.c.b16 %v677, %v676
      %v720 = vpack.c.b16 %v679, %v678
      %v721 = vpack.c.b16 %v681, %v680
      %v722 = vpack.c.b16 %v683, %v682
      %v723 = vpack.c.b16 %v685, %v684
      %v724 = vpack.c.b16 %v687, %v686
      %v725 = vpack.c.b16 %v689, %v688
      %v726 = vpack.c.b16 %v691, %v690
      %v727 = vpack.c.b16 %v693, %v692
      %v728 = vpack.c.b16 %v695, %v694
      %v729 = vpack.c.b16 %v697, %v696
      %v730 = vpack.c.b16 %v699, %v698
      %v731 = vpack.c.b16 %v701, %v700
      %v732 = vpack.c.b16 %v703, %v702
      %v733 = vpack.c.b16 %v705, %v704
      %v734 = vpack.c.b16 %v707, %v706
      %v735 = vpack.c.b16 %v709, %v708
      %v736 = vpack.c.b16 %v711, %v710
      %v737 = vpack.c.b16 %v713, %v712
      %762 = vmatprep.subr.bf16.mxu0 0
      %763 = vmatpush1.bf16.msra.mxu0 %v714
      %764 = vmatprep.subr.bf16.mxu0 0
      %765 = vmatpush1.bf16.msra.mxu0 %v715
      %766 = vmatprep.subr.bf16.mxu0 0
      %767 = vmatpush1.bf16.msra.mxu0 %v716
      %768 = vmatprep.subr.bf16.mxu0 0
      %769 = vmatpush1.bf16.msra.mxu0 %v717
      %770 = vmatprep.subr.bf16.mxu0 0
      %771 = vmatpush1.bf16.msra.mxu0 %v718
      %772 = vmatprep.subr.bf16.mxu0 0
      %773 = vmatpush1.bf16.msra.mxu0 %v719
      %774 = vmatprep.subr.bf16.mxu0 0
      %775 = vmatpush1.bf16.msra.mxu0 %v720
      %776 = vmatprep.subr.bf16.mxu0 0
      %777 = vmatpush1.bf16.msra.mxu0 %v721
      %778 = vmatprep.subr.bf16.mxu0 0
      %779 = vmatpush1.bf16.msra.mxu0 %v722
      %780 = vmatprep.subr.bf16.mxu0 0
      %781 = vmatpush1.bf16.msra.mxu0 %v723
      %782 = vmatprep.subr.bf16.mxu0 0
      %783 = vmatpush1.bf16.msra.mxu0 %v724
      %784 = vmatprep.subr.bf16.mxu0 0
      %785 = vmatpush1.bf16.msra.mxu0 %v725
      %786 = vmatprep.subr.bf16.mxu0 0
      %787 = vmatpush1.bf16.msra.mxu0 %v726
      %788 = vmatprep.subr.bf16.mxu0 0
      %789 = vmatpush1.bf16.msra.mxu0 %v727
      %790 = vmatprep.subr.bf16.mxu0 0
      %791 = vmatpush1.bf16.msra.mxu0 %v728
      %792 = vmatprep.subr.bf16.mxu0 0
      %793 = vmatpush1.bf16.msra.mxu0 %v729
      %794 = vmatprep.mubr.bf16.mxu0 %v200
      %795 = vmatmul.mubr.bf16.gmra.mrb[0].mxu0 %v199
      %v796 = vpop.f32.mrb[0].mxu0
      %v797 = vadd.f32 %v588, %v796
      %v798 = vpop.f32.mrb[0].mxu0
      %v799 = vpop.f32.mrb[0].mxu0
      %v800 = vadd.f32 %v591, %v799
      %v801 = vpop.f32.mrb[0].mxu0
      %802 = vmatprep.mubr.bf16.mxu0 %v203
      %803 = vmatmul.mubr.bf16.gmra.mrb[0].mxu0 %v202
      %v804 = vpop.f32.mrb[0].mxu0
      %v805 = vadd.f32 %v596, %v804
      %v806 = vpop.f32.mrb[0].mxu0
      %v807 = vpop.f32.mrb[0].mxu0
      %v808 = vadd.f32 %v599, %v807
      %v809 = vpop.f32.mrb[0].mxu0
      %810 = vmatprep.mubr.bf16.mxu0 %v206
      %811 = vmatmul.mubr.bf16.gmra.mrb[0].mxu0 %v205
      %v812 = vpop.f32.mrb[0].mxu0
      %v813 = vadd.f32 %v604, %v812
      %v814 = vpop.f32.mrb[0].mxu0
      %v815 = vpop.f32.mrb[0].mxu0
      %v816 = vadd.f32 %v607, %v815
      %v817 = vpop.f32.mrb[0].mxu0
      %818 = vmatprep.mubr.bf16.mxu0 %v209
      %819 = vmatmul.mubr.bf16.gmra.mrb[0].mxu0 %v208
      %v820 = vpop.f32.mrb[0].mxu0
      %v821 = vadd.f32 %v612, %v820
      %v822 = vpop.f32.mrb[0].mxu0
      %v823 = vpop.f32.mrb[0].mxu0
      %v824 = vadd.f32 %v615, %v823
      %v825 = vpop.f32.mrb[0].mxu0
      %826 = vdwg.mxu0
      %827 = vmatprep.subr.bf16.mxu0 0
      %828 = vmatpush1.bf16.msra.mxu0 %v730
      %829 = vmatprep.subr.bf16.mxu0 0
      %830 = vmatpush1.bf16.msra.mxu0 %v731
      %831 = vmatprep.subr.bf16.mxu0 0
      %832 = vmatpush1.bf16.msra.mxu0 %v732
      %833 = vmatprep.subr.bf16.mxu0 0
      %834 = vmatpush1.bf16.msra.mxu0 %v733
      %835 = vmatprep.subr.bf16.mxu0 0
      %836 = vmatpush1.bf16.msra.mxu0 %v734
      %837 = vmatprep.subr.bf16.mxu0 0
      %838 = vmatpush1.bf16.msra.mxu0 %v735
      %839 = vmatprep.subr.bf16.mxu0 0
      %840 = vmatpush1.bf16.msra.mxu0 %v736
      %841 = vmatprep.subr.bf16.mxu0 0
      %842 = vmatpush1.bf16.msra.mxu0 %v737
      %843 = vmatprep.subr.bf16.mxu0 0
      %844 = vmatpush1.bf16.msra.mxu0 0
      %845 = vmatprep.subr.bf16.mxu0 0
      %846 = vmatpush1.bf16.msra.mxu0 0
      %847 = vmatprep.subr.bf16.mxu0 0
      %848 = vmatpush1.bf16.msra.mxu0 0
      %849 = vmatprep.subr.bf16.mxu0 0
      %850 = vmatpush1.bf16.msra.mxu0 0
      %851 = vmatprep.subr.bf16.mxu0 0
      %852 = vmatpush1.bf16.msra.mxu0 0
      %853 = vmatprep.subr.bf16.mxu0 0
      %854 = vmatpush1.bf16.msra.mxu0 0
      %855 = vmatprep.subr.bf16.mxu0 0
      %856 = vmatpush1.bf16.msra.mxu0 0
      %857 = vmatprep.subr.bf16.mxu0 0
      %858 = vmatpush1.bf16.msra.mxu0 0
      %859 = vmatprep.mubr.bf16.mxu0 0
      %860 = vmatmul.mubr.bf16.gmra.mrb[0].mxu0 %v201
      %v861 = vpop.f32.mrb[0].mxu0
      %v862 = vadd.f32 %v797, %v861
      %v863 = vpop.f32.mrb[0].mxu0
      %v864 = vpop.f32.mrb[0].mxu0
      %v865 = vadd.f32 %v800, %v864
      %v866 = vpop.f32.mrb[0].mxu0
      %867 = vmatprep.mubr.bf16.mxu0 0
      %868 = vmatmul.mubr.bf16.gmra.mrb[0].mxu0 %v204
      %v869 = vpop.f32.mrb[0].mxu0
      %v870 = vadd.f32 %v805, %v869
      %v871 = vpop.f32.mrb[0].mxu0
      %v872 = vpop.f32.mrb[0].mxu0
      %v873 = vadd.f32 %v808, %v872
      %v874 = vpop.f32.mrb[0].mxu0
      %875 = vmatprep.mubr.bf16.mxu0 0
      %876 = vmatmul.mubr.bf16.gmra.mrb[0].mxu0 %v207
      %v877 = vpop.f32.mrb[0].mxu0
      %v878 = vadd.f32 %v813, %v877
      %v879 = vpop.f32.mrb[0].mxu0
      %v880 = vpop.f32.mrb[0].mxu0
      %v881 = vadd.f32 %v816, %v880
      %v882 = vpop.f32.mrb[0].mxu0
      %883 = vmatprep.mubr.bf16.mxu0 0
      %884 = vmatmul.mubr.bf16.gmra.mrb[0].mxu0 %v210
      %v885 = vpop.f32.mrb[0].mxu0
      %v886 = vadd.f32 %v821, %v885
      %v887 = vpop.f32.mrb[0].mxu0
      %v888 = vpop.f32.mrb[0].mxu0
      %v889 = vadd.f32 %v824, %v888
      %v890 = vpop.f32.mrb[0].mxu0
      %891 = vdwg.mxu0
      %s892 = scalar_lea.vmem %s163, 48
      %v893 = vld [vmem:[%s892] sm:$0xff]
      %v894 = vld [vmem:[%s892 + $0x8] sm:$0xff]
      %v895 = vld [vmem:[%s892 + $0x10] sm:$0xff]
      %v896 = vld [vmem:[%s892 + $0x30] sm:$0xff]
      %v897 = vld [vmem:[%s892 + $0x38] sm:$0xff]
      %v898 = vld [vmem:[%s892 + $0x40] sm:$0xff]
      %v899 = vld [vmem:[%s892 + $0x60] sm:$0xff]
      %v900 = vld [vmem:[%s892 + $0x68] sm:$0xff]
      %v901 = vld [vmem:[%s892 + $0x70] sm:$0xff]
      %v902 = vld [vmem:[%s892 + $0x90] sm:$0xff]
      %v903 = vld [vmem:[%s892 + $0x98] sm:$0xff]
      %v904 = vld [vmem:[%s892 + $0xa0] sm:$0xff]
      %v905 = vld [vmem:[%s892 + $0xc0] sm:$0xff]
      %v906 = vld [vmem:[%s892 + $0xc8] sm:$0xff]
      %v907 = vld [vmem:[%s892 + $0xd0] sm:$0xff]
      %v908 = vld [vmem:[%s892 + $0xf0] sm:$0xff]
      %v909 = vld [vmem:[%s892 + $0xf8] sm:$0xff]
      %v910 = vld [vmem:[%s892 + $0x100] sm:$0xff]
      %v911 = vld [vmem:[%s892 + $0x120] sm:$0xff]
      %v912 = vld [vmem:[%s892 + $0x128] sm:$0xff]
      %v913 = vld [vmem:[%s892 + $0x130] sm:$0xff]
      %v914 = vld [vmem:[%s892 + $0x150] sm:$0xff]
      %v915 = vld [vmem:[%s892 + $0x158] sm:$0xff]
      %v916 = vld [vmem:[%s892 + $0x160] sm:$0xff]
      %v917 = vpack.c.bf16 %v896, %v893
      %v918 = vpack.c.bf16 %v897, %v894
      %v919 = vpack.c.bf16 %v898, %v895
      %v920 = vpack.c.bf16 %v902, %v899
      %v921 = vpack.c.bf16 %v903, %v900
      %v922 = vpack.c.bf16 %v904, %v901
      %v923 = vpack.c.bf16 %v908, %v905
      %v924 = vpack.c.bf16 %v909, %v906
      %v925 = vpack.c.bf16 %v910, %v907
      %v926 = vpack.c.bf16 %v914, %v911
      %v927 = vpack.c.bf16 %v915, %v912
      %v928 = vpack.c.bf16 %v916, %v913
      %s929 = scalar_lea.vmem %s1, 384
      %v930 = vld [vmem:[%s929] sm:$0xf]
      %v931 = vld [vmem:[%s929 + $0x4] sm:$0xf]
      %v932 = vld [vmem:[%s929 + $0x8] sm:$0xf]
      %v933 = vld [vmem:[%s929 + $0xc] sm:$0xf]
      %v934 = vld [vmem:[%s929 + $0x10] sm:$0xf]
      %v935 = vld [vmem:[%s929 + $0x14] sm:$0xf]
      %v936 = vld [vmem:[%s929 + $0x18] sm:$0xf]
      %v937 = vld [vmem:[%s929 + $0x1c] sm:$0xf]
      %v938 = vld [vmem:[%s929 + $0x20] sm:$0xf]
      %v939 = vld [vmem:[%s929 + $0x24] sm:$0xf]
      %v940 = vld [vmem:[%s929 + $0x28] sm:$0xf]
      %v941 = vld [vmem:[%s929 + $0x2c] sm:$0xf]
      %v942 = vld [vmem:[%s929 + $0x30] sm:$0xf]
      %v943 = vld [vmem:[%s929 + $0x34] sm:$0xf]
      %v944 = vld [vmem:[%s929 + $0x38] sm:$0xf]
      %v945 = vld [vmem:[%s929 + $0x3c] sm:$0xf]
      %v946 = vld [vmem:[%s929 + $0x40] sm:$0xf]
      %v947 = vld [vmem:[%s929 + $0x44] sm:$0xf]
      %v948 = vld [vmem:[%s929 + $0x48] sm:$0xf]
      %v949 = vld [vmem:[%s929 + $0x4c] sm:$0xf]
      %v950 = vld [vmem:[%s929 + $0x50] sm:$0xf]
      %v951 = vld [vmem:[%s929 + $0x54] sm:$0xf]
      %v952 = vld [vmem:[%s929 + $0x58] sm:$0xf]
      %v953 = vld [vmem:[%s929 + $0x5c] sm:$0xf]
      %v954 = vld [vmem:[%s929 + $0x60] sm:$0xf]
      %v955 = vld [vmem:[%s929 + $0x64] sm:$0xf]
      %v956 = vld [vmem:[%s929 + $0x68] sm:$0xf]
      %v957 = vld [vmem:[%s929 + $0x6c] sm:$0xf]
      %v958 = vld [vmem:[%s929 + $0x70] sm:$0xf]
      %v959 = vld [vmem:[%s929 + $0x74] sm:$0xf]
      %v960 = vld [vmem:[%s929 + $0x78] sm:$0xf]
      %v961 = vld [vmem:[%s929 + $0x7c] sm:$0xf]
      %v962 = vld [vmem:[%s929 + $0x80] sm:$0xf]
      %v963 = vld [vmem:[%s929 + $0x84] sm:$0xf]
      %v964 = vld [vmem:[%s929 + $0x88] sm:$0xf]
      %v965 = vld [vmem:[%s929 + $0x8c] sm:$0xf]
      %v966 = vld [vmem:[%s929 + $0x90] sm:$0xf]
      %v967 = vld [vmem:[%s929 + $0x94] sm:$0xf]
      %v968 = vld [vmem:[%s929 + $0x98] sm:$0xf]
      %v969 = vld [vmem:[%s929 + $0x9c] sm:$0xf]
      %v970 = vld [vmem:[%s929 + $0xa0] sm:$0xf]
      %v971 = vld [vmem:[%s929 + $0xa4] sm:$0xf]
      %v972 = vld [vmem:[%s929 + $0xa8] sm:$0xf]
      %v973 = vld [vmem:[%s929 + $0xac] sm:$0xf]
      %v974 = vld [vmem:[%s929 + $0xb0] sm:$0xf]
      %v975 = vld [vmem:[%s929 + $0xb4] sm:$0xf]
      %v976 = vld [vmem:[%s929 + $0xb8] sm:$0xf]
      %v977 = vld [vmem:[%s929 + $0xbc] sm:$0xf]
      %v1026 = vunpack.c.l.b16 %v930
      %v1027 = vunpack.c.l.b16 %v931
      %v1028 = vunpack.c.l.b16 %v932
      %v1029 = vunpack.c.l.b16 %v933
      %v1030 = vunpack.c.l.b16 %v934
      %v1031 = vunpack.c.l.b16 %v935
      %v1032 = vunpack.c.l.b16 %v936
      %v1033 = vunpack.c.l.b16 %v937
      %v1034 = vunpack.c.l.b16 %v938
      %v1035 = vunpack.c.l.b16 %v939
      %v1036 = vunpack.c.l.b16 %v940
      %v1037 = vunpack.c.l.b16 %v941
      %v1038 = vunpack.c.l.b16 %v942
      %v1039 = vunpack.c.l.b16 %v943
      %v1040 = vunpack.c.l.b16 %v944
      %v1041 = vunpack.c.l.b16 %v945
      %v1042 = vunpack.c.l.b16 %v946
      %v1043 = vunpack.c.l.b16 %v947
      %v1044 = vunpack.c.l.b16 %v948
      %v1045 = vunpack.c.l.b16 %v949
      %v1046 = vunpack.c.l.b16 %v950
      %v1047 = vunpack.c.l.b16 %v951
      %v1048 = vunpack.c.l.b16 %v952
      %v1049 = vunpack.c.l.b16 %v953
      %v1050 = vunpack.c.l.b16 %v954
      %v1051 = vunpack.c.l.b16 %v955
      %v1052 = vunpack.c.l.b16 %v956
      %v1053 = vunpack.c.l.b16 %v957
      %v1054 = vunpack.c.l.b16 %v958
      %v1055 = vunpack.c.l.b16 %v959
      %v1056 = vunpack.c.l.b16 %v960
      %v1057 = vunpack.c.l.b16 %v961
      %v1058 = vunpack.c.l.b16 %v962
      %v1059 = vunpack.c.l.b16 %v963
      %v1060 = vunpack.c.l.b16 %v964
      %v1061 = vunpack.c.l.b16 %v965
      %v1062 = vunpack.c.l.b16 %v966
      %v1063 = vunpack.c.l.b16 %v967
      %v1064 = vunpack.c.l.b16 %v968
      %v1065 = vunpack.c.l.b16 %v969
      %v1066 = vunpack.c.l.b16 %v970
      %v1067 = vunpack.c.l.b16 %v971
      %v1068 = vunpack.c.l.b16 %v972
      %v1069 = vunpack.c.l.b16 %v973
      %v1070 = vunpack.c.l.b16 %v974
      %v1071 = vunpack.c.l.b16 %v975
      %v1072 = vunpack.c.l.b16 %v976
      %v1073 = vunpack.c.l.b16 %v977
      %v1074 = vpack.c.b16 %v1027, %v1026
      %v1075 = vpack.c.b16 %v1029, %v1028
      %v1076 = vpack.c.b16 %v1031, %v1030
      %v1077 = vpack.c.b16 %v1033, %v1032
      %v1078 = vpack.c.b16 %v1035, %v1034
      %v1079 = vpack.c.b16 %v1037, %v1036
      %v1080 = vpack.c.b16 %v1039, %v1038
      %v1081 = vpack.c.b16 %v1041, %v1040
      %v1082 = vpack.c.b16 %v1043, %v1042
      %v1083 = vpack.c.b16 %v1045, %v1044
      %v1084 = vpack.c.b16 %v1047, %v1046
      %v1085 = vpack.c.b16 %v1049, %v1048
      %v1086 = vpack.c.b16 %v1051, %v1050
      %v1087 = vpack.c.b16 %v1053, %v1052
      %v1088 = vpack.c.b16 %v1055, %v1054
      %v1089 = vpack.c.b16 %v1057, %v1056
      %v1090 = vpack.c.b16 %v1059, %v1058
      %v1091 = vpack.c.b16 %v1061, %v1060
      %v1092 = vpack.c.b16 %v1063, %v1062
      %v1093 = vpack.c.b16 %v1065, %v1064
      %v1094 = vpack.c.b16 %v1067, %v1066
      %v1095 = vpack.c.b16 %v1069, %v1068
      %v1096 = vpack.c.b16 %v1071, %v1070
      %v1097 = vpack.c.b16 %v1073, %v1072
      %1122 = vmatprep.subr.bf16.mxu0 0
      %1123 = vmatpush1.bf16.msra.mxu0 %v1074
      %1124 = vmatprep.subr.bf16.mxu0 0
      %1125 = vmatpush1.bf16.msra.mxu0 %v1075
      %1126 = vmatprep.subr.bf16.mxu0 0
      %1127 = vmatpush1.bf16.msra.mxu0 %v1076
      %1128 = vmatprep.subr.bf16.mxu0 0
      %1129 = vmatpush1.bf16.msra.mxu0 %v1077
      %1130 = vmatprep.subr.bf16.mxu0 0
      %1131 = vmatpush1.bf16.msra.mxu0 %v1078
      %1132 = vmatprep.subr.bf16.mxu0 0
      %1133 = vmatpush1.bf16.msra.mxu0 %v1079
      %1134 = vmatprep.subr.bf16.mxu0 0
      %1135 = vmatpush1.bf16.msra.mxu0 %v1080
      %1136 = vmatprep.subr.bf16.mxu0 0
      %1137 = vmatpush1.bf16.msra.mxu0 %v1081
      %1138 = vmatprep.subr.bf16.mxu0 0
      %1139 = vmatpush1.bf16.msra.mxu0 %v1082
      %1140 = vmatprep.subr.bf16.mxu0 0
      %1141 = vmatpush1.bf16.msra.mxu0 %v1083
      %1142 = vmatprep.subr.bf16.mxu0 0
      %1143 = vmatpush1.bf16.msra.mxu0 %v1084
      %1144 = vmatprep.subr.bf16.mxu0 0
      %1145 = vmatpush1.bf16.msra.mxu0 %v1085
      %1146 = vmatprep.subr.bf16.mxu0 0
      %1147 = vmatpush1.bf16.msra.mxu0 %v1086
      %1148 = vmatprep.subr.bf16.mxu0 0
      %1149 = vmatpush1.bf16.msra.mxu0 %v1087
      %1150 = vmatprep.subr.bf16.mxu0 0
      %1151 = vmatpush1.bf16.msra.mxu0 %v1088
      %1152 = vmatprep.subr.bf16.mxu0 0
      %1153 = vmatpush1.bf16.msra.mxu0 %v1089
      %1154 = vmatprep.mubr.bf16.mxu0 %v918
      %1155 = vmatmul.mubr.bf16.gmra.mrb[0].mxu0 %v917
      %v1156 = vpop.f32.mrb[0].mxu0
      %v1157 = vadd.f32 0.0, %v1156
      %v1158 = vpop.f32.mrb[0].mxu0
      %v1159 = vpop.f32.mrb[0].mxu0
      %v1160 = vadd.f32 0.0, %v1159
      %v1161 = vpop.f32.mrb[0].mxu0
      %1162 = vmatprep.mubr.bf16.mxu0 %v921
      %1163 = vmatmul.mubr.bf16.gmra.mrb[0].mxu0 %v920
      %v1164 = vpop.f32.mrb[0].mxu0
      %v1165 = vadd.f32 0.0, %v1164
      %v1166 = vpop.f32.mrb[0].mxu0
      %v1167 = vpop.f32.mrb[0].mxu0
      %v1168 = vadd.f32 0.0, %v1167
      %v1169 = vpop.f32.mrb[0].mxu0
      %1170 = vmatprep.mubr.bf16.mxu0 %v924
      %1171 = vmatmul.mubr.bf16.gmra.mrb[0].mxu0 %v923
      %v1172 = vpop.f32.mrb[0].mxu0
      %v1173 = vadd.f32 0.0, %v1172
      %v1174 = vpop.f32.mrb[0].mxu0
      %v1175 = vpop.f32.mrb[0].mxu0
      %v1176 = vadd.f32 0.0, %v1175
      %v1177 = vpop.f32.mrb[0].mxu0
      %1178 = vmatprep.mubr.bf16.mxu0 %v927
      %1179 = vmatmul.mubr.bf16.gmra.mrb[0].mxu0 %v926
      %v1180 = vpop.f32.mrb[0].mxu0
      %v1181 = vadd.f32 0.0, %v1180
      %v1182 = vpop.f32.mrb[0].mxu0
      %v1183 = vpop.f32.mrb[0].mxu0
      %v1184 = vadd.f32 0.0, %v1183
      %v1185 = vpop.f32.mrb[0].mxu0
      %1186 = vdwg.mxu0
      %1187 = vmatprep.subr.bf16.mxu0 0
      %1188 = vmatpush1.bf16.msra.mxu0 %v1090
      %1189 = vmatprep.subr.bf16.mxu0 0
      %1190 = vmatpush1.bf16.msra.mxu0 %v1091
      %1191 = vmatprep.subr.bf16.mxu0 0
      %1192 = vmatpush1.bf16.msra.mxu0 %v1092
      %1193 = vmatprep.subr.bf16.mxu0 0
      %1194 = vmatpush1.bf16.msra.mxu0 %v1093
      %1195 = vmatprep.subr.bf16.mxu0 0
      %1196 = vmatpush1.bf16.msra.mxu0 %v1094
      %1197 = vmatprep.subr.bf16.mxu0 0
      %1198 = vmatpush1.bf16.msra.mxu0 %v1095
      %1199 = vmatprep.subr.bf16.mxu0 0
      %1200 = vmatpush1.bf16.msra.mxu0 %v1096
      %1201 = vmatprep.subr.bf16.mxu0 0
      %1202 = vmatpush1.bf16.msra.mxu0 %v1097
      %1203 = vmatprep.subr.bf16.mxu0 0
      %1204 = vmatpush1.bf16.msra.mxu0 0
      %1205 = vmatprep.subr.bf16.mxu0 0
      %1206 = vmatpush1.bf16.msra.mxu0 0
      %1207 = vmatprep.subr.bf16.mxu0 0
      %1208 = vmatpush1.bf16.msra.mxu0 0
      %1209 = vmatprep.subr.bf16.mxu0 0
      %1210 = vmatpush1.bf16.msra.mxu0 0
      %1211 = vmatprep.subr.bf16.mxu0 0
      %1212 = vmatpush1.bf16.msra.mxu0 0
      %1213 = vmatprep.subr.bf16.mxu0 0
      %1214 = vmatpush1.bf16.msra.mxu0 0
      %1215 = vmatprep.subr.bf16.mxu0 0
      %1216 = vmatpush1.bf16.msra.mxu0 0
      %1217 = vmatprep.subr.bf16.mxu0 0
      %1218 = vmatpush1.bf16.msra.mxu0 0
      %1219 = vmatprep.mubr.bf16.mxu0 0
      %1220 = vmatmul.mubr.bf16.gmra.mrb[0].mxu0 %v919
      %v1221 = vpop.f32.mrb[0].mxu0
      %v1222 = vadd.f32 %v1157, %v1221
      %v1223 = vpop.f32.mrb[0].mxu0
      %v1224 = vpop.f32.mrb[0].mxu0
      %v1225 = vadd.f32 %v1160, %v1224
      %v1226 = vpop.f32.mrb[0].mxu0
      %1227 = vmatprep.mubr.bf16.mxu0 0
      %1228 = vmatmul.mubr.bf16.gmra.mrb[0].mxu0 %v922
      %v1229 = vpop.f32.mrb[0].mxu0
      %v1230 = vadd.f32 %v1165, %v1229
      %v1231 = vpop.f32.mrb[0].mxu0
      %v1232 = vpop.f32.mrb[0].mxu0
      %v1233 = vadd.f32 %v1168, %v1232
      %v1234 = vpop.f32.mrb[0].mxu0
      %1235 = vmatprep.mubr.bf16.mxu0 0
      %1236 = vmatmul.mubr.bf16.gmra.mrb[0].mxu0 %v925
      %v1237 = vpop.f32.mrb[0].mxu0
      %v1238 = vadd.f32 %v1173, %v1237
      %v1239 = vpop.f32.mrb[0].mxu0
      %v1240 = vpop.f32.mrb[0].mxu0
      %v1241 = vadd.f32 %v1176, %v1240
      %v1242 = vpop.f32.mrb[0].mxu0
      %1243 = vmatprep.mubr.bf16.mxu0 0
      %1244 = vmatmul.mubr.bf16.gmra.mrb[0].mxu0 %v928
      %v1245 = vpop.f32.mrb[0].mxu0
      %v1246 = vadd.f32 %v1181, %v1245
      %v1247 = vpop.f32.mrb[0].mxu0
      %v1248 = vpop.f32.mrb[0].mxu0
      %v1249 = vadd.f32 %v1184, %v1248
      %v1250 = vpop.f32.mrb[0].mxu0
      %1251 = vdwg.mxu0
      %v1252 = vadd.f32 %v862, %v1222
      %v1253 = vadd.f32 %v865, %v1225
      %v1254 = vadd.f32 %v870, %v1230
      %v1255 = vadd.f32 %v873, %v1233
      %v1256 = vadd.f32 %v878, %v1238
      %v1257 = vadd.f32 %v881, %v1241
      %v1258 = vadd.f32 %v886, %v1246
      %v1259 = vadd.f32 %v889, %v1249
      %v1260 = vld [vmem:[%s3] sm:$0x3]
      %v1261 = vadd.f32 %v1252, %v1253
      %v1262 = vadd.f32 %v1261, %v1254
      %v1263 = vadd.f32 %v1262, %v1255
      %v1264 = vadd.f32 %v1263, %v1256
      %v1265 = vadd.f32 %v1264, %v1257
      %v1266 = vadd.f32 %v1265, %v1258
      %v1267 = vadd.f32 %v1266, %v1259
      %v1268 = vrot.slane %v1267, 4
      %v1269 = vadd.f32 %v1267, %v1268
      %v1270 = vrot.slane %v1269, 2
      %v1271 = vadd.f32 %v1269, %v1270
      %v1272 = vrot.slane %v1271, 1
      %v1273 = vadd.f32 %v1271, %v1272
      %v1274 = vmul.f32 %v1252, %v1252
      %v1275 = vmul.f32 %v1253, %v1253
      %v1276 = vmul.f32 %v1254, %v1254
      %v1277 = vmul.f32 %v1255, %v1255
      %v1278 = vmul.f32 %v1256, %v1256
      %v1279 = vmul.f32 %v1257, %v1257
      %v1280 = vmul.f32 %v1258, %v1258
      %v1281 = vmul.f32 %v1259, %v1259
      %v1282 = vadd.f32 %v1274, %v1275
      %v1283 = vadd.f32 %v1282, %v1276
      %v1284 = vadd.f32 %v1283, %v1277
      %v1285 = vadd.f32 %v1284, %v1278
      %v1286 = vadd.f32 %v1285, %v1279
      %v1287 = vadd.f32 %v1286, %v1280
      %v1288 = vadd.f32 %v1287, %v1281
      %v1289 = vrot.slane %v1288, 4
      %v1290 = vadd.f32 %v1288, %v1289
      %v1291 = vrot.slane %v1290, 2
      %v1292 = vadd.f32 %v1290, %v1291
      %v1293 = vrot.slane %v1292, 1
      %v1294 = vadd.f32 %v1292, %v1293
      %vm1295 = vcmask 1040384
      %v1296 = vsel %vm1295, %v1273, %v1294
      %v1297 = vadd.f32 %v1260, %v1296
      %1298 = vst [vmem:[%s3] sm:$0x3] %v1297
      %1299 = vst [vmem:[%s168] sm:$0xff] %v1252
      %1300 = vst [vmem:[%s168 + $0x8] sm:$0xff] %v1253
      %1301 = vst [vmem:[%s168 + $0x10] sm:$0xff] %v1254
      %1302 = vst [vmem:[%s168 + $0x18] sm:$0xff] %v1255
      %1303 = vst [vmem:[%s168 + $0x20] sm:$0xff] %v1256
      %1304 = vst [vmem:[%s168 + $0x28] sm:$0xff] %v1257
      %1305 = vst [vmem:[%s168 + $0x30] sm:$0xff] %v1258
      %1306 = vst [vmem:[%s168 + $0x38] sm:$0xff] %v1259
      %p1307 = scmp.lt.s32.totalorder %s15, 1
      %s1308 = scalar_select %p1307, %s15, 1
      %s1309 = smul.addr %s1308, 8
      %s1310 = smul.addr %s1309, 8
      %s1311 = scalar_lea.vmem %s2, %s1310
      // Predicated region
      $region33: #{bottleneck_forward.8} parent=27 // pred_check
        %p1312 = pneg %p80
      $region34: #{bottleneck_forward.8} parent=27 // pred_check_branch
        %1314 = sbr.rel (%p1312) target = $region36
      $region35: #{bottleneck_forward.8} parent=27 // pred_region
        _
      $region36: #{bottleneck_forward.8} parent=27 // pred_fallthru
        _
      // Predicated region
      $region37: #{bottleneck_forward.8} parent=27 // pred_check
        %p1315 = pneg %p101
      $region38: #{bottleneck_forward.8} parent=27 // pred_check_branch
        %1317 = sbr.rel (%p1315) target = $region40
      $region39: #{bottleneck_forward.8} parent=27 // pred_region
        _
      $region40: #{bottleneck_forward.8} parent=27 // pred_fallthru
        _
      // Predicated region
      $region41: #{bottleneck_forward.8} parent=27 // pred_check
        %p1318 = pneg %p101
      $region42: #{bottleneck_forward.8} parent=27 // pred_check_branch
        %1320 = sbr.rel (%p1318) target = $region44
      $region43: #{bottleneck_forward.8} parent=27 // pred_region
        _
      $region44: #{bottleneck_forward.8} parent=27 // pred_fallthru
        _
    $region28: #{bottleneck_forward.8} parent=5 // pred_fallthru
      _
    %p1321 = scmp.le.s32.totalorder 2, %s10
    // Predicated region
    $region45: #{bottleneck_forward.8} parent=5 // pred_check
      %p1322 = pneg %p1321
    $region46: #{bottleneck_forward.8} parent=5 // pred_check_branch
      %1324 = sbr.rel (%p1322) target = $region48
    $region47: #{bottleneck_forward.8} parent=5 // pred_region
      %s1325 = ssub.s32 %s10, 2
      // Predicated region
      $region49: #{bottleneck_forward.8} parent=47 // pred_check
        %p1326 = pneg %p86
      $region50: #{bottleneck_forward.8} parent=47 // pred_check_branch
        %1328 = sbr.rel (%p1326) target = $region52
      $region51: #{bottleneck_forward.8} parent=47 // pred_region
        %p1329 = scmp.lt.s32.totalorder %s16, 1
        %s1330 = scalar_select %p1329, %s16, 1
        %s1331 = smul.addr %s1330, 8
        %s1332 = smul.addr %s1331, 8
        %s1333 = scalar_lea.vmem %s2, %s1332
      $region52: #{bottleneck_forward.8} parent=47 // pred_fallthru
        _
    $region48: #{bottleneck_forward.8} parent=5 // pred_fallthru
      _
  $region6: #{bottleneck_forward.8} parent=0 // loop_footer
    %s14 = sadd.s32 1, %s10
  $region7: #{bottleneck_forward.8} parent=0 // loop_footer_branch
    %9 = sbr.rel target = $region3
  $region8: #{bottleneck_forward.8} parent=0 // loop_exit
    _

// kernel: bottleneck_forward.10
$region0: #{bottleneck_forward.10}
  #allocation0 [shape = 'u32[]', space=smem, size = 0x4, offset = 0x4, fixed_abs, tag = 'smem constant byte address 0x4 - core index']
  #allocation1 [shape = 'u32[144,128]{1,0:T(1,128)}', space=vmem, size = 0x12000, scoped, tag = 'internal scratch']
  %s0 = inlined_call_operand.vmem [shape: f32[128,128], index: 0, kind: input, shape index: {}]
  %s1 = inlined_call_operand.vmem [shape: bf16[128,128], index: 1, kind: input, shape index: {}]
  %s2 = inlined_call_operand.vmem [shape: f32[128,128], index: 2, kind: output, shape index: {0}]
  %s3 = inlined_call_operand.vmem [shape: f32[2,128], index: 3, kind: output, shape index: {1}]
  %4 = xla_tuple %s2, %s3
  %s5 = sld [smem:[#allocation0]]
  $region30: #{bottleneck_forward.10} parent=0
    _
  %s7 = ssub.s32 1, %s5
  %s8 = scalar_select 0, %s7, %s5
  // Predicated region
  $region2: #{bottleneck_forward.10} parent=0 // pred_check
    _
  $region3: #{bottleneck_forward.10} parent=0 // pred_check_branch
    %10 = sbr.rel (0) target = $region5
  $region4: #{bottleneck_forward.10} parent=0 // pred_region
    _
  $region5: #{bottleneck_forward.10} parent=0 // pred_fallthru
    _
  // Predicated region
  $region6: #{bottleneck_forward.10} parent=0 // pred_check
    _
  $region7: #{bottleneck_forward.10} parent=0 // pred_check_branch
    %12 = sbr.rel (0) target = $region9
  $region8: #{bottleneck_forward.10} parent=0 // pred_region
    _
  $region9: #{bottleneck_forward.10} parent=0 // pred_fallthru
    _
  %p14 = scmp.eq.s32.totalorder 0, 0
  // Predicated region
  $region10: #{bottleneck_forward.10} parent=0 // pred_check
    %p15 = pneg %p14
  $region11: #{bottleneck_forward.10} parent=0 // pred_check_branch
    %17 = sbr.rel (%p15) target = $region13
  $region12: #{bottleneck_forward.10} parent=0 // pred_region
    %18 = vst [vmem:[%s3] sm:$0x3] 0.0
  $region13: #{bottleneck_forward.10} parent=0 // pred_fallthru
    _
  %v19 = vld [vmem:[%s0] sm:$0xff]
  %v20 = vld [vmem:[%s0 + $0x8] sm:$0xff]
  %v21 = vld [vmem:[%s0 + $0x10] sm:$0xff]
  %v22 = vld [vmem:[%s0 + $0x18] sm:$0xff]
  %v23 = vld [vmem:[%s0 + $0x20] sm:$0xff]
  %v24 = vld [vmem:[%s0 + $0x28] sm:$0xff]
  %v25 = vld [vmem:[%s0 + $0x30] sm:$0xff]
  %v26 = vld [vmem:[%s0 + $0x38] sm:$0xff]
  %v27 = vld [vmem:[%s0 + $0x40] sm:$0xff]
  %v28 = vld [vmem:[%s0 + $0x48] sm:$0xff]
  %v29 = vld [vmem:[%s0 + $0x50] sm:$0xff]
  %v30 = vld [vmem:[%s0 + $0x58] sm:$0xff]
  %v31 = vld [vmem:[%s0 + $0x60] sm:$0xff]
  %v32 = vld [vmem:[%s0 + $0x68] sm:$0xff]
  %v33 = vld [vmem:[%s0 + $0x70] sm:$0xff]
  %v34 = vld [vmem:[%s0 + $0x78] sm:$0xff]
  %v35 = vpack.c.bf16 %v20, %v19
  %v36 = vpack.c.bf16 %v22, %v21
  %v37 = vpack.c.bf16 %v24, %v23
  %v38 = vpack.c.bf16 %v26, %v25
  %v39 = vpack.c.bf16 %v28, %v27
  %v40 = vpack.c.bf16 %v30, %v29
  %v41 = vpack.c.bf16 %v32, %v31
  %v42 = vpack.c.bf16 %v34, %v33
  %v43 = vld [vmem:[%s1] sm:$0xf]
  %v44 = vld [vmem:[%s1 + $0x4] sm:$0xf]
  %v45 = vld [vmem:[%s1 + $0x8] sm:$0xf]
  %v46 = vld [vmem:[%s1 + $0xc] sm:$0xf]
  %v47 = vld [vmem:[%s1 + $0x10] sm:$0xf]
  %v48 = vld [vmem:[%s1 + $0x14] sm:$0xf]
  %v49 = vld [vmem:[%s1 + $0x18] sm:$0xf]
  %v50 = vld [vmem:[%s1 + $0x1c] sm:$0xf]
  %v51 = vld [vmem:[%s1 + $0x20] sm:$0xf]
  %v52 = vld [vmem:[%s1 + $0x24] sm:$0xf]
  %v53 = vld [vmem:[%s1 + $0x28] sm:$0xf]
  %v54 = vld [vmem:[%s1 + $0x2c] sm:$0xf]
  %v55 = vld [vmem:[%s1 + $0x30] sm:$0xf]
  %v56 = vld [vmem:[%s1 + $0x34] sm:$0xf]
  %v57 = vld [vmem:[%s1 + $0x38] sm:$0xf]
  %v58 = vld [vmem:[%s1 + $0x3c] sm:$0xf]
  %v75 = vunpack.c.l.b16 %v43
  %v76 = vunpack.c.l.b16 %v44
  %v77 = vunpack.c.l.b16 %v45
  %v78 = vunpack.c.l.b16 %v46
  %v79 = vunpack.c.l.b16 %v47
  %v80 = vunpack.c.l.b16 %v48
  %v81 = vunpack.c.l.b16 %v49
  %v82 = vunpack.c.l.b16 %v50
  %v83 = vunpack.c.l.b16 %v51
  %v84 = vunpack.c.l.b16 %v52
  %v85 = vunpack.c.l.b16 %v53
  %v86 = vunpack.c.l.b16 %v54
  %v87 = vunpack.c.l.b16 %v55
  %v88 = vunpack.c.l.b16 %v56
  %v89 = vunpack.c.l.b16 %v57
  %v90 = vunpack.c.l.b16 %v58
  %v91 = vpack.c.b16 %v76, %v75
  %v92 = vpack.c.b16 %v78, %v77
  %v93 = vpack.c.b16 %v80, %v79
  %v94 = vpack.c.b16 %v82, %v81
  %v95 = vpack.c.b16 %v84, %v83
  %v96 = vpack.c.b16 %v86, %v85
  %v97 = vpack.c.b16 %v88, %v87
  %v98 = vpack.c.b16 %v90, %v89
  %107 = vmatprep.subr.bf16.mxu0 0
  %108 = vmatpush1.bf16.msra.mxu0 %v91
  %109 = vmatprep.subr.bf16.mxu0 0
  %110 = vmatpush1.bf16.msra.mxu0 %v92
  %111 = vmatprep.subr.bf16.mxu0 0
  %112 = vmatpush1.bf16.msra.mxu0 %v93
  %113 = vmatprep.subr.bf16.mxu0 0
  %114 = vmatpush1.bf16.msra.mxu0 %v94
  %115 = vmatprep.subr.bf16.mxu0 0
  %116 = vmatpush1.bf16.msra.mxu0 %v95
  %117 = vmatprep.subr.bf16.mxu0 0
  %118 = vmatpush1.bf16.msra.mxu0 %v96
  %119 = vmatprep.subr.bf16.mxu0 0
  %120 = vmatpush1.bf16.msra.mxu0 %v97
  %121 = vmatprep.subr.bf16.mxu0 0
  %122 = vmatpush1.bf16.msra.mxu0 %v98
  %123 = vmatprep.subr.bf16.mxu0 0
  %124 = vmatpush1.bf16.msra.mxu0 0
  %125 = vmatprep.subr.bf16.mxu0 0
  %126 = vmatpush1.bf16.msra.mxu0 0
  %127 = vmatprep.subr.bf16.mxu0 0
  %128 = vmatpush1.bf16.msra.mxu0 0
  %129 = vmatprep.subr.bf16.mxu0 0
  %130 = vmatpush1.bf16.msra.mxu0 0
  %131 = vmatprep.subr.bf16.mxu0 0
  %132 = vmatpush1.bf16.msra.mxu0 0
  %133 = vmatprep.subr.bf16.mxu0 0
  %134 = vmatpush1.bf16.msra.mxu0 0
  %135 = vmatprep.subr.bf16.mxu0 0
  %136 = vmatpush1.bf16.msra.mxu0 0
  %137 = vmatprep.subr.bf16.mxu0 0
  %138 = vmatpush1.bf16.msra.mxu0 0
  %139 = vmatprep.mubr.bf16.mxu0 0
  %140 = vmatmul.mubr.bf16.gmra.mrb[0].mxu0 %v35
  %v141 = vpop.f32.mrb[0].mxu0
  %v142 = vadd.f32 0.0, %v141
  %v143 = vpop.f32.mrb[0].mxu0
  %v144 = vpop.f32.mrb[0].mxu0
  %v145 = vadd.f32 0.0, %v144
  %v146 = vpop.f32.mrb[0].mxu0
  %147 = vmatprep.mubr.bf16.mxu0 0
  %148 = vmatmul.mubr.bf16.gmra.mrb[0].mxu0 %v36
  %v149 = vpop.f32.mrb[0].mxu0
  %v150 = vadd.f32 0.0, %v149
  %v151 = vpop.f32.mrb[0].mxu0
  %v152 = vpop.f32.mrb[0].mxu0
  %v153 = vadd.f32 0.0, %v152
  %v154 = vpop.f32.mrb[0].mxu0
  %155 = vmatprep.mubr.bf16.mxu0 0
  %156 = vmatmul.mubr.bf16.gmra.mrb[0].mxu0 %v37
  %v157 = vpop.f32.mrb[0].mxu0
  %v158 = vadd.f32 0.0, %v157
  %v159 = vpop.f32.mrb[0].mxu0
  %v160 = vpop.f32.mrb[0].mxu0
  %v161 = vadd.f32 0.0, %v160
  %v162 = vpop.f32.mrb[0].mxu0
  %163 = vmatprep.mubr.bf16.mxu0 0
  %164 = vmatmul.mubr.bf16.gmra.mrb[0].mxu0 %v38
  %v165 = vpop.f32.mrb[0].mxu0
  %v166 = vadd.f32 0.0, %v165
  %v167 = vpop.f32.mrb[0].mxu0
  %v168 = vpop.f32.mrb[0].mxu0
  %v169 = vadd.f32 0.0, %v168
  %v170 = vpop.f32.mrb[0].mxu0
  %171 = vmatprep.mubr.bf16.mxu0 0
  %172 = vmatmul.mubr.bf16.gmra.mrb[0].mxu0 %v39
  %v173 = vpop.f32.mrb[0].mxu0
  %v174 = vadd.f32 0.0, %v173
  %v175 = vpop.f32.mrb[0].mxu0
  %v176 = vpop.f32.mrb[0].mxu0
  %v177 = vadd.f32 0.0, %v176
  %v178 = vpop.f32.mrb[0].mxu0
  %179 = vmatprep.mubr.bf16.mxu0 0
  %180 = vmatmul.mubr.bf16.gmra.mrb[0].mxu0 %v40
  %v181 = vpop.f32.mrb[0].mxu0
  %v182 = vadd.f32 0.0, %v181
  %v183 = vpop.f32.mrb[0].mxu0
  %v184 = vpop.f32.mrb[0].mxu0
  %v185 = vadd.f32 0.0, %v184
  %v186 = vpop.f32.mrb[0].mxu0
  %187 = vmatprep.mubr.bf16.mxu0 0
  %188 = vmatmul.mubr.bf16.gmra.mrb[0].mxu0 %v41
  %v189 = vpop.f32.mrb[0].mxu0
  %v190 = vadd.f32 0.0, %v189
  %v191 = vpop.f32.mrb[0].mxu0
  %v192 = vpop.f32.mrb[0].mxu0
  %v193 = vadd.f32 0.0, %v192
  %v194 = vpop.f32.mrb[0].mxu0
  %195 = vmatprep.mubr.bf16.mxu0 0
  %196 = vmatmul.mubr.bf16.gmra.mrb[0].mxu0 %v42
  %v197 = vpop.f32.mrb[0].mxu0
  %v198 = vadd.f32 0.0, %v197
  %v199 = vpop.f32.mrb[0].mxu0
  %v200 = vpop.f32.mrb[0].mxu0
  %v201 = vadd.f32 0.0, %v200
  %v202 = vpop.f32.mrb[0].mxu0
  %203 = vdwg.mxu0
  %v204 = vld [vmem:[%s3] sm:$0x3]
  %v205 = vadd.f32 %v142, %v145
  %v206 = vadd.f32 %v205, %v150
  %v207 = vadd.f32 %v206, %v153
  %v208 = vadd.f32 %v207, %v158
  %v209 = vadd.f32 %v208, %v161
  %v210 = vadd.f32 %v209, %v166
  %v211 = vadd.f32 %v210, %v169
  %v212 = vadd.f32 %v211, %v174
  %v213 = vadd.f32 %v212, %v177
  %v214 = vadd.f32 %v213, %v182
  %v215 = vadd.f32 %v214, %v185
  %v216 = vadd.f32 %v215, %v190
  %v217 = vadd.f32 %v216, %v193
  %v218 = vadd.f32 %v217, %v198
  %v219 = vadd.f32 %v218, %v201
  %v220 = vrot.slane %v219, 4
  %v221 = vadd.f32 %v219, %v220
  %v222 = vrot.slane %v221, 2
  %v223 = vadd.f32 %v221, %v222
  %v224 = vrot.slane %v223, 1
  %v225 = vadd.f32 %v223, %v224
  %v226 = vmul.f32 %v142, %v142
  %v227 = vmul.f32 %v145, %v145
  %v228 = vmul.f32 %v150, %v150
  %v229 = vmul.f32 %v153, %v153
  %v230 = vmul.f32 %v158, %v158
  %v231 = vmul.f32 %v161, %v161
  %v232 = vmul.f32 %v166, %v166
  %v233 = vmul.f32 %v169, %v169
  %v234 = vmul.f32 %v174, %v174
  %v235 = vmul.f32 %v177, %v177
  %v236 = vmul.f32 %v182, %v182
  %v237 = vmul.f32 %v185, %v185
  %v238 = vmul.f32 %v190, %v190
  %v239 = vmul.f32 %v193, %v193
  %v240 = vmul.f32 %v198, %v198
  %v241 = vmul.f32 %v201, %v201
  %v242 = vadd.f32 %v226, %v227
  %v243 = vadd.f32 %v242, %v228
  %v244 = vadd.f32 %v243, %v229
  %v245 = vadd.f32 %v244, %v230
  %v246 = vadd.f32 %v245, %v231
  %v247 = vadd.f32 %v246, %v232
  %v248 = vadd.f32 %v247, %v233
  %v249 = vadd.f32 %v248, %v234
  %v250 = vadd.f32 %v249, %v235
  %v251 = vadd.f32 %v250, %v236
  %v252 = vadd.f32 %v251, %v237
  %v253 = vadd.f32 %v252, %v238
  %v254 = vadd.f32 %v253, %v239
  %v255 = vadd.f32 %v254, %v240
  %v256 = vadd.f32 %v255, %v241
  %v257 = vrot.slane %v256, 4
  %v258 = vadd.f32 %v256, %v257
  %v259 = vrot.slane %v258, 2
  %v260 = vadd.f32 %v258, %v259
  %v261 = vrot.slane %v260, 1
  %v262 = vadd.f32 %v260, %v261
  %vm263 = vcmask 1040384
  %v264 = vsel %vm263, %v225, %v262
  %v265 = vadd.f32 %v204, %v264
  %266 = vst [vmem:[%s3] sm:$0x3] %v265
  %267 = vst [vmem:[%s2] sm:$0xff] %v142
  %268 = vst [vmem:[%s2 + $0x8] sm:$0xff] %v145
  %269 = vst [vmem:[%s2 + $0x10] sm:$0xff] %v150
  %270 = vst [vmem:[%s2 + $0x18] sm:$0xff] %v153
  %271 = vst [vmem:[%s2 + $0x20] sm:$0xff] %v158
  %272 = vst [vmem:[%s2 + $0x28] sm:$0xff] %v161
  %273 = vst [vmem:[%s2 + $0x30] sm:$0xff] %v166
  %274 = vst [vmem:[%s2 + $0x38] sm:$0xff] %v169
  %275 = vst [vmem:[%s2 + $0x40] sm:$0xff] %v174
  %276 = vst [vmem:[%s2 + $0x48] sm:$0xff] %v177
  %277 = vst [vmem:[%s2 + $0x50] sm:$0xff] %v182
  %278 = vst [vmem:[%s2 + $0x58] sm:$0xff] %v185
  %279 = vst [vmem:[%s2 + $0x60] sm:$0xff] %v190
  %280 = vst [vmem:[%s2 + $0x68] sm:$0xff] %v193
  %281 = vst [vmem:[%s2 + $0x70] sm:$0xff] %v198
  %282 = vst [vmem:[%s2 + $0x78] sm:$0xff] %v201
  // Predicated region
  $region14: #{bottleneck_forward.10} parent=0 // pred_check
    _
  $region15: #{bottleneck_forward.10} parent=0 // pred_check_branch
    %284 = sbr.rel (0) target = $region17
  $region16: #{bottleneck_forward.10} parent=0 // pred_region
    _
  $region17: #{bottleneck_forward.10} parent=0 // pred_fallthru
    _
  // Predicated region
  $region18: #{bottleneck_forward.10} parent=0 // pred_check
    _
  $region19: #{bottleneck_forward.10} parent=0 // pred_check_branch
    %286 = sbr.rel (0) target = $region21
  $region20: #{bottleneck_forward.10} parent=0 // pred_region
    _
  $region21: #{bottleneck_forward.10} parent=0 // pred_fallthru
    _
  // Predicated region
  $region22: #{bottleneck_forward.10} parent=0 // pred_check
    _
  $region23: #{bottleneck_forward.10} parent=0 // pred_check_branch
    %288 = sbr.rel (0) target = $region25
  $region24: #{bottleneck_forward.10} parent=0 // pred_region
    _
  $region25: #{bottleneck_forward.10} parent=0 // pred_fallthru
    _
  // Predicated region
  $region26: #{bottleneck_forward.10} parent=0 // pred_check
    _
  $region27: #{bottleneck_forward.10} parent=0 // pred_check_branch
    %290 = sbr.rel (0) target = $region29
  $region28: #{bottleneck_forward.10} parent=0 // pred_region
    _
  $region29: #{bottleneck_forward.10} parent=0 // pred_fallthru
    _

// kernel: bottleneck_forward.11
$region0: #{bottleneck_forward.11}
  #allocation0 [shape = 'u32[]', space=smem, size = 0x4, offset = 0x4, fixed_abs, tag = 'smem constant byte address 0x4 - core index']
  #allocation1 [shape = 'u32[144,128]{1,0:T(1,128)}', space=vmem, size = 0x12000, scoped, tag = 'internal scratch']
  %s0 = inlined_call_operand.vmem [shape: f32[128,128], index: 0, kind: input, shape index: {}]
  %s1 = inlined_call_operand.vmem [shape: f32[2,128], index: 1, kind: input, shape index: {}]
  %s2 = inlined_call_operand.vmem [shape: f32[1,128], index: 2, kind: input, shape index: {}]
  %s3 = inlined_call_operand.vmem [shape: f32[1,128], index: 3, kind: input, shape index: {}]
  %s4 = inlined_call_operand.vmem [shape: f32[128,128], index: 4, kind: input, shape index: {}]
  %s5 = inlined_call_operand.vmem [shape: f32[2,128], index: 5, kind: input, shape index: {}]
  %s6 = inlined_call_operand.vmem [shape: f32[1,128], index: 6, kind: input, shape index: {}]
  %s7 = inlined_call_operand.vmem [shape: f32[1,128], index: 7, kind: input, shape index: {}]
  %s8 = inlined_call_operand.hbm [shape: f32[128,128], index: 8, kind: output, shape index: {}]
  %s9 = sld [smem:[#allocation0]]
  $region42: #{bottleneck_forward.11} parent=0
    _
  %s11 = ssub.s32 1, %s9
  %s12 = scalar_select 0, %s11, %s9
  $region1: #{bottleneck_forward.11} parent=0
    #allocation2 [shape = 'u8[65536]{0}', space=vmem, size = 0x10000, scoped, tag = 'output window, operand 0, single buffered']
    #allocation3 [shape = 's32[1]{0}', space=sflag, size = 0x4, scoped, tag = 'scoped memory for bottleneck_forward.11']
    %13 = vsyncpa [#allocation3], 0
    // Predicated region
    $region2: #{bottleneck_forward.11} parent=1 // pred_check
      _
    $region3: #{bottleneck_forward.11} parent=1 // pred_check_branch
      %15 = sbr.rel (0) target = $region5
    $region4: #{bottleneck_forward.11} parent=1 // pred_region
      _
    $region5: #{bottleneck_forward.11} parent=1 // pred_fallthru
      _
    // Predicated region
    $region6: #{bottleneck_forward.11} parent=1 // pred_check
      _
    $region7: #{bottleneck_forward.11} parent=1 // pred_check_branch
      %17 = sbr.rel (0) target = $region9
    $region8: #{bottleneck_forward.11} parent=1 // pred_region
      _
    $region9: #{bottleneck_forward.11} parent=1 // pred_fallthru
      _
    // Predicated region
    $region10: #{bottleneck_forward.11} parent=1 // pred_check
      _
    $region11: #{bottleneck_forward.11} parent=1 // pred_check_branch
      %19 = sbr.rel (0) target = $region13
    $region12: #{bottleneck_forward.11} parent=1 // pred_region
      _
    $region13: #{bottleneck_forward.11} parent=1 // pred_fallthru
      _
    // Predicated region
    $region14: #{bottleneck_forward.11} parent=1 // pred_check
      _
    $region15: #{bottleneck_forward.11} parent=1 // pred_check_branch
      %21 = sbr.rel (0) target = $region17
    $region16: #{bottleneck_forward.11} parent=1 // pred_region
      _
    $region17: #{bottleneck_forward.11} parent=1 // pred_fallthru
      _
    // Predicated region
    $region18: #{bottleneck_forward.11} parent=1 // pred_check
      _
    $region19: #{bottleneck_forward.11} parent=1 // pred_check_branch
      %23 = sbr.rel (0) target = $region21
    $region20: #{bottleneck_forward.11} parent=1 // pred_region
      _
    $region21: #{bottleneck_forward.11} parent=1 // pred_fallthru
      _
    // Predicated region
    $region22: #{bottleneck_forward.11} parent=1 // pred_check
      _
    $region23: #{bottleneck_forward.11} parent=1 // pred_check_branch
      %25 = sbr.rel (0) target = $region25
    $region24: #{bottleneck_forward.11} parent=1 // pred_region
      _
    $region25: #{bottleneck_forward.11} parent=1 // pred_fallthru
      _
    // Predicated region
    $region26: #{bottleneck_forward.11} parent=1 // pred_check
      _
    $region27: #{bottleneck_forward.11} parent=1 // pred_check_branch
      %27 = sbr.rel (0) target = $region29
    $region28: #{bottleneck_forward.11} parent=1 // pred_region
      _
    $region29: #{bottleneck_forward.11} parent=1 // pred_fallthru
      _
    // Predicated region
    $region30: #{bottleneck_forward.11} parent=1 // pred_check
      _
    $region31: #{bottleneck_forward.11} parent=1 // pred_check_branch
      %29 = sbr.rel (0) target = $region33
    $region32: #{bottleneck_forward.11} parent=1 // pred_region
      _
    $region33: #{bottleneck_forward.11} parent=1 // pred_fallthru
      _
    %v30 = vld [vmem:[%s1] sm:$0x3]
    %v31 = vld [vmem:[%s2] sm:$0x1]
    %v32 = vld [vmem:[%s3] sm:$0x1]
    %v33 = vmul.f32 %v30, 0.0078125
    %v34 = vmul.f32 %v33, %v33
    %v36 = vrot.slane %v34, 7
    %v38 = vsub.f32 %v33, %v36
    %v39 = vmax.f32 %v38, 0.0
    %v40 = vadd.f32 %v39, 1e-05
    %v41 = vrsqrt.pop %v40
    %v44 = vunpack.c.l.s4 1966171168
    %v45 = vunpack.c.0.s8 %v44
    %v46 = vlaneseq
    %v47 = vshrl.u32 %v46, 7
    %v48 = vsub.s32 %v45, %v47
    %v49 = vrot.slane %v41, %v48
    %v50 = vcombine.high %v49, %v49
    %v52 = vunpack.c.l.s4 1966171168
    %v53 = vunpack.c.0.s8 %v52
    %v54 = vlaneseq
    %v55 = vshrl.u32 %v54, 7
    %v56 = vsub.s32 %v53, %v55
    %v57 = vrot.slane %v50, %v56
    %v59 = vmul.f32 %v31, %v57
    %v60 = vmul.f32 %v33, %v59
    %v61 = vsub.f32 %v32, %v60
    %v62 = vld [vmem:[%s0] sm:$0xff]
    %v63 = vld [vmem:[%s0 + $0x8] sm:$0xff]
    %v64 = vld [vmem:[%s0 + $0x10] sm:$0xff]
    %v65 = vld [vmem:[%s0 + $0x18] sm:$0xff]
    %v66 = vld [vmem:[%s0 + $0x20] sm:$0xff]
    %v67 = vld [vmem:[%s0 + $0x28] sm:$0xff]
    %v68 = vld [vmem:[%s0 + $0x30] sm:$0xff]
    %v69 = vld [vmem:[%s0 + $0x38] sm:$0xff]
    %v70 = vld [vmem:[%s0 + $0x40] sm:$0xff]
    %v71 = vld [vmem:[%s0 + $0x48] sm:$0xff]
    %v72 = vld [vmem:[%s0 + $0x50] sm:$0xff]
    %v73 = vld [vmem:[%s0 + $0x58] sm:$0xff]
    %v74 = vld [vmem:[%s0 + $0x60] sm:$0xff]
    %v75 = vld [vmem:[%s0 + $0x68] sm:$0xff]
    %v76 = vld [vmem:[%s0 + $0x70] sm:$0xff]
    %v77 = vld [vmem:[%s0 + $0x78] sm:$0xff]
    %v79 = vlaneseq
    %v80 = vshrl.u32 %v79, 7
    %v81 = vsub.s32 0, %v80
    %v82 = vrot.slane %v59, %v81
    %v84 = vmul.f32 %v62, %v82
    %v85 = vmul.f32 %v63, %v82
    %v86 = vmul.f32 %v64, %v82
    %v87 = vmul.f32 %v65, %v82
    %v88 = vmul.f32 %v66, %v82
    %v89 = vmul.f32 %v67, %v82
    %v90 = vmul.f32 %v68, %v82
    %v91 = vmul.f32 %v69, %v82
    %v92 = vmul.f32 %v70, %v82
    %v93 = vmul.f32 %v71, %v82
    %v94 = vmul.f32 %v72, %v82
    %v95 = vmul.f32 %v73, %v82
    %v96 = vmul.f32 %v74, %v82
    %v97 = vmul.f32 %v75, %v82
    %v98 = vmul.f32 %v76, %v82
    %v99 = vmul.f32 %v77, %v82
    %v101 = vlaneseq
    %v102 = vshrl.u32 %v101, 7
    %v103 = vsub.s32 0, %v102
    %v104 = vrot.slane %v61, %v103
    %v106 = vadd.f32 %v84, %v104
    %v107 = vadd.f32 %v85, %v104
    %v108 = vadd.f32 %v86, %v104
    %v109 = vadd.f32 %v87, %v104
    %v110 = vadd.f32 %v88, %v104
    %v111 = vadd.f32 %v89, %v104
    %v112 = vadd.f32 %v90, %v104
    %v113 = vadd.f32 %v91, %v104
    %v114 = vadd.f32 %v92, %v104
    %v115 = vadd.f32 %v93, %v104
    %v116 = vadd.f32 %v94, %v104
    %v117 = vadd.f32 %v95, %v104
    %v118 = vadd.f32 %v96, %v104
    %v119 = vadd.f32 %v97, %v104
    %v120 = vadd.f32 %v98, %v104
    %v121 = vadd.f32 %v99, %v104
    %v122 = vld [vmem:[%s5] sm:$0x3]
    %v123 = vld [vmem:[%s6] sm:$0x1]
    %v124 = vld [vmem:[%s7] sm:$0x1]
    %v125 = vmul.f32 %v122, 0.0078125
    %v126 = vmul.f32 %v125, %v125
    %v128 = vrot.slane %v126, 7
    %v130 = vsub.f32 %v125, %v128
    %v131 = vmax.f32 %v130, 0.0
    %v132 = vadd.f32 %v131, 1e-05
    %v133 = vrsqrt.pop %v132
    %v136 = vunpack.c.l.s4 1966171168
    %v137 = vunpack.c.0.s8 %v136
    %v138 = vlaneseq
    %v139 = vshrl.u32 %v138, 7
    %v140 = vsub.s32 %v137, %v139
    %v141 = vrot.slane %v133, %v140
    %v142 = vcombine.high %v141, %v141
    %v144 = vunpack.c.l.s4 1966171168
    %v145 = vunpack.c.0.s8 %v144
    %v146 = vlaneseq
    %v147 = vshrl.u32 %v146, 7
    %v148 = vsub.s32 %v145, %v147
    %v149 = vrot.slane %v142, %v148
    %v151 = vmul.f32 %v123, %v149
    %v152 = vmul.f32 %v125, %v151
    %v153 = vsub.f32 %v124, %v152
    %v154 = vld [vmem:[%s4] sm:$0xff]
    %v155 = vld [vmem:[%s4 + $0x8] sm:$0xff]
    %v156 = vld [vmem:[%s4 + $0x10] sm:$0xff]
    %v157 = vld [vmem:[%s4 + $0x18] sm:$0xff]
    %v158 = vld [vmem:[%s4 + $0x20] sm:$0xff]
    %v159 = vld [vmem:[%s4 + $0x28] sm:$0xff]
    %v160 = vld [vmem:[%s4 + $0x30] sm:$0xff]
    %v161 = vld [vmem:[%s4 + $0x38] sm:$0xff]
    %v162 = vld [vmem:[%s4 + $0x40] sm:$0xff]
    %v163 = vld [vmem:[%s4 + $0x48] sm:$0xff]
    %v164 = vld [vmem:[%s4 + $0x50] sm:$0xff]
    %v165 = vld [vmem:[%s4 + $0x58] sm:$0xff]
    %v166 = vld [vmem:[%s4 + $0x60] sm:$0xff]
    %v167 = vld [vmem:[%s4 + $0x68] sm:$0xff]
    %v168 = vld [vmem:[%s4 + $0x70] sm:$0xff]
    %v169 = vld [vmem:[%s4 + $0x78] sm:$0xff]
    %v171 = vlaneseq
    %v172 = vshrl.u32 %v171, 7
    %v173 = vsub.s32 0, %v172
    %v174 = vrot.slane %v151, %v173
    %v176 = vmul.f32 %v154, %v174
    %v177 = vmul.f32 %v155, %v174
    %v178 = vmul.f32 %v156, %v174
    %v179 = vmul.f32 %v157, %v174
    %v180 = vmul.f32 %v158, %v174
    %v181 = vmul.f32 %v159, %v174
    %v182 = vmul.f32 %v160, %v174
    %v183 = vmul.f32 %v161, %v174
    %v184 = vmul.f32 %v162, %v174
    %v185 = vmul.f32 %v163, %v174
    %v186 = vmul.f32 %v164, %v174
    %v187 = vmul.f32 %v165, %v174
    %v188 = vmul.f32 %v166, %v174
    %v189 = vmul.f32 %v167, %v174
    %v190 = vmul.f32 %v168, %v174
    %v191 = vmul.f32 %v169, %v174
    %v193 = vlaneseq
    %v194 = vshrl.u32 %v193, 7
    %v195 = vsub.s32 0, %v194
    %v196 = vrot.slane %v153, %v195
    %v198 = vadd.f32 %v176, %v196
    %v199 = vadd.f32 %v177, %v196
    %v200 = vadd.f32 %v178, %v196
    %v201 = vadd.f32 %v179, %v196
    %v202 = vadd.f32 %v180, %v196
    %v203 = vadd.f32 %v181, %v196
    %v204 = vadd.f32 %v182, %v196
    %v205 = vadd.f32 %v183, %v196
    %v206 = vadd.f32 %v184, %v196
    %v207 = vadd.f32 %v185, %v196
    %v208 = vadd.f32 %v186, %v196
    %v209 = vadd.f32 %v187, %v196
    %v210 = vadd.f32 %v188, %v196
    %v211 = vadd.f32 %v189, %v196
    %v212 = vadd.f32 %v190, %v196
    %v213 = vadd.f32 %v191, %v196
    %v214 = vadd.f32 %v106, %v198
    %v215 = vadd.f32 %v107, %v199
    %v216 = vadd.f32 %v108, %v200
    %v217 = vadd.f32 %v109, %v201
    %v218 = vadd.f32 %v110, %v202
    %v219 = vadd.f32 %v111, %v203
    %v220 = vadd.f32 %v112, %v204
    %v221 = vadd.f32 %v113, %v205
    %v222 = vadd.f32 %v114, %v206
    %v223 = vadd.f32 %v115, %v207
    %v224 = vadd.f32 %v116, %v208
    %v225 = vadd.f32 %v117, %v209
    %v226 = vadd.f32 %v118, %v210
    %v227 = vadd.f32 %v119, %v211
    %v228 = vadd.f32 %v120, %v212
    %v229 = vadd.f32 %v121, %v213
    %v230 = vmax.f32 %v214, 0.0
    %v231 = vmax.f32 %v215, 0.0
    %v232 = vmax.f32 %v216, 0.0
    %v233 = vmax.f32 %v217, 0.0
    %v234 = vmax.f32 %v218, 0.0
    %v235 = vmax.f32 %v219, 0.0
    %v236 = vmax.f32 %v220, 0.0
    %v237 = vmax.f32 %v221, 0.0
    %v238 = vmax.f32 %v222, 0.0
    %v239 = vmax.f32 %v223, 0.0
    %v240 = vmax.f32 %v224, 0.0
    %v241 = vmax.f32 %v225, 0.0
    %v242 = vmax.f32 %v226, 0.0
    %v243 = vmax.f32 %v227, 0.0
    %v244 = vmax.f32 %v228, 0.0
    %v245 = vmax.f32 %v229, 0.0
    %246 = vst [vmem:[#allocation2] sm:$0xff] %v230
    %247 = vst [vmem:[#allocation2 + $0x8] sm:$0xff] %v231
    %248 = vst [vmem:[#allocation2 + $0x10] sm:$0xff] %v232
    %249 = vst [vmem:[#allocation2 + $0x18] sm:$0xff] %v233
    %250 = vst [vmem:[#allocation2 + $0x20] sm:$0xff] %v234
    %251 = vst [vmem:[#allocation2 + $0x28] sm:$0xff] %v235
    %252 = vst [vmem:[#allocation2 + $0x30] sm:$0xff] %v236
    %253 = vst [vmem:[#allocation2 + $0x38] sm:$0xff] %v237
    %254 = vst [vmem:[#allocation2 + $0x40] sm:$0xff] %v238
    %255 = vst [vmem:[#allocation2 + $0x48] sm:$0xff] %v239
    %256 = vst [vmem:[#allocation2 + $0x50] sm:$0xff] %v240
    %257 = vst [vmem:[#allocation2 + $0x58] sm:$0xff] %v241
    %258 = vst [vmem:[#allocation2 + $0x60] sm:$0xff] %v242
    %259 = vst [vmem:[#allocation2 + $0x68] sm:$0xff] %v243
    %260 = vst [vmem:[#allocation2 + $0x70] sm:$0xff] %v244
    %261 = vst [vmem:[#allocation2 + $0x78] sm:$0xff] %v245
    // Predicated region
    $region34: #{bottleneck_forward.11} parent=1 // pred_check
      _
    $region35: #{bottleneck_forward.11} parent=1 // pred_check_branch
      %263 = sbr.rel (0) target = $region37
    $region36: #{bottleneck_forward.11} parent=1 // pred_region
      %s265 = ssub.s32 2048, 2048
      %266 = vsyncadd [#allocation3], %s265
      %s267 = sshll.u32 [#allocation2], 4
      %s268 = int_to_ptr.vmem [resolvable:$true] %s267
      %273 = dma.vmem_to_hbm [thread:$0]  %s268, 2048, %s8, [#allocation3], 128, 128, 8
    $region37: #{bottleneck_forward.11} parent=1 // pred_fallthru
      _
    // Predicated region
    $region38: #{bottleneck_forward.11} parent=1 // pred_check
      _
    $region39: #{bottleneck_forward.11} parent=1 // pred_check_branch
      %275 = sbr.rel (0) target = $region41
    $region40: #{bottleneck_forward.11} parent=1 // pred_region
      %276 = dma.done [#allocation3], 2048
    $region41: #{bottleneck_forward.11} parent=1 // pred_fallthru
      _
    %277 = vsyncpa [#allocation3], 1

</llo_original>
